<compile_context>
chip_gen: v7x
topology: tpu7x:2x2x1
jax: 0.10.0
libtpu: 0.0.40
codegen_flags: <defaults>
</compile_context>

<pallas_src>
import numpy as np
import jax
import jax.numpy as jnp
from jax.experimental import pallas as pl
from jax.experimental.pallas import tpu as pltpu


def _round_up(x, m):
    return (x + m - 1) // m * m


# ----------------------------------------------------------------------------
# Kernel 1: fused backbone (conv3x3 "same" + ReLU + global-avg-pool + projection)
# ----------------------------------------------------------------------------
def _make_backbone_kernel(H, W, c_mid):
    Wp = W + 2          # padded width
    P = H * Wp          # conv accumulator rows (rows 1..H of padded grid, all Wp cols)

    def kernel(x_ref, cw_ref, cb_ref, pool_ref, pw_ref, pb_ref, o_ref):
        # x_ref   : [Lpad, C]       flattened, zero-padded NHWC frame (f32)
        # cw_ref  : [9, C, c_mid]   per-tap conv weights (bf16)
        # cb_ref  : [1, c_mid]      conv bias (f32)
        # pool_ref: [1, P]          (1/(H*W))-scaled valid-position mask (bf16)
        # pw_ref  : [c_mid, d_pad]  projection weights (bf16)
        # pb_ref  : [1, d_pad]      projection bias (f32)
        # o_ref   : [1, d_pad]      per-frame feature (f32)
        acc = jnp.zeros((P, c_mid), jnp.float32)
        for dh in range(3):                               # in-kernel im2col: 9 taps,
            for dw in range(3):                           # each a contiguous row slice
                start = dh * Wp + dw
                tap = x_ref[pl.ds(start, P), :].astype(jnp.bfloat16)       # [P, C]
                acc = acc + jnp.dot(tap, cw_ref[dh * 3 + dw],
                                    preferred_element_type=jnp.float32)
        h = jnp.maximum(acc + cb_ref[...], 0.0)                            # [P, c_mid]
        # Global average pool as an MXU contraction with a scaled mask vector.
        pooled = jnp.dot(pool_ref[...], h.astype(jnp.bfloat16),
                         preferred_element_type=jnp.float32)               # [1, c_mid]
        feat = jnp.dot(pooled.astype(jnp.bfloat16), pw_ref[...],
                       preferred_element_type=jnp.float32) + pb_ref[...]   # [1, d_pad]
        o_ref[...] = feat

    return kernel


def backbone_fused(x_flat, pool_vec, params, H, W):
    """x_flat: [N, Lpad, C] -> per-frame features [N, d_pad]."""
    N, Lpad, C = x_flat.shape
    c_mid = params["conv_w"].shape[-1]
    d_pad = params["proj_w"].shape[-1]
    P = pool_vec.shape[-1]
    kernel = _make_backbone_kernel(H, W, c_mid)
    out = pl.pallas_call(
        kernel,
        out_shape=jax.ShapeDtypeStruct((N, 1, d_pad), jnp.float32),
        grid=(N,),
        in_specs=[
            pl.BlockSpec((None, Lpad, C), lambda n: (n, 0, 0)),   # one frame per step
            pl.BlockSpec((9, C, c_mid), lambda n: (0, 0, 0)),     # weights resident
            pl.BlockSpec((1, c_mid), lambda n: (0, 0)),
            pl.BlockSpec((1, P), lambda n: (0, 0)),
            pl.BlockSpec((c_mid, d_pad), lambda n: (0, 0)),
            pl.BlockSpec((1, d_pad), lambda n: (0, 0)),
        ],
        out_specs=pl.BlockSpec((None, 1, d_pad), lambda n: (n, 0, 0)),
        compiler_params=pltpu.CompilerParams(
            dimension_semantics=("parallel",)),
    )(x_flat, params["conv_w"], params["conv_b"], pool_vec,
      params["proj_w"], params["proj_b"])
    return out.reshape(N, d_pad)


# ----------------------------------------------------------------------------
# Kernel 2: fused RelationModule classifier
#   ReLU -> Linear(F*D, 512) -> ReLU -> Linear(512, num_class_padded)
# ----------------------------------------------------------------------------
def _relation_kernel(x_ref, w1_ref, b1_ref, w2_ref, b2_ref, o_ref):
    h = jnp.maximum(x_ref[...], 0.0).astype(jnp.bfloat16)
    h = jnp.dot(h, w1_ref[...], preferred_element_type=jnp.float32) + b1_ref[...]
    h = jnp.maximum(h, 0.0).astype(jnp.bfloat16)
    o_ref[...] = jnp.dot(h, w2_ref[...],
                         preferred_element_type=jnp.float32) + b2_ref[...]


def relation_mlp(x_pad, params):
    Bp, FD = x_pad.shape
    BN = params["fc1_w"].shape[1]
    NCP = params["fc2_w"].shape[1]
    return pl.pallas_call(
        _relation_kernel,
        out_shape=jax.ShapeDtypeStruct((Bp, NCP), jnp.float32),
        grid=(1,),
        in_specs=[
            pl.BlockSpec((Bp, FD), lambda i: (0, 0)),
            pl.BlockSpec((FD, BN), lambda i: (0, 0)),
            pl.BlockSpec((1, BN), lambda i: (0, 0)),
            pl.BlockSpec((BN, NCP), lambda i: (0, 0)),
            pl.BlockSpec((1, NCP), lambda i: (0, 0)),
        ],
        out_specs=pl.BlockSpec((Bp, NCP), lambda i: (0, 0)),
    )(x_pad, params["fc1_w"], params["fc1_b"], params["fc2_w"], params["fc2_b"])


# ----------------------------------------------------------------------------
# Parameters, preprocessing, forward
# ----------------------------------------------------------------------------
def init_params(key, c_in, c_mid, img_feature_dim, num_frames, num_class,
                bottleneck=512):
    d_pad = _round_up(max(img_feature_dim, 128), 128)
    nc_pad = _round_up(max(num_class, 128), 128)
    ks = jax.random.split(key, 8)
    fd = num_frames * img_feature_dim
    conv_w = jax.random.normal(ks[0], (9, c_in, c_mid), jnp.float32) * 0.1
    conv_b = jax.random.normal(ks[1], (1, c_mid), jnp.float32) * 0.01
    proj_w = jax.random.normal(ks[2], (c_mid, img_feature_dim), jnp.float32) * 0.1
    proj_b = jax.random.normal(ks[3], (1, img_feature_dim), jnp.float32) * 0.01
    fc1_w = jax.random.normal(ks[4], (fd, bottleneck), jnp.float32) / np.sqrt(fd)
    fc1_b = jax.random.normal(ks[5], (1, bottleneck), jnp.float32) * 0.01
    fc2_w = jax.random.normal(ks[6], (bottleneck, num_class), jnp.float32) / np.sqrt(bottleneck)
    fc2_b = jax.random.normal(ks[7], (1, num_class), jnp.float32) * 0.01
    # Lane-pad projection / classifier outputs to 128 lanes (sliced back on host).
    proj_w = jnp.pad(proj_w, ((0, 0), (0, d_pad - img_feature_dim)))
    proj_b = jnp.pad(proj_b, ((0, 0), (0, d_pad - img_feature_dim)))
    fc2_w = jnp.pad(fc2_w, ((0, 0), (0, nc_pad - num_class)))
    fc2_b = jnp.pad(fc2_b, ((0, 0), (0, nc_pad - num_class)))
    return {
        "conv_w": conv_w.astype(jnp.bfloat16),
        "conv_b": conv_b,
        "proj_w": proj_w.astype(jnp.bfloat16),
        "proj_b": proj_b,
        "fc1_w": fc1_w.astype(jnp.bfloat16),
        "fc1_b": fc1_b,
        "fc2_w": fc2_w.astype(jnp.bfloat16),
        "fc2_b": fc2_b,
        "img_feature_dim": img_feature_dim,
        "num_class": num_class,
    }


def _preprocess_frames(frames_nchw, H, W):
    """NCHW frames -> flattened zero-padded NHWC rows + pooling mask (no inflation)."""
    N = frames_nchw.shape[0]
    Hp, Wp = H + 2, W + 2
    P = H * Wp
    Lpad = _round_up(2 * Wp + 2 + P, 8)                 # room for every tap slice
    x = jnp.transpose(frames_nchw, (0, 2, 3, 1))        # NCHW -> NHWC
    x = jnp.pad(x, ((0, 0), (1, 1), (1, 1), (0, 0)))    # [N, Hp, Wp, C]
    x = x.reshape(N, Hp * Wp, x.shape[-1])
    x = jnp.pad(x, ((0, 0), (0, Lpad - Hp * Wp), (0, 0)))
    cols = np.arange(P) % Wp
    pool = np.where(cols < W, 1.0 / (H * W), 0.0).astype(np.float32)
    pool_vec = jnp.asarray(pool, dtype=jnp.bfloat16).reshape(1, P)
    return x, pool_vec


def trn_forward(params, x, num_frames, sample_seed=0):
    """x: [B, T, C, H, W] (PyTorch layout). Returns logits [B, num_class]."""
    B, T, C, H, W = x.shape
    D = params["img_feature_dim"]
    num_class = params["num_class"]
    # Frame sampling (host-side, deterministic seed; reference uses np.random.choice).
    rng = np.random.default_rng(sample_seed)
    sample = np.sort(rng.choice(T, size=num_frames, replace=False))
    x_sel = x[:, sample]                                # [B, F, C, H, W]
    frames = x_sel.reshape(B * num_frames, C, H, W)
    x_flat, pool_vec = _preprocess_frames(frames, H, W)
    feats = backbone_fused(x_flat, pool_vec, params, H, W)    # [B*F, d_pad]
    feats = feats[:, :D]                                # [B*F, D]
    merged = feats.reshape(B, num_frames, D)            # MergeFrame -> [B, F, D]
    flat = merged.reshape(B, num_frames * D)            # RelationModule .view
    Bp = _round_up(max(B, 8), 8)                        # sublane-pad the batch
    flat_p = jnp.pad(flat, ((0, Bp - B), (0, 0)))
    logits = relation_mlp(flat_p, params)               # [Bp, nc_pad]
    return logits[:B, :num_class]


def trn_reference(params, x, num_frames, sample_seed=0):
    """Pure-JAX (no Pallas) reference with matched bf16/f32 precision."""
    B, T, C, H, W = x.shape
    D = params["img_feature_dim"]
    num_class = params["num_class"]
    rng = np.random.default_rng(sample_seed)
    sample = np.sort(rng.choice(T, size=num_frames, replace=False))
    frames = x[:, sample].reshape(B * num_frames, C, H, W)
    x_flat, pool_vec = _preprocess_frames(frames, H, W)
    Wp = W + 2
    P = H * Wp
    c_mid = params["conv_w"].shape[-1]
    acc = jnp.zeros((frames.shape[0], P, c_mid), jnp.float32)
    for dh in range(3):
        for dw in range(3):
            start = dh * Wp + dw
            tap = x_flat[:, start:start + P, :].astype(jnp.bfloat16)
            acc = acc + jnp.einsum("npc,cm->npm", tap, params["conv_w"][dh * 3 + dw],
                                   preferred_element_type=jnp.float32)
    h = jnp.maximum(acc + params["conv_b"][None], 0.0)
    pooled = jnp.einsum("p,npm->nm", pool_vec[0], h.astype(jnp.bfloat16),
                        preferred_element_type=jnp.float32)
    feat = jnp.dot(pooled.astype(jnp.bfloat16), params["proj_w"],
                   preferred_element_type=jnp.float32) + params["proj_b"]
    flat = feat[:, :D].reshape(B, num_frames * D)
    hh = jnp.maximum(flat, 0.0).astype(jnp.bfloat16)
    hh = jnp.dot(hh, params["fc1_w"], preferred_element_type=jnp.float32) + params["fc1_b"]
    hh = jnp.maximum(hh, 0.0).astype(jnp.bfloat16)
    logits = jnp.dot(hh, params["fc2_w"], preferred_element_type=jnp.float32) + params["fc2_b"]
    return logits[:, :num_class]


# ----------------------------------------------------------------------------
if __name__ == "__main__":
    B = 2
    total_frames = 8
    C_in, H, W = 3, 16, 16
    num_frames = 4
    num_segs = 4                 # unused in forward (matches reference)
    img_feature_dim = 32
    num_class = 10
    c_mid = 128                  # lane-dense hidden width for the stand-in backbone

    key = jax.random.PRNGKey(0)
    k_params, k_x = jax.random.split(key)
    params = init_params(k_params, C_in, c_mid, img_feature_dim, num_frames, num_class)
    x = jax.random.normal(k_x, (B, total_frames, C_in, H, W), jnp.float32)

    out = trn_forward(params, x, num_frames)
    out = jax.block_until_ready(out)
    assert out.shape == (B, num_class), out.shape
    assert bool(jnp.all(jnp.isfinite(out)))

    ref = jax.block_until_ready(trn_reference(params, x, num_frames))
    np.testing.assert_allclose(np.asarray(out), np.asarray(ref), rtol=2e-2, atol=2e-2)
    print("KERNEL_OK")
</pallas_src>

<mosaic_0001>
module attributes {stable_mosaic.version = 11 : i64} {
  func.func @kernel(%arg0: i32, %arg1: memref<1x328x3xf32, #tpu.memory_space<vmem>>, %arg2: memref<9x3x128xbf16, #tpu.memory_space<vmem>>, %arg3: memref<1x128xf32, #tpu.memory_space<vmem>>, %arg4: memref<1x288xbf16, #tpu.memory_space<vmem>>, %arg5: memref<128x128xbf16, #tpu.memory_space<vmem>>, %arg6: memref<1x128xf32, #tpu.memory_space<vmem>>, %arg7: memref<1x1x128xf32, #tpu.memory_space<vmem>>) attributes {dimension_semantics = [#tpu.dimension_semantics<parallel>], iteration_bounds = array<i64: 8>, scalar_prefetch = 0 : i64, scratch_operands = 0 : i64, tpu.core_type = #tpu.core_type<tc>, window_params = [{transform_indices = @transform_0, window_bounds = array<i64: 1, 328, 3>}, {pipeline_mode = #tpu.pipeline_mode<synchronous>, transform_indices = @transform_1, window_bounds = array<i64: 9, 3, 128>}, {pipeline_mode = #tpu.pipeline_mode<synchronous>, transform_indices = @transform_2, window_bounds = array<i64: 1, 128>}, {pipeline_mode = #tpu.pipeline_mode<synchronous>, transform_indices = @transform_3, window_bounds = array<i64: 1, 288>}, {pipeline_mode = #tpu.pipeline_mode<synchronous>, transform_indices = @transform_4, window_bounds = array<i64: 128, 128>}, {pipeline_mode = #tpu.pipeline_mode<synchronous>, transform_indices = @transform_5, window_bounds = array<i64: 1, 128>}, {transform_indices = @transform_6, window_bounds = array<i64: 1, 1, 128>}]} {
    %cst = arith.constant 0.000000e+00 : f32
    %0 = vector.broadcast %cst : f32 to vector<288x128xf32>
    %c0 = arith.constant 0 : index
    %c0_0 = arith.constant 0 : index
    %c0_1 = arith.constant 0 : index
    %1 = vector.load %arg1[%c0, %c0_0, %c0_1] : memref<1x328x3xf32, #tpu.memory_space<vmem>>, vector<1x288x3xf32>
    %2 = vector.shape_cast %1 : vector<1x288x3xf32> to vector<288x3xf32>
    %3 = arith.truncf %2 : vector<288x3xf32> to vector<288x3xbf16>
    %c0_2 = arith.constant 0 : index
    %c0_3 = arith.constant 0 : index
    %c0_4 = arith.constant 0 : index
    %4 = vector.load %arg2[%c0_2, %c0_3, %c0_4] : memref<9x3x128xbf16, #tpu.memory_space<vmem>>, vector<1x3x128xbf16>
    %5 = vector.shape_cast %4 : vector<1x3x128xbf16> to vector<3x128xbf16>
    %cst_5 = arith.constant dense<0.000000e+00> : vector<288x128xf32>
    %6 = tpu.matmul %3, %5, %cst_5 {dimension_numbers = #tpu.dot_dimension_numbers<[1], [0], [0], [1], [0, 0, 1, 1], [], []>} : vector<288x3xbf16>, vector<3x128xbf16>, vector<288x128xf32> -> vector<288x128xf32>
    %7 = arith.addf %0, %6 : vector<288x128xf32>
    %c0_6 = arith.constant 0 : index
    %c1 = arith.constant 1 : index
    %c0_7 = arith.constant 0 : index
    %8 = vector.load %arg1[%c0_6, %c1, %c0_7] : memref<1x328x3xf32, #tpu.memory_space<vmem>>, vector<1x288x3xf32>
    %9 = vector.shape_cast %8 : vector<1x288x3xf32> to vector<288x3xf32>
    %10 = arith.truncf %9 : vector<288x3xf32> to vector<288x3xbf16>
    %c1_8 = arith.constant 1 : index
    %c0_9 = arith.constant 0 : index
    %c0_10 = arith.constant 0 : index
    %11 = vector.load %arg2[%c1_8, %c0_9, %c0_10] : memref<9x3x128xbf16, #tpu.memory_space<vmem>>, vector<1x3x128xbf16>
    %12 = vector.shape_cast %11 : vector<1x3x128xbf16> to vector<3x128xbf16>
    %cst_11 = arith.constant dense<0.000000e+00> : vector<288x128xf32>
    %13 = tpu.matmul %10, %12, %cst_11 {dimension_numbers = #tpu.dot_dimension_numbers<[1], [0], [0], [1], [0, 0, 1, 1], [], []>} : vector<288x3xbf16>, vector<3x128xbf16>, vector<288x128xf32> -> vector<288x128xf32>
    %14 = arith.addf %7, %13 : vector<288x128xf32>
    %c0_12 = arith.constant 0 : index
    %c2 = arith.constant 2 : index
    %c0_13 = arith.constant 0 : index
    %15 = vector.load %arg1[%c0_12, %c2, %c0_13] : memref<1x328x3xf32, #tpu.memory_space<vmem>>, vector<1x288x3xf32>
    %16 = vector.shape_cast %15 : vector<1x288x3xf32> to vector<288x3xf32>
    %17 = arith.truncf %16 : vector<288x3xf32> to vector<288x3xbf16>
    %c2_14 = arith.constant 2 : index
    %c0_15 = arith.constant 0 : index
    %c0_16 = arith.constant 0 : index
    %18 = vector.load %arg2[%c2_14, %c0_15, %c0_16] : memref<9x3x128xbf16, #tpu.memory_space<vmem>>, vector<1x3x128xbf16>
    %19 = vector.shape_cast %18 : vector<1x3x128xbf16> to vector<3x128xbf16>
    %cst_17 = arith.constant dense<0.000000e+00> : vector<288x128xf32>
    %20 = tpu.matmul %17, %19, %cst_17 {dimension_numbers = #tpu.dot_dimension_numbers<[1], [0], [0], [1], [0, 0, 1, 1], [], []>} : vector<288x3xbf16>, vector<3x128xbf16>, vector<288x128xf32> -> vector<288x128xf32>
    %21 = arith.addf %14, %20 : vector<288x128xf32>
    %c0_18 = arith.constant 0 : index
    %c18 = arith.constant 18 : index
    %c0_19 = arith.constant 0 : index
    %22 = vector.load %arg1[%c0_18, %c18, %c0_19] : memref<1x328x3xf32, #tpu.memory_space<vmem>>, vector<1x288x3xf32>
    %23 = vector.shape_cast %22 : vector<1x288x3xf32> to vector<288x3xf32>
    %24 = arith.truncf %23 : vector<288x3xf32> to vector<288x3xbf16>
    %c3 = arith.constant 3 : index
    %c0_20 = arith.constant 0 : index
    %c0_21 = arith.constant 0 : index
    %25 = vector.load %arg2[%c3, %c0_20, %c0_21] : memref<9x3x128xbf16, #tpu.memory_space<vmem>>, vector<1x3x128xbf16>
    %26 = vector.shape_cast %25 : vector<1x3x128xbf16> to vector<3x128xbf16>
    %cst_22 = arith.constant dense<0.000000e+00> : vector<288x128xf32>
    %27 = tpu.matmul %24, %26, %cst_22 {dimension_numbers = #tpu.dot_dimension_numbers<[1], [0], [0], [1], [0, 0, 1, 1], [], []>} : vector<288x3xbf16>, vector<3x128xbf16>, vector<288x128xf32> -> vector<288x128xf32>
    %28 = arith.addf %21, %27 : vector<288x128xf32>
    %c0_23 = arith.constant 0 : index
    %c19 = arith.constant 19 : index
    %c0_24 = arith.constant 0 : index
    %29 = vector.load %arg1[%c0_23, %c19, %c0_24] : memref<1x328x3xf32, #tpu.memory_space<vmem>>, vector<1x288x3xf32>
    %30 = vector.shape_cast %29 : vector<1x288x3xf32> to vector<288x3xf32>
    %31 = arith.truncf %30 : vector<288x3xf32> to vector<288x3xbf16>
    %c4 = arith.constant 4 : index
    %c0_25 = arith.constant 0 : index
    %c0_26 = arith.constant 0 : index
    %32 = vector.load %arg2[%c4, %c0_25, %c0_26] : memref<9x3x128xbf16, #tpu.memory_space<vmem>>, vector<1x3x128xbf16>
    %33 = vector.shape_cast %32 : vector<1x3x128xbf16> to vector<3x128xbf16>
    %cst_27 = arith.constant dense<0.000000e+00> : vector<288x128xf32>
    %34 = tpu.matmul %31, %33, %cst_27 {dimension_numbers = #tpu.dot_dimension_numbers<[1], [0], [0], [1], [0, 0, 1, 1], [], []>} : vector<288x3xbf16>, vector<3x128xbf16>, vector<288x128xf32> -> vector<288x128xf32>
    %35 = arith.addf %28, %34 : vector<288x128xf32>
    %c0_28 = arith.constant 0 : index
    %c20 = arith.constant 20 : index
    %c0_29 = arith.constant 0 : index
    %36 = vector.load %arg1[%c0_28, %c20, %c0_29] : memref<1x328x3xf32, #tpu.memory_space<vmem>>, vector<1x288x3xf32>
    %37 = vector.shape_cast %36 : vector<1x288x3xf32> to vector<288x3xf32>
    %38 = arith.truncf %37 : vector<288x3xf32> to vector<288x3xbf16>
    %c5 = arith.constant 5 : index
    %c0_30 = arith.constant 0 : index
    %c0_31 = arith.constant 0 : index
    %39 = vector.load %arg2[%c5, %c0_30, %c0_31] : memref<9x3x128xbf16, #tpu.memory_space<vmem>>, vector<1x3x128xbf16>
    %40 = vector.shape_cast %39 : vector<1x3x128xbf16> to vector<3x128xbf16>
    %cst_32 = arith.constant dense<0.000000e+00> : vector<288x128xf32>
    %41 = tpu.matmul %38, %40, %cst_32 {dimension_numbers = #tpu.dot_dimension_numbers<[1], [0], [0], [1], [0, 0, 1, 1], [], []>} : vector<288x3xbf16>, vector<3x128xbf16>, vector<288x128xf32> -> vector<288x128xf32>
    %42 = arith.addf %35, %41 : vector<288x128xf32>
    %c0_33 = arith.constant 0 : index
    %c36 = arith.constant 36 : index
    %c0_34 = arith.constant 0 : index
    %43 = vector.load %arg1[%c0_33, %c36, %c0_34] : memref<1x328x3xf32, #tpu.memory_space<vmem>>, vector<1x288x3xf32>
    %44 = vector.shape_cast %43 : vector<1x288x3xf32> to vector<288x3xf32>
    %45 = arith.truncf %44 : vector<288x3xf32> to vector<288x3xbf16>
    %c6 = arith.constant 6 : index
    %c0_35 = arith.constant 0 : index
    %c0_36 = arith.constant 0 : index
    %46 = vector.load %arg2[%c6, %c0_35, %c0_36] : memref<9x3x128xbf16, #tpu.memory_space<vmem>>, vector<1x3x128xbf16>
    %47 = vector.shape_cast %46 : vector<1x3x128xbf16> to vector<3x128xbf16>
    %cst_37 = arith.constant dense<0.000000e+00> : vector<288x128xf32>
    %48 = tpu.matmul %45, %47, %cst_37 {dimension_numbers = #tpu.dot_dimension_numbers<[1], [0], [0], [1], [0, 0, 1, 1], [], []>} : vector<288x3xbf16>, vector<3x128xbf16>, vector<288x128xf32> -> vector<288x128xf32>
    %49 = arith.addf %42, %48 : vector<288x128xf32>
    %c0_38 = arith.constant 0 : index
    %c37 = arith.constant 37 : index
    %c0_39 = arith.constant 0 : index
    %50 = vector.load %arg1[%c0_38, %c37, %c0_39] : memref<1x328x3xf32, #tpu.memory_space<vmem>>, vector<1x288x3xf32>
    %51 = vector.shape_cast %50 : vector<1x288x3xf32> to vector<288x3xf32>
    %52 = arith.truncf %51 : vector<288x3xf32> to vector<288x3xbf16>
    %c7 = arith.constant 7 : index
    %c0_40 = arith.constant 0 : index
    %c0_41 = arith.constant 0 : index
    %53 = vector.load %arg2[%c7, %c0_40, %c0_41] : memref<9x3x128xbf16, #tpu.memory_space<vmem>>, vector<1x3x128xbf16>
    %54 = vector.shape_cast %53 : vector<1x3x128xbf16> to vector<3x128xbf16>
    %cst_42 = arith.constant dense<0.000000e+00> : vector<288x128xf32>
    %55 = tpu.matmul %52, %54, %cst_42 {dimension_numbers = #tpu.dot_dimension_numbers<[1], [0], [0], [1], [0, 0, 1, 1], [], []>} : vector<288x3xbf16>, vector<3x128xbf16>, vector<288x128xf32> -> vector<288x128xf32>
    %56 = arith.addf %49, %55 : vector<288x128xf32>
    %c0_43 = arith.constant 0 : index
    %c38 = arith.constant 38 : index
    %c0_44 = arith.constant 0 : index
    %57 = vector.load %arg1[%c0_43, %c38, %c0_44] : memref<1x328x3xf32, #tpu.memory_space<vmem>>, vector<1x288x3xf32>
    %58 = vector.shape_cast %57 : vector<1x288x3xf32> to vector<288x3xf32>
    %59 = arith.truncf %58 : vector<288x3xf32> to vector<288x3xbf16>
    %c8 = arith.constant 8 : index
    %c0_45 = arith.constant 0 : index
    %c0_46 = arith.constant 0 : index
    %60 = vector.load %arg2[%c8, %c0_45, %c0_46] : memref<9x3x128xbf16, #tpu.memory_space<vmem>>, vector<1x3x128xbf16>
    %61 = vector.shape_cast %60 : vector<1x3x128xbf16> to vector<3x128xbf16>
    %cst_47 = arith.constant dense<0.000000e+00> : vector<288x128xf32>
    %62 = tpu.matmul %59, %61, %cst_47 {dimension_numbers = #tpu.dot_dimension_numbers<[1], [0], [0], [1], [0, 0, 1, 1], [], []>} : vector<288x3xbf16>, vector<3x128xbf16>, vector<288x128xf32> -> vector<288x128xf32>
    %63 = arith.addf %56, %62 : vector<288x128xf32>
    %c0_48 = arith.constant 0 : index
    %c0_49 = arith.constant 0 : index
    %64 = vector.load %arg3[%c0_48, %c0_49] : memref<1x128xf32, #tpu.memory_space<vmem>>, vector<1x128xf32>
    %65 = vector.broadcast %64 : vector<1x128xf32> to vector<288x128xf32>
    %66 = arith.addf %63, %65 : vector<288x128xf32>
    %cst_50 = arith.constant 0.000000e+00 : f32
    %67 = vector.broadcast %cst_50 : f32 to vector<288x128xf32>
    %68 = arith.maximumf %66, %67 : vector<288x128xf32>
    %c0_51 = arith.constant 0 : index
    %c0_52 = arith.constant 0 : index
    %69 = vector.load %arg4[%c0_51, %c0_52] : memref<1x288xbf16, #tpu.memory_space<vmem>>, vector<1x288xbf16>
    %70 = arith.truncf %68 : vector<288x128xf32> to vector<288x128xbf16>
    %cst_53 = arith.constant dense<0.000000e+00> : vector<1x128xf32>
    %71 = tpu.matmul %69, %70, %cst_53 {dimension_numbers = #tpu.dot_dimension_numbers<[1], [0], [0], [1], [0, 0, 1, 1], [], []>} : vector<1x288xbf16>, vector<288x128xbf16>, vector<1x128xf32> -> vector<1x128xf32>
    %72 = arith.truncf %71 : vector<1x128xf32> to vector<1x128xbf16>
    %c0_54 = arith.constant 0 : index
    %c0_55 = arith.constant 0 : index
    %73 = vector.load %arg5[%c0_54, %c0_55] : memref<128x128xbf16, #tpu.memory_space<vmem>>, vector<128x128xbf16>
    %cst_56 = arith.constant dense<0.000000e+00> : vector<1x128xf32>
    %74 = tpu.matmul %72, %73, %cst_56 {dimension_numbers = #tpu.dot_dimension_numbers<[1], [0], [0], [1], [0, 0, 1, 1], [], []>} : vector<1x128xbf16>, vector<128x128xbf16>, vector<1x128xf32> -> vector<1x128xf32>
    %c0_57 = arith.constant 0 : index
    %c0_58 = arith.constant 0 : index
    %75 = vector.load %arg6[%c0_57, %c0_58] : memref<1x128xf32, #tpu.memory_space<vmem>>, vector<1x128xf32>
    %76 = arith.addf %74, %75 : vector<1x128xf32>
    %c0_59 = arith.constant 0 : index
    %c0_60 = arith.constant 0 : index
    %c0_61 = arith.constant 0 : index
    %77 = vector.load %arg7[%c0_59, %c0_60, %c0_61] : memref<1x1x128xf32, #tpu.memory_space<vmem>>, vector<1x1x128xf32>
    %78 = vector.shape_cast %77 : vector<1x1x128xf32> to vector<1x128xf32>
    %79 = vector.shape_cast %76 : vector<1x128xf32> to vector<1x1x128xf32>
    tpu.vector_store %arg7[%c0_59, %c0_60, %c0_61], %79 {strides = array<i32>} : memref<1x1x128xf32, #tpu.memory_space<vmem>>, vector<1x1x128xf32>,
    return
  }
  func.func @transform_0(%arg0: i32) -> (i32, i32, i32) {
    %c0_i32 = arith.constant 0 : i32
    %c0_i32_0 = arith.constant 0 : i32
    %c0_i32_1 = arith.constant 0 : i32
    return %arg0, %c0_i32, %c0_i32_0 : i32, i32, i32
  }
  func.func @transform_1(%arg0: i32) -> (i32, i32, i32) {
    %c0_i32 = arith.constant 0 : i32
    %c0_i32_0 = arith.constant 0 : i32
    %c0_i32_1 = arith.constant 0 : i32
    %c0_i32_2 = arith.constant 0 : i32
    return %c0_i32, %c0_i32_0, %c0_i32_1 : i32, i32, i32
  }
  func.func @transform_2(%arg0: i32) -> (i32, i32) {
    %c0_i32 = arith.constant 0 : i32
    %c0_i32_0 = arith.constant 0 : i32
    %c0_i32_1 = arith.constant 0 : i32
    return %c0_i32, %c0_i32_0 : i32, i32
  }
  func.func @transform_3(%arg0: i32) -> (i32, i32) {
    %c0_i32 = arith.constant 0 : i32
    %c0_i32_0 = arith.constant 0 : i32
    %c0_i32_1 = arith.constant 0 : i32
    return %c0_i32, %c0_i32_0 : i32, i32
  }
  func.func @transform_4(%arg0: i32) -> (i32, i32) {
    %c0_i32 = arith.constant 0 : i32
    %c0_i32_0 = arith.constant 0 : i32
    %c0_i32_1 = arith.constant 0 : i32
    return %c0_i32, %c0_i32_0 : i32, i32
  }
  func.func @transform_5(%arg0: i32) -> (i32, i32) {
    %c0_i32 = arith.constant 0 : i32
    %c0_i32_0 = arith.constant 0 : i32
    %c0_i32_1 = arith.constant 0 : i32
    return %c0_i32, %c0_i32_0 : i32, i32
  }
  func.func @transform_6(%arg0: i32) -> (i32, i32, i32) {
    %c0_i32 = arith.constant 0 : i32
    %c0_i32_0 = arith.constant 0 : i32
    %c0_i32_1 = arith.constant 0 : i32
    return %arg0, %c0_i32, %c0_i32_0 : i32, i32, i32
  }
}

</mosaic_0001>

<llo_original>
// kernel: tpu_custom_call.1
$region0: #{tpu_custom_call.1}
  #allocation0 [shape = 'u32[]', space=smem, size = 0x4, offset = 0x4, fixed_abs, tag = 'smem constant byte address 0x4 - core index']
  #allocation1 [shape = 'u32[144,128]{1,0:T(1,128)}', space=vmem, size = 0x12000, scoped, tag = 'internal scratch']
  %s0 = inlined_call_operand.vmem [shape: f32[8,328,3], index: 0, kind: input, shape index: {}]
  %s1 = inlined_call_operand.vmem [shape: bf16[9,3,128], index: 1, kind: input, shape index: {}]
  %s2 = inlined_call_operand.vmem [shape: f32[1,128], index: 2, kind: input, shape index: {}]
  %s3 = inlined_call_operand.vmem [shape: bf16[1,288], index: 3, kind: input, shape index: {}]
  %s4 = inlined_call_operand.vmem [shape: bf16[128,128], index: 4, kind: input, shape index: {}]
  %s5 = inlined_call_operand.vmem [shape: f32[1,128], index: 5, kind: input, shape index: {}]
  %s6 = inlined_call_operand.hbm [shape: f32[8,1,128], index: 6, kind: output, shape index: {}]
  %s7 = sld [smem:[#allocation0]]
  $region57: #{tpu_custom_call.1} parent=0
    _
  %s9 = ssub.s32 1, %s7
  %s10 = scalar_select 0, %s9, %s7
  $region1: #{tpu_custom_call.1} parent=0
    #allocation2 [shape = 'u8[1024]{0}', space=vmem, size = 0x400, scoped, tag = 'output window, operand 0']
    #allocation3 [shape = 's32[2]{0}', space=sflag, size = 0x8, scoped, tag = 'scoped memory for tpu_custom_call.1']
    %11 = vsyncpa [#allocation3], 0
    %s12 = scalar_lea.sflag [#allocation3], 1
    %13 = vsyncpa %s12, 0
    loop: start=0, step=1, limit=10
    $region2: #{tpu_custom_call.1} parent=1 // loop_pre_header
      _
    $region3: #{tpu_custom_call.1} parent=1 // loop_header
      %s15 = sphi 0, %s19
      %p16 = scmp.ge.s32.totalorder %s15, 10
      %s25 = sphi 0, %s27
      %s28 = sphi 0, %s25
      %s29 = sphi 0, %s28
      %s45 = sphi 0, %s29
      %s49 = sphi 0, %s49
      %s51 = sphi 0, %s49
      %s52 = sphi 0, %s51
      %s66 = sphi 0, %s52
      %s70 = sphi 0, %s70
      %s72 = sphi 0, %s70
      %s73 = sphi 0, %s72
      %s87 = sphi 0, %s73
      %s91 = sphi 0, %s91
      %s93 = sphi 0, %s91
      %s94 = sphi 0, %s93
      %s108 = sphi 0, %s94
      %s112 = sphi 0, %s112
      %s114 = sphi 0, %s112
      %s115 = sphi 0, %s114
      %s129 = sphi 0, %s115
      %s133 = sphi 0, %s133
      %s135 = sphi 0, %s133
      %s136 = sphi 0, %s135
      %s150 = sphi 0, %s136
      %s156 = sphi 0, %s158
      %s159 = sphi 0, %s156
      %s160 = sphi 0, %s159
      %s176 = sphi 0, %s160
    $region4: #{tpu_custom_call.1} parent=1 // loop_header_branch
      %18 = sbr.rel (%p16) target = $region8
    $region5: #{tpu_custom_call.1} parent=1 // loop_body
      %s20 = ssub.s32 %s15, 1
      %s21 = ssub.s32 %s15, 2
      %s22 = sadd.s32 %s15, 1
      %s23 = ssub.s32 %s15, %s22
      %p24 = scmp.eq.s32.totalorder %s23, 0
      %s26 = sadd.s32 %s25, 1
      %s27 = scalar_select %p24, %s25, %s26
      %p30 = pneg %p24
      %p31 = scmp.eq.s32.totalorder %s15, 7
      %p32 = por %p30, %p31
      %p33 = scmp.ne.s32.totalorder %s25, %s28
      %p34 = scmp.eq.s32.totalorder %s15, 0
      %p35 = por %p33, %p34
      %p36 = scmp.ne.s32.totalorder %s25, %s28
      %p37 = scmp.eq.s32.totalorder %s20, 7
      %p38 = por %p36, %p37
      %p39 = scmp.ne.s32.totalorder %s28, %s29
      %p40 = scmp.eq.s32.totalorder %s20, 0
      %p41 = por %p39, %p40
      %p42 = scmp.ne.s32.totalorder %s28, %s29
      %p43 = scmp.eq.s32.totalorder %s21, 7
      %p44 = por %p42, %p43
      %p46 = scmp.ne.s32.totalorder %s29, %s45
      %p47 = scmp.eq.s32.totalorder %s21, 0
      %p48 = por %p46, %p47
      %s50 = sadd.s32 %s49, 1
      %p53 = scmp.eq.s32.totalorder %s15, 7
      %p54 = scmp.ne.s32.totalorder %s49, %s51
      %p55 = scmp.eq.s32.totalorder %s15, 0
      %p56 = por %p54, %p55
      %p57 = scmp.ne.s32.totalorder %s49, %s51
      %p58 = scmp.eq.s32.totalorder %s20, 7
      %p59 = por %p57, %p58
      %p60 = scmp.ne.s32.totalorder %s51, %s52
      %p61 = scmp.eq.s32.totalorder %s20, 0
      %p62 = por %p60, %p61
      %p63 = scmp.ne.s32.totalorder %s51, %s52
      %p64 = scmp.eq.s32.totalorder %s21, 7
      %p65 = por %p63, %p64
      %p67 = scmp.ne.s32.totalorder %s52, %s66
      %p68 = scmp.eq.s32.totalorder %s21, 0
      %p69 = por %p67, %p68
      %s71 = sadd.s32 %s70, 1
      %p74 = scmp.eq.s32.totalorder %s15, 7
      %p75 = scmp.ne.s32.totalorder %s70, %s72
      %p76 = scmp.eq.s32.totalorder %s15, 0
      %p77 = por %p75, %p76
      %p78 = scmp.ne.s32.totalorder %s70, %s72
      %p79 = scmp.eq.s32.totalorder %s20, 7
      %p80 = por %p78, %p79
      %p81 = scmp.ne.s32.totalorder %s72, %s73
      %p82 = scmp.eq.s32.totalorder %s20, 0
      %p83 = por %p81, %p82
      %p84 = scmp.ne.s32.totalorder %s72, %s73
      %p85 = scmp.eq.s32.totalorder %s21, 7
      %p86 = por %p84, %p85
      %p88 = scmp.ne.s32.totalorder %s73, %s87
      %p89 = scmp.eq.s32.totalorder %s21, 0
      %p90 = por %p88, %p89
      %s92 = sadd.s32 %s91, 1
      %p95 = scmp.eq.s32.totalorder %s15, 7
      %p96 = scmp.ne.s32.totalorder %s91, %s93
      %p97 = scmp.eq.s32.totalorder %s15, 0
      %p98 = por %p96, %p97
      %p99 = scmp.ne.s32.totalorder %s91, %s93
      %p100 = scmp.eq.s32.totalorder %s20, 7
      %p101 = por %p99, %p100
      %p102 = scmp.ne.s32.totalorder %s93, %s94
      %p103 = scmp.eq.s32.totalorder %s20, 0
      %p104 = por %p102, %p103
      %p105 = scmp.ne.s32.totalorder %s93, %s94
      %p106 = scmp.eq.s32.totalorder %s21, 7
      %p107 = por %p105, %p106
      %p109 = scmp.ne.s32.totalorder %s94, %s108
      %p110 = scmp.eq.s32.totalorder %s21, 0
      %p111 = por %p109, %p110
      %s113 = sadd.s32 %s112, 1
      %p116 = scmp.eq.s32.totalorder %s15, 7
      %p117 = scmp.ne.s32.totalorder %s112, %s114
      %p118 = scmp.eq.s32.totalorder %s15, 0
      %p119 = por %p117, %p118
      %p120 = scmp.ne.s32.totalorder %s112, %s114
      %p121 = scmp.eq.s32.totalorder %s20, 7
      %p122 = por %p120, %p121
      %p123 = scmp.ne.s32.totalorder %s114, %s115
      %p124 = scmp.eq.s32.totalorder %s20, 0
      %p125 = por %p123, %p124
      %p126 = scmp.ne.s32.totalorder %s114, %s115
      %p127 = scmp.eq.s32.totalorder %s21, 7
      %p128 = por %p126, %p127
      %p130 = scmp.ne.s32.totalorder %s115, %s129
      %p131 = scmp.eq.s32.totalorder %s21, 0
      %p132 = por %p130, %p131
      %s134 = sadd.s32 %s133, 1
      %p137 = scmp.eq.s32.totalorder %s15, 7
      %p138 = scmp.ne.s32.totalorder %s133, %s135
      %p139 = scmp.eq.s32.totalorder %s15, 0
      %p140 = por %p138, %p139
      %p141 = scmp.ne.s32.totalorder %s133, %s135
      %p142 = scmp.eq.s32.totalorder %s20, 7
      %p143 = por %p141, %p142
      %p144 = scmp.ne.s32.totalorder %s135, %s136
      %p145 = scmp.eq.s32.totalorder %s20, 0
      %p146 = por %p144, %p145
      %p147 = scmp.ne.s32.totalorder %s135, %s136
      %p148 = scmp.eq.s32.totalorder %s21, 7
      %p149 = por %p147, %p148
      %p151 = scmp.ne.s32.totalorder %s136, %s150
      %p152 = scmp.eq.s32.totalorder %s21, 0
      %p153 = por %p151, %p152
      %s154 = ssub.s32 %s15, %s22
      %p155 = scmp.eq.s32.totalorder %s154, 0
      %s157 = sadd.s32 %s156, 1
      %s158 = scalar_select %p155, %s156, %s157
      %p161 = pneg %p155
      %p162 = scmp.eq.s32.totalorder %s15, 7
      %p163 = por %p161, %p162
      %p164 = scmp.ne.s32.totalorder %s156, %s159
      %p165 = scmp.eq.s32.totalorder %s15, 0
      %p166 = por %p164, %p165
      %p167 = scmp.ne.s32.totalorder %s156, %s159
      %p168 = scmp.eq.s32.totalorder %s20, 7
      %p169 = por %p167, %p168
      %p170 = scmp.ne.s32.totalorder %s159, %s160
      %p171 = scmp.eq.s32.totalorder %s20, 0
      %p172 = por %p170, %p171
      %p173 = scmp.ne.s32.totalorder %s159, %s160
      %p174 = scmp.eq.s32.totalorder %s21, 7
      %p175 = por %p173, %p174
      %p177 = scmp.ne.s32.totalorder %s160, %s176
      %p178 = scmp.eq.s32.totalorder %s21, 0
      %p179 = por %p177, %p178
      %p180 = scmp.le.s32.totalorder 1, %s15
      %p181 = scmp.lt.s32.totalorder %s15, 9
      %p182 = pnand %p180, %p181
      %p183 = pneg %p182
      // Predicated region
      $region9: #{tpu_custom_call.1} parent=5 // pred_check
        _
      $region10: #{tpu_custom_call.1} parent=5 // pred_check_branch
        %185 = sbr.rel (%p182) target = $region12
      $region11: #{tpu_custom_call.1} parent=5 // pred_region
        %s186 = ssub.s32 %s15, 1
        // Predicated region
        $region13: #{tpu_custom_call.1} parent=11 // pred_check
          %p187 = pneg %p62
        $region14: #{tpu_custom_call.1} parent=11 // pred_check_branch
          %189 = sbr.rel (%p187) target = $region16
        $region15: #{tpu_custom_call.1} parent=11 // pred_region
          _
        $region16: #{tpu_custom_call.1} parent=11 // pred_fallthru
          _
        // Predicated region
        $region17: #{tpu_custom_call.1} parent=11 // pred_check
          %p190 = pneg %p83
        $region18: #{tpu_custom_call.1} parent=11 // pred_check_branch
          %192 = sbr.rel (%p190) target = $region20
        $region19: #{tpu_custom_call.1} parent=11 // pred_region
          _
        $region20: #{tpu_custom_call.1} parent=11 // pred_fallthru
          _
        // Predicated region
        $region21: #{tpu_custom_call.1} parent=11 // pred_check
          %p193 = pneg %p104
        $region22: #{tpu_custom_call.1} parent=11 // pred_check_branch
          %195 = sbr.rel (%p193) target = $region24
        $region23: #{tpu_custom_call.1} parent=11 // pred_region
          _
        $region24: #{tpu_custom_call.1} parent=11 // pred_fallthru
          _
        // Predicated region
        $region25: #{tpu_custom_call.1} parent=11 // pred_check
          %p196 = pneg %p125
        $region26: #{tpu_custom_call.1} parent=11 // pred_check_branch
          %198 = sbr.rel (%p196) target = $region28
        $region27: #{tpu_custom_call.1} parent=11 // pred_region
          _
        $region28: #{tpu_custom_call.1} parent=11 // pred_fallthru
          _
        // Predicated region
        $region29: #{tpu_custom_call.1} parent=11 // pred_check
          %p199 = pneg %p146
        $region30: #{tpu_custom_call.1} parent=11 // pred_check_branch
          %201 = sbr.rel (%p199) target = $region32
        $region31: #{tpu_custom_call.1} parent=11 // pred_region
          _
        $region32: #{tpu_custom_call.1} parent=11 // pred_fallthru
          _
      $region12: #{tpu_custom_call.1} parent=5 // pred_fallthru
        _
      %p202 = scmp.lt.s32.totalorder %s15, 8
      // Predicated region
      $region33: #{tpu_custom_call.1} parent=5 // pred_check
        %p203 = pneg %p202
      $region34: #{tpu_custom_call.1} parent=5 // pred_check_branch
        %205 = sbr.rel (%p203) target = $region36
      $region35: #{tpu_custom_call.1} parent=5 // pred_region
        // Predicated region
        $region37: #{tpu_custom_call.1} parent=35 // pred_check
          %p206 = pneg %p35
        $region38: #{tpu_custom_call.1} parent=35 // pred_check_branch
          %208 = sbr.rel (%p206) target = $region40
        $region39: #{tpu_custom_call.1} parent=35 // pred_region
          %p209 = scmp.lt.s32.totalorder %s15, 7
          %s210 = scalar_select %p209, %s15, 7
          %s211 = smul.addr %s210, 41
          %s212 = smul.addr %s211, 8
          %s213 = scalar_lea.vmem %s0, %s212
        $region40: #{tpu_custom_call.1} parent=35 // pred_fallthru
          _
      $region36: #{tpu_custom_call.1} parent=5 // pred_fallthru
        _
      %p214 = scmp.le.s32.totalorder 1, %s15
      %p215 = scmp.lt.s32.totalorder %s15, 9
      %p216 = pnand %p214, %p215
      %p217 = pneg %p216
      // Predicated region
      $region41: #{tpu_custom_call.1} parent=5 // pred_check
        _
      $region42: #{tpu_custom_call.1} parent=5 // pred_check_branch
        %219 = sbr.rel (%p216) target = $region44
      $region43: #{tpu_custom_call.1} parent=5 // pred_region
        %s220 = ssub.s32 %s15, 1
        %p221 = scmp.lt.s32.totalorder %s20, 7
        %s222 = scalar_select %p221, %s20, 7
        %s223 = smul.addr %s222, 41
        %s224 = smul.addr %s223, 8
        %s225 = scalar_lea.vmem %s0, %s224
        %p226 = pneg %p41
        %p227 = pneg %p38
        %p228 = pneg %p62
        %p229 = pneg %p59
        %p230 = pneg %p83
        %p231 = pneg %p80
        %p232 = pneg %p104
        %p233 = pneg %p101
        %p234 = pneg %p125
        %p235 = pneg %p122
        %p236 = pneg %p146
        %p237 = pneg %p143
        %p238 = pneg %p172
        %p239 = pneg %p169
        %s240 = sand.u32 %s159, 1
        %s241 = scalar_lea.sflag [#allocation3], %s240
        %s242 = sand.u32 %s159, 1
        %s243 = scalar_lea.vmem [#allocation2], %s242
        %p244 = scmp.lt.s32.totalorder %s20, 7
        %s245 = scalar_select %p244, %s20, 7
        %s246 = smul.addr %s245, 41
        %s247 = smul.addr %s246, 8
        %s248 = scalar_lea.vmem %s0, %s247
        %v250 = vld [vmem:[%s248] sm:$0xff]
        %v251 = vld [vmem:[%s248 + $0x8] sm:$0xff]
        %v252 = vld [vmem:[%s248 + $0x10] sm:$0xff]
        %v253 = vld [vmem:[%s248 + $0x18] sm:$0xff]
        %v254 = vld [vmem:[%s248 + $0x20] sm:$0xff]
        %v255 = vld [vmem:[%s248 + $0x28] sm:$0xff]
        %v256 = vld [vmem:[%s248 + $0x30] sm:$0xff]
        %v257 = vld [vmem:[%s248 + $0x38] sm:$0xff]
        %v258 = vld [vmem:[%s248 + $0x40] sm:$0xff]
        %v259 = vld [vmem:[%s248 + $0x48] sm:$0xff]
        %v260 = vld [vmem:[%s248 + $0x50] sm:$0xff]
        %v261 = vld [vmem:[%s248 + $0x58] sm:$0xff]
        %v262 = vld [vmem:[%s248 + $0x60] sm:$0xff]
        %v263 = vld [vmem:[%s248 + $0x68] sm:$0xff]
        %v264 = vld [vmem:[%s248 + $0x70] sm:$0xff]
        %v265 = vld [vmem:[%s248 + $0x78] sm:$0xff]
        %v266 = vld [vmem:[%s248 + $0x80] sm:$0xff]
        %v267 = vld [vmem:[%s248 + $0x88] sm:$0xff]
        %v268 = vld [vmem:[%s248 + $0x90] sm:$0xff]
        %v269 = vld [vmem:[%s248 + $0x98] sm:$0xff]
        %v270 = vld [vmem:[%s248 + $0xa0] sm:$0xff]
        %v271 = vld [vmem:[%s248 + $0xa8] sm:$0xff]
        %v272 = vld [vmem:[%s248 + $0xb0] sm:$0xff]
        %v273 = vld [vmem:[%s248 + $0xb8] sm:$0xff]
        %v274 = vld [vmem:[%s248 + $0xc0] sm:$0xff]
        %v275 = vld [vmem:[%s248 + $0xc8] sm:$0xff]
        %v276 = vld [vmem:[%s248 + $0xd0] sm:$0xff]
        %v277 = vld [vmem:[%s248 + $0xd8] sm:$0xff]
        %v278 = vld [vmem:[%s248 + $0xe0] sm:$0xff]
        %v279 = vld [vmem:[%s248 + $0xe8] sm:$0xff]
        %v280 = vld [vmem:[%s248 + $0xf0] sm:$0xff]
        %v281 = vld [vmem:[%s248 + $0xf8] sm:$0xff]
        %v282 = vld [vmem:[%s248 + $0x100] sm:$0xff]
        %v283 = vld [vmem:[%s248 + $0x108] sm:$0xff]
        %v284 = vld [vmem:[%s248 + $0x110] sm:$0xff]
        %v285 = vld [vmem:[%s248 + $0x118] sm:$0xff]
        %v286 = vpack.c.bf16 %v251, %v250
        %v287 = vpack.c.bf16 %v253, %v252
        %v288 = vpack.c.bf16 %v255, %v254
        %v289 = vpack.c.bf16 %v257, %v256
        %v290 = vpack.c.bf16 %v259, %v258
        %v291 = vpack.c.bf16 %v261, %v260
        %v292 = vpack.c.bf16 %v263, %v262
        %v293 = vpack.c.bf16 %v265, %v264
        %v294 = vpack.c.bf16 %v267, %v266
        %v295 = vpack.c.bf16 %v269, %v268
        %v296 = vpack.c.bf16 %v271, %v270
        %v297 = vpack.c.bf16 %v273, %v272
        %v298 = vpack.c.bf16 %v275, %v274
        %v299 = vpack.c.bf16 %v277, %v276
        %v300 = vpack.c.bf16 %v279, %v278
        %v301 = vpack.c.bf16 %v281, %v280
        %v302 = vpack.c.bf16 %v283, %v282
        %v303 = vpack.c.bf16 %v285, %v284
        %v304 = vld [vmem:[%s1] sm:$0x3]
        %v305 = vld [vmem:[%s248 + $0x1] sm:$0xff]
        %v306 = vld [vmem:[%s248 + $0x9] sm:$0xff]
        %v307 = vld [vmem:[%s248 + $0x11] sm:$0xff]
        %v308 = vld [vmem:[%s248 + $0x19] sm:$0xff]
        %v309 = vld [vmem:[%s248 + $0x21] sm:$0xff]
        %v310 = vld [vmem:[%s248 + $0x29] sm:$0xff]
        %v311 = vld [vmem:[%s248 + $0x31] sm:$0xff]
        %v312 = vld [vmem:[%s248 + $0x39] sm:$0xff]
        %v313 = vld [vmem:[%s248 + $0x41] sm:$0xff]
        %v314 = vld [vmem:[%s248 + $0x49] sm:$0xff]
        %v315 = vld [vmem:[%s248 + $0x51] sm:$0xff]
        %v316 = vld [vmem:[%s248 + $0x59] sm:$0xff]
        %v317 = vld [vmem:[%s248 + $0x61] sm:$0xff]
        %v318 = vld [vmem:[%s248 + $0x69] sm:$0xff]
        %v319 = vld [vmem:[%s248 + $0x71] sm:$0xff]
        %v320 = vld [vmem:[%s248 + $0x79] sm:$0xff]
        %v321 = vld [vmem:[%s248 + $0x81] sm:$0xff]
        %v322 = vld [vmem:[%s248 + $0x89] sm:$0xff]
        %v323 = vld [vmem:[%s248 + $0x91] sm:$0xff]
        %v324 = vld [vmem:[%s248 + $0x99] sm:$0xff]
        %v325 = vld [vmem:[%s248 + $0xa1] sm:$0xff]
        %v326 = vld [vmem:[%s248 + $0xa9] sm:$0xff]
        %v327 = vld [vmem:[%s248 + $0xb1] sm:$0xff]
        %v328 = vld [vmem:[%s248 + $0xb9] sm:$0xff]
        %v329 = vld [vmem:[%s248 + $0xc1] sm:$0xff]
        %v330 = vld [vmem:[%s248 + $0xc9] sm:$0xff]
        %v331 = vld [vmem:[%s248 + $0xd1] sm:$0xff]
        %v332 = vld [vmem:[%s248 + $0xd9] sm:$0xff]
        %v333 = vld [vmem:[%s248 + $0xe1] sm:$0xff]
        %v334 = vld [vmem:[%s248 + $0xe9] sm:$0xff]
        %v335 = vld [vmem:[%s248 + $0xf1] sm:$0xff]
        %v336 = vld [vmem:[%s248 + $0xf9] sm:$0xff]
        %v337 = vld [vmem:[%s248 + $0x101] sm:$0xff]
        %v338 = vld [vmem:[%s248 + $0x109] sm:$0xff]
        %v339 = vld [vmem:[%s248 + $0x111] sm:$0xff]
        %v340 = vld [vmem:[%s248 + $0x119] sm:$0xff]
        %v341 = vpack.c.bf16 %v306, %v305
        %v342 = vpack.c.bf16 %v308, %v307
        %v343 = vpack.c.bf16 %v310, %v309
        %v344 = vpack.c.bf16 %v312, %v311
        %v345 = vpack.c.bf16 %v314, %v313
        %v346 = vpack.c.bf16 %v316, %v315
        %v347 = vpack.c.bf16 %v318, %v317
        %v348 = vpack.c.bf16 %v320, %v319
        %v349 = vpack.c.bf16 %v322, %v321
        %v350 = vpack.c.bf16 %v324, %v323
        %v351 = vpack.c.bf16 %v326, %v325
        %v352 = vpack.c.bf16 %v328, %v327
        %v353 = vpack.c.bf16 %v330, %v329
        %v354 = vpack.c.bf16 %v332, %v331
        %v355 = vpack.c.bf16 %v334, %v333
        %v356 = vpack.c.bf16 %v336, %v335
        %v357 = vpack.c.bf16 %v338, %v337
        %v358 = vpack.c.bf16 %v340, %v339
        %s359 = scalar_lea.vmem %s1, 2
        %v360 = vld [vmem:[%s359] sm:$0x3]
        %vm361 = vcmask 23552
        %v363 = vsel %vm361, %v341, 0
        %v366 = vsel %vm361, %v342, 0
        %v369 = vsel %vm361, %v343, 0
        %v372 = vsel %vm361, %v344, 0
        %v375 = vsel %vm361, %v345, 0
        %v378 = vsel %vm361, %v346, 0
        %v381 = vsel %vm361, %v347, 0
        %v384 = vsel %vm361, %v348, 0
        %v387 = vsel %vm361, %v349, 0
        %v390 = vsel %vm361, %v350, 0
        %v393 = vsel %vm361, %v351, 0
        %v396 = vsel %vm361, %v352, 0
        %v399 = vsel %vm361, %v353, 0
        %v402 = vsel %vm361, %v354, 0
        %v405 = vsel %vm361, %v355, 0
        %v408 = vsel %vm361, %v356, 0
        %v411 = vsel %vm361, %v357, 0
        %v414 = vsel %vm361, %v358, 0
        %vm416 = vcmask 1040384
        %vm417 = vcmask 1041408
        %v418 = vsel %vm416, 4294967295, 65535
        %v419 = vsel %vm417, %v418, 0
        %v421 = vand.u32 %v360, %v419
        %423 = vmatprep.subr.bf16.mxu0 0
        %424 = vmatpush1.bf16.msra.mxu0 %v421
        %425 = vmatprep.subr.bf16.mxu0 0
        %426 = vmatpush1.bf16.msra.mxu0 0
        %427 = vmatprep.subr.bf16.mxu0 0
        %428 = vmatpush1.bf16.msra.mxu0 0
        %429 = vmatprep.subr.bf16.mxu0 0
        %430 = vmatpush1.bf16.msra.mxu0 0
        %431 = vmatprep.subr.bf16.mxu0 0
        %432 = vmatpush1.bf16.msra.mxu0 0
        %433 = vmatprep.subr.bf16.mxu0 0
        %434 = vmatpush1.bf16.msra.mxu0 0
        %435 = vmatprep.subr.bf16.mxu0 0
        %436 = vmatpush1.bf16.msra.mxu0 0
        %437 = vmatprep.subr.bf16.mxu0 0
        %438 = vmatpush1.bf16.msra.mxu0 0
        %439 = vmatprep.subr.bf16.mxu0 0
        %440 = vmatpush1.bf16.msra.mxu0 0
        %441 = vmatprep.subr.bf16.mxu0 0
        %442 = vmatpush1.bf16.msra.mxu0 0
        %443 = vmatprep.subr.bf16.mxu0 0
        %444 = vmatpush1.bf16.msra.mxu0 0
        %445 = vmatprep.subr.bf16.mxu0 0
        %446 = vmatpush1.bf16.msra.mxu0 0
        %447 = vmatprep.subr.bf16.mxu0 0
        %448 = vmatpush1.bf16.msra.mxu0 0
        %449 = vmatprep.subr.bf16.mxu0 0
        %450 = vmatpush1.bf16.msra.mxu0 0
        %451 = vmatprep.subr.bf16.mxu0 0
        %452 = vmatpush1.bf16.msra.mxu0 0
        %453 = vmatprep.subr.bf16.mxu0 0
        %454 = vmatpush1.bf16.msra.mxu0 0
        %455 = vmatprep.mubr.bf16.mxu0 0
        %456 = vmatmul.mubr.bf16.gmra.mrb[0].mxu0 %v363
        %v457 = vpop.f32.mrb[0].mxu0
        %v458 = vadd.f32 0.0, %v457
        %v459 = vpop.f32.mrb[0].mxu0
        %v460 = vpop.f32.mrb[0].mxu0
        %v461 = vadd.f32 0.0, %v460
        %v462 = vpop.f32.mrb[0].mxu0
        %463 = vmatprep.mubr.bf16.mxu0 0
        %464 = vmatmul.mubr.bf16.gmra.mrb[0].mxu0 %v366
        %v465 = vpop.f32.mrb[0].mxu0
        %v466 = vadd.f32 0.0, %v465
        %v467 = vpop.f32.mrb[0].mxu0
        %v468 = vpop.f32.mrb[0].mxu0
        %v469 = vadd.f32 0.0, %v468
        %v470 = vpop.f32.mrb[0].mxu0
        %471 = vmatprep.mubr.bf16.mxu0 0
        %472 = vmatmul.mubr.bf16.gmra.mrb[0].mxu0 %v369
        %v473 = vpop.f32.mrb[0].mxu0
        %v474 = vadd.f32 0.0, %v473
        %v475 = vpop.f32.mrb[0].mxu0
        %v476 = vpop.f32.mrb[0].mxu0
        %v477 = vadd.f32 0.0, %v476
        %v478 = vpop.f32.mrb[0].mxu0
        %479 = vmatprep.mubr.bf16.mxu0 0
        %480 = vmatmul.mubr.bf16.gmra.mrb[0].mxu0 %v372
        %v481 = vpop.f32.mrb[0].mxu0
        %v482 = vadd.f32 0.0, %v481
        %v483 = vpop.f32.mrb[0].mxu0
        %v484 = vpop.f32.mrb[0].mxu0
        %v485 = vadd.f32 0.0, %v484
        %v486 = vpop.f32.mrb[0].mxu0
        %487 = vmatprep.mubr.bf16.mxu0 0
        %488 = vmatmul.mubr.bf16.gmra.mrb[0].mxu0 %v375
        %v489 = vpop.f32.mrb[0].mxu0
        %v490 = vadd.f32 0.0, %v489
        %v491 = vpop.f32.mrb[0].mxu0
        %v492 = vpop.f32.mrb[0].mxu0
        %v493 = vadd.f32 0.0, %v492
        %v494 = vpop.f32.mrb[0].mxu0
        %495 = vmatprep.mubr.bf16.mxu0 0
        %496 = vmatmul.mubr.bf16.gmra.mrb[0].mxu0 %v378
        %v497 = vpop.f32.mrb[0].mxu0
        %v498 = vadd.f32 0.0, %v497
        %v499 = vpop.f32.mrb[0].mxu0
        %v500 = vpop.f32.mrb[0].mxu0
        %v501 = vadd.f32 0.0, %v500
        %v502 = vpop.f32.mrb[0].mxu0
        %503 = vmatprep.mubr.bf16.mxu0 0
        %504 = vmatmul.mubr.bf16.gmra.mrb[0].mxu0 %v381
        %v505 = vpop.f32.mrb[0].mxu0
        %v506 = vadd.f32 0.0, %v505
        %v507 = vpop.f32.mrb[0].mxu0
        %v508 = vpop.f32.mrb[0].mxu0
        %v509 = vadd.f32 0.0, %v508
        %v510 = vpop.f32.mrb[0].mxu0
        %511 = vmatprep.mubr.bf16.mxu0 0
        %512 = vmatmul.mubr.bf16.gmra.mrb[0].mxu0 %v384
        %v513 = vpop.f32.mrb[0].mxu0
        %v514 = vadd.f32 0.0, %v513
        %v515 = vpop.f32.mrb[0].mxu0
        %v516 = vpop.f32.mrb[0].mxu0
        %v517 = vadd.f32 0.0, %v516
        %v518 = vpop.f32.mrb[0].mxu0
        %519 = vmatprep.mubr.bf16.mxu0 0
        %520 = vmatmul.mubr.bf16.gmra.mrb[0].mxu0 %v387
        %v521 = vpop.f32.mrb[0].mxu0
        %v522 = vadd.f32 0.0, %v521
        %v523 = vpop.f32.mrb[0].mxu0
        %v524 = vpop.f32.mrb[0].mxu0
        %v525 = vadd.f32 0.0, %v524
        %v526 = vpop.f32.mrb[0].mxu0
        %527 = vmatprep.mubr.bf16.mxu0 0
        %528 = vmatmul.mubr.bf16.gmra.mrb[0].mxu0 %v390
        %v529 = vpop.f32.mrb[0].mxu0
        %v530 = vadd.f32 0.0, %v529
        %v531 = vpop.f32.mrb[0].mxu0
        %v532 = vpop.f32.mrb[0].mxu0
        %v533 = vadd.f32 0.0, %v532
        %v534 = vpop.f32.mrb[0].mxu0
        %535 = vmatprep.mubr.bf16.mxu0 0
        %536 = vmatmul.mubr.bf16.gmra.mrb[0].mxu0 %v393
        %v537 = vpop.f32.mrb[0].mxu0
        %v538 = vadd.f32 0.0, %v537
        %v539 = vpop.f32.mrb[0].mxu0
        %v540 = vpop.f32.mrb[0].mxu0
        %v541 = vadd.f32 0.0, %v540
        %v542 = vpop.f32.mrb[0].mxu0
        %543 = vmatprep.mubr.bf16.mxu0 0
        %544 = vmatmul.mubr.bf16.gmra.mrb[0].mxu0 %v396
        %v545 = vpop.f32.mrb[0].mxu0
        %v546 = vadd.f32 0.0, %v545
        %v547 = vpop.f32.mrb[0].mxu0
        %v548 = vpop.f32.mrb[0].mxu0
        %v549 = vadd.f32 0.0, %v548
        %v550 = vpop.f32.mrb[0].mxu0
        %551 = vmatprep.mubr.bf16.mxu0 0
        %552 = vmatmul.mubr.bf16.gmra.mrb[0].mxu0 %v399
        %v553 = vpop.f32.mrb[0].mxu0
        %v554 = vadd.f32 0.0, %v553
        %v555 = vpop.f32.mrb[0].mxu0
        %v556 = vpop.f32.mrb[0].mxu0
        %v557 = vadd.f32 0.0, %v556
        %v558 = vpop.f32.mrb[0].mxu0
        %559 = vmatprep.mubr.bf16.mxu0 0
        %560 = vmatmul.mubr.bf16.gmra.mrb[0].mxu0 %v402
        %v561 = vpop.f32.mrb[0].mxu0
        %v562 = vadd.f32 0.0, %v561
        %v563 = vpop.f32.mrb[0].mxu0
        %v564 = vpop.f32.mrb[0].mxu0
        %v565 = vadd.f32 0.0, %v564
        %v566 = vpop.f32.mrb[0].mxu0
        %567 = vmatprep.mubr.bf16.mxu0 0
        %568 = vmatmul.mubr.bf16.gmra.mrb[0].mxu0 %v405
        %v569 = vpop.f32.mrb[0].mxu0
        %v570 = vadd.f32 0.0, %v569
        %v571 = vpop.f32.mrb[0].mxu0
        %v572 = vpop.f32.mrb[0].mxu0
        %v573 = vadd.f32 0.0, %v572
        %v574 = vpop.f32.mrb[0].mxu0
        %575 = vmatprep.mubr.bf16.mxu0 0
        %576 = vmatmul.mubr.bf16.gmra.mrb[0].mxu0 %v408
        %v577 = vpop.f32.mrb[0].mxu0
        %v578 = vadd.f32 0.0, %v577
        %v579 = vpop.f32.mrb[0].mxu0
        %v580 = vpop.f32.mrb[0].mxu0
        %v581 = vadd.f32 0.0, %v580
        %v582 = vpop.f32.mrb[0].mxu0
        %583 = vmatprep.mubr.bf16.mxu0 0
        %584 = vmatmul.mubr.bf16.gmra.mrb[0].mxu0 %v411
        %v585 = vpop.f32.mrb[0].mxu0
        %v586 = vadd.f32 0.0, %v585
        %v587 = vpop.f32.mrb[0].mxu0
        %v588 = vpop.f32.mrb[0].mxu0
        %v589 = vadd.f32 0.0, %v588
        %v590 = vpop.f32.mrb[0].mxu0
        %591 = vmatprep.mubr.bf16.mxu0 0
        %592 = vmatmul.mubr.bf16.gmra.mrb[0].mxu0 %v414
        %v593 = vpop.f32.mrb[0].mxu0
        %v594 = vadd.f32 0.0, %v593
        %v595 = vpop.f32.mrb[0].mxu0
        %v596 = vpop.f32.mrb[0].mxu0
        %v597 = vadd.f32 0.0, %v596
        %v598 = vpop.f32.mrb[0].mxu0
        %599 = vdwg.mxu0
        %v601 = vsel %vm361, %v286, 0
        %v604 = vsel %vm361, %v287, 0
        %v607 = vsel %vm361, %v288, 0
        %v610 = vsel %vm361, %v289, 0
        %v613 = vsel %vm361, %v290, 0
        %v616 = vsel %vm361, %v291, 0
        %v619 = vsel %vm361, %v292, 0
        %v622 = vsel %vm361, %v293, 0
        %v625 = vsel %vm361, %v294, 0
        %v628 = vsel %vm361, %v295, 0
        %v631 = vsel %vm361, %v296, 0
        %v634 = vsel %vm361, %v297, 0
        %v637 = vsel %vm361, %v298, 0
        %v640 = vsel %vm361, %v299, 0
        %v643 = vsel %vm361, %v300, 0
        %v646 = vsel %vm361, %v301, 0
        %v649 = vsel %vm361, %v302, 0
        %v652 = vsel %vm361, %v303, 0
        %v655 = vand.u32 %v304, %v419
        %657 = vmatprep.subr.bf16.mxu0 0
        %658 = vmatpush1.bf16.msra.mxu0 %v655
        %659 = vmatprep.subr.bf16.mxu0 0
        %660 = vmatpush1.bf16.msra.mxu0 0
        %661 = vmatprep.subr.bf16.mxu0 0
        %662 = vmatpush1.bf16.msra.mxu0 0
        %663 = vmatprep.subr.bf16.mxu0 0
        %664 = vmatpush1.bf16.msra.mxu0 0
        %665 = vmatprep.subr.bf16.mxu0 0
        %666 = vmatpush1.bf16.msra.mxu0 0
        %667 = vmatprep.subr.bf16.mxu0 0
        %668 = vmatpush1.bf16.msra.mxu0 0
        %669 = vmatprep.subr.bf16.mxu0 0
        %670 = vmatpush1.bf16.msra.mxu0 0
        %671 = vmatprep.subr.bf16.mxu0 0
        %672 = vmatpush1.bf16.msra.mxu0 0
        %673 = vmatprep.subr.bf16.mxu0 0
        %674 = vmatpush1.bf16.msra.mxu0 0
        %675 = vmatprep.subr.bf16.mxu0 0
        %676 = vmatpush1.bf16.msra.mxu0 0
        %677 = vmatprep.subr.bf16.mxu0 0
        %678 = vmatpush1.bf16.msra.mxu0 0
        %679 = vmatprep.subr.bf16.mxu0 0
        %680 = vmatpush1.bf16.msra.mxu0 0
        %681 = vmatprep.subr.bf16.mxu0 0
        %682 = vmatpush1.bf16.msra.mxu0 0
        %683 = vmatprep.subr.bf16.mxu0 0
        %684 = vmatpush1.bf16.msra.mxu0 0
        %685 = vmatprep.subr.bf16.mxu0 0
        %686 = vmatpush1.bf16.msra.mxu0 0
        %687 = vmatprep.subr.bf16.mxu0 0
        %688 = vmatpush1.bf16.msra.mxu0 0
        %689 = vmatprep.mubr.bf16.mxu0 0
        %690 = vmatmul.mubr.bf16.gmra.mrb[0].mxu0 %v601
        %v691 = vpop.f32.mrb[0].mxu0
        %v692 = vadd.f32 %v458, %v691
        %v693 = vpop.f32.mrb[0].mxu0
        %v694 = vpop.f32.mrb[0].mxu0
        %v695 = vadd.f32 %v461, %v694
        %v696 = vpop.f32.mrb[0].mxu0
        %697 = vmatprep.mubr.bf16.mxu0 0
        %698 = vmatmul.mubr.bf16.gmra.mrb[0].mxu0 %v604
        %v699 = vpop.f32.mrb[0].mxu0
        %v700 = vadd.f32 %v466, %v699
        %v701 = vpop.f32.mrb[0].mxu0
        %v702 = vpop.f32.mrb[0].mxu0
        %v703 = vadd.f32 %v469, %v702
        %v704 = vpop.f32.mrb[0].mxu0
        %705 = vmatprep.mubr.bf16.mxu0 0
        %706 = vmatmul.mubr.bf16.gmra.mrb[0].mxu0 %v607
        %v707 = vpop.f32.mrb[0].mxu0
        %v708 = vadd.f32 %v474, %v707
        %v709 = vpop.f32.mrb[0].mxu0
        %v710 = vpop.f32.mrb[0].mxu0
        %v711 = vadd.f32 %v477, %v710
        %v712 = vpop.f32.mrb[0].mxu0
        %713 = vmatprep.mubr.bf16.mxu0 0
        %714 = vmatmul.mubr.bf16.gmra.mrb[0].mxu0 %v610
        %v715 = vpop.f32.mrb[0].mxu0
        %v716 = vadd.f32 %v482, %v715
        %v717 = vpop.f32.mrb[0].mxu0
        %v718 = vpop.f32.mrb[0].mxu0
        %v719 = vadd.f32 %v485, %v718
        %v720 = vpop.f32.mrb[0].mxu0
        %721 = vmatprep.mubr.bf16.mxu0 0
        %722 = vmatmul.mubr.bf16.gmra.mrb[0].mxu0 %v613
        %v723 = vpop.f32.mrb[0].mxu0
        %v724 = vadd.f32 %v490, %v723
        %v725 = vpop.f32.mrb[0].mxu0
        %v726 = vpop.f32.mrb[0].mxu0
        %v727 = vadd.f32 %v493, %v726
        %v728 = vpop.f32.mrb[0].mxu0
        %729 = vmatprep.mubr.bf16.mxu0 0
        %730 = vmatmul.mubr.bf16.gmra.mrb[0].mxu0 %v616
        %v731 = vpop.f32.mrb[0].mxu0
        %v732 = vadd.f32 %v498, %v731
        %v733 = vpop.f32.mrb[0].mxu0
        %v734 = vpop.f32.mrb[0].mxu0
        %v735 = vadd.f32 %v501, %v734
        %v736 = vpop.f32.mrb[0].mxu0
        %737 = vmatprep.mubr.bf16.mxu0 0
        %738 = vmatmul.mubr.bf16.gmra.mrb[0].mxu0 %v619
        %v739 = vpop.f32.mrb[0].mxu0
        %v740 = vadd.f32 %v506, %v739
        %v741 = vpop.f32.mrb[0].mxu0
        %v742 = vpop.f32.mrb[0].mxu0
        %v743 = vadd.f32 %v509, %v742
        %v744 = vpop.f32.mrb[0].mxu0
        %745 = vmatprep.mubr.bf16.mxu0 0
        %746 = vmatmul.mubr.bf16.gmra.mrb[0].mxu0 %v622
        %v747 = vpop.f32.mrb[0].mxu0
        %v748 = vadd.f32 %v514, %v747
        %v749 = vpop.f32.mrb[0].mxu0
        %v750 = vpop.f32.mrb[0].mxu0
        %v751 = vadd.f32 %v517, %v750
        %v752 = vpop.f32.mrb[0].mxu0
        %753 = vmatprep.mubr.bf16.mxu0 0
        %754 = vmatmul.mubr.bf16.gmra.mrb[0].mxu0 %v625
        %v755 = vpop.f32.mrb[0].mxu0
        %v756 = vadd.f32 %v522, %v755
        %v757 = vpop.f32.mrb[0].mxu0
        %v758 = vpop.f32.mrb[0].mxu0
        %v759 = vadd.f32 %v525, %v758
        %v760 = vpop.f32.mrb[0].mxu0
        %761 = vmatprep.mubr.bf16.mxu0 0
        %762 = vmatmul.mubr.bf16.gmra.mrb[0].mxu0 %v628
        %v763 = vpop.f32.mrb[0].mxu0
        %v764 = vadd.f32 %v530, %v763
        %v765 = vpop.f32.mrb[0].mxu0
        %v766 = vpop.f32.mrb[0].mxu0
        %v767 = vadd.f32 %v533, %v766
        %v768 = vpop.f32.mrb[0].mxu0
        %769 = vmatprep.mubr.bf16.mxu0 0
        %770 = vmatmul.mubr.bf16.gmra.mrb[0].mxu0 %v631
        %v771 = vpop.f32.mrb[0].mxu0
        %v772 = vadd.f32 %v538, %v771
        %v773 = vpop.f32.mrb[0].mxu0
        %v774 = vpop.f32.mrb[0].mxu0
        %v775 = vadd.f32 %v541, %v774
        %v776 = vpop.f32.mrb[0].mxu0
        %777 = vmatprep.mubr.bf16.mxu0 0
        %778 = vmatmul.mubr.bf16.gmra.mrb[0].mxu0 %v634
        %v779 = vpop.f32.mrb[0].mxu0
        %v780 = vadd.f32 %v546, %v779
        %v781 = vpop.f32.mrb[0].mxu0
        %v782 = vpop.f32.mrb[0].mxu0
        %v783 = vadd.f32 %v549, %v782
        %v784 = vpop.f32.mrb[0].mxu0
        %785 = vmatprep.mubr.bf16.mxu0 0
        %786 = vmatmul.mubr.bf16.gmra.mrb[0].mxu0 %v637
        %v787 = vpop.f32.mrb[0].mxu0
        %v788 = vadd.f32 %v554, %v787
        %v789 = vpop.f32.mrb[0].mxu0
        %v790 = vpop.f32.mrb[0].mxu0
        %v791 = vadd.f32 %v557, %v790
        %v792 = vpop.f32.mrb[0].mxu0
        %793 = vmatprep.mubr.bf16.mxu0 0
        %794 = vmatmul.mubr.bf16.gmra.mrb[0].mxu0 %v640
        %v795 = vpop.f32.mrb[0].mxu0
        %v796 = vadd.f32 %v562, %v795
        %v797 = vpop.f32.mrb[0].mxu0
        %v798 = vpop.f32.mrb[0].mxu0
        %v799 = vadd.f32 %v565, %v798
        %v800 = vpop.f32.mrb[0].mxu0
        %801 = vmatprep.mubr.bf16.mxu0 0
        %802 = vmatmul.mubr.bf16.gmra.mrb[0].mxu0 %v643
        %v803 = vpop.f32.mrb[0].mxu0
        %v804 = vadd.f32 %v570, %v803
        %v805 = vpop.f32.mrb[0].mxu0
        %v806 = vpop.f32.mrb[0].mxu0
        %v807 = vadd.f32 %v573, %v806
        %v808 = vpop.f32.mrb[0].mxu0
        %809 = vmatprep.mubr.bf16.mxu0 0
        %810 = vmatmul.mubr.bf16.gmra.mrb[0].mxu0 %v646
        %v811 = vpop.f32.mrb[0].mxu0
        %v812 = vadd.f32 %v578, %v811
        %v813 = vpop.f32.mrb[0].mxu0
        %v814 = vpop.f32.mrb[0].mxu0
        %v815 = vadd.f32 %v581, %v814
        %v816 = vpop.f32.mrb[0].mxu0
        %817 = vmatprep.mubr.bf16.mxu0 0
        %818 = vmatmul.mubr.bf16.gmra.mrb[0].mxu0 %v649
        %v819 = vpop.f32.mrb[0].mxu0
        %v820 = vadd.f32 %v586, %v819
        %v821 = vpop.f32.mrb[0].mxu0
        %v822 = vpop.f32.mrb[0].mxu0
        %v823 = vadd.f32 %v589, %v822
        %v824 = vpop.f32.mrb[0].mxu0
        %825 = vmatprep.mubr.bf16.mxu0 0
        %826 = vmatmul.mubr.bf16.gmra.mrb[0].mxu0 %v652
        %v827 = vpop.f32.mrb[0].mxu0
        %v828 = vadd.f32 %v594, %v827
        %v829 = vpop.f32.mrb[0].mxu0
        %v830 = vpop.f32.mrb[0].mxu0
        %v831 = vadd.f32 %v597, %v830
        %v832 = vpop.f32.mrb[0].mxu0
        %833 = vdwg.mxu0
        %v834 = vld [vmem:[%s248 + $0x2] sm:$0xff]
        %v835 = vld [vmem:[%s248 + $0xa] sm:$0xff]
        %v836 = vld [vmem:[%s248 + $0x12] sm:$0xff]
        %v837 = vld [vmem:[%s248 + $0x1a] sm:$0xff]
        %v838 = vld [vmem:[%s248 + $0x22] sm:$0xff]
        %v839 = vld [vmem:[%s248 + $0x2a] sm:$0xff]
        %v840 = vld [vmem:[%s248 + $0x32] sm:$0xff]
        %v841 = vld [vmem:[%s248 + $0x3a] sm:$0xff]
        %v842 = vld [vmem:[%s248 + $0x42] sm:$0xff]
        %v843 = vld [vmem:[%s248 + $0x4a] sm:$0xff]
        %v844 = vld [vmem:[%s248 + $0x52] sm:$0xff]
        %v845 = vld [vmem:[%s248 + $0x5a] sm:$0xff]
        %v846 = vld [vmem:[%s248 + $0x62] sm:$0xff]
        %v847 = vld [vmem:[%s248 + $0x6a] sm:$0xff]
        %v848 = vld [vmem:[%s248 + $0x72] sm:$0xff]
        %v849 = vld [vmem:[%s248 + $0x7a] sm:$0xff]
        %v850 = vld [vmem:[%s248 + $0x82] sm:$0xff]
        %v851 = vld [vmem:[%s248 + $0x8a] sm:$0xff]
        %v852 = vld [vmem:[%s248 + $0x92] sm:$0xff]
        %v853 = vld [vmem:[%s248 + $0x9a] sm:$0xff]
        %v854 = vld [vmem:[%s248 + $0xa2] sm:$0xff]
        %v855 = vld [vmem:[%s248 + $0xaa] sm:$0xff]
        %v856 = vld [vmem:[%s248 + $0xb2] sm:$0xff]
        %v857 = vld [vmem:[%s248 + $0xba] sm:$0xff]
        %v858 = vld [vmem:[%s248 + $0xc2] sm:$0xff]
        %v859 = vld [vmem:[%s248 + $0xca] sm:$0xff]
        %v860 = vld [vmem:[%s248 + $0xd2] sm:$0xff]
        %v861 = vld [vmem:[%s248 + $0xda] sm:$0xff]
        %v862 = vld [vmem:[%s248 + $0xe2] sm:$0xff]
        %v863 = vld [vmem:[%s248 + $0xea] sm:$0xff]
        %v864 = vld [vmem:[%s248 + $0xf2] sm:$0xff]
        %v865 = vld [vmem:[%s248 + $0xfa] sm:$0xff]
        %v866 = vld [vmem:[%s248 + $0x102] sm:$0xff]
        %v867 = vld [vmem:[%s248 + $0x10a] sm:$0xff]
        %v868 = vld [vmem:[%s248 + $0x112] sm:$0xff]
        %v869 = vld [vmem:[%s248 + $0x11a] sm:$0xff]
        %v870 = vpack.c.bf16 %v835, %v834
        %v871 = vpack.c.bf16 %v837, %v836
        %v872 = vpack.c.bf16 %v839, %v838
        %v873 = vpack.c.bf16 %v841, %v840
        %v874 = vpack.c.bf16 %v843, %v842
        %v875 = vpack.c.bf16 %v845, %v844
        %v876 = vpack.c.bf16 %v847, %v846
        %v877 = vpack.c.bf16 %v849, %v848
        %v878 = vpack.c.bf16 %v851, %v850
        %v879 = vpack.c.bf16 %v853, %v852
        %v880 = vpack.c.bf16 %v855, %v854
        %v881 = vpack.c.bf16 %v857, %v856
        %v882 = vpack.c.bf16 %v859, %v858
        %v883 = vpack.c.bf16 %v861, %v860
        %v884 = vpack.c.bf16 %v863, %v862
        %v885 = vpack.c.bf16 %v865, %v864
        %v886 = vpack.c.bf16 %v867, %v866
        %v887 = vpack.c.bf16 %v869, %v868
        %s888 = scalar_lea.vmem %s1, 4
        %v889 = vld [vmem:[%s888] sm:$0x3]
        %v891 = vsel %vm361, %v870, 0
        %v894 = vsel %vm361, %v871, 0
        %v897 = vsel %vm361, %v872, 0
        %v900 = vsel %vm361, %v873, 0
        %v903 = vsel %vm361, %v874, 0
        %v906 = vsel %vm361, %v875, 0
        %v909 = vsel %vm361, %v876, 0
        %v912 = vsel %vm361, %v877, 0
        %v915 = vsel %vm361, %v878, 0
        %v918 = vsel %vm361, %v879, 0
        %v921 = vsel %vm361, %v880, 0
        %v924 = vsel %vm361, %v881, 0
        %v927 = vsel %vm361, %v882, 0
        %v930 = vsel %vm361, %v883, 0
        %v933 = vsel %vm361, %v884, 0
        %v936 = vsel %vm361, %v885, 0
        %v939 = vsel %vm361, %v886, 0
        %v942 = vsel %vm361, %v887, 0
        %v945 = vand.u32 %v889, %v419
        %947 = vmatprep.subr.bf16.mxu0 0
        %948 = vmatpush1.bf16.msra.mxu0 %v945
        %949 = vmatprep.subr.bf16.mxu0 0
        %950 = vmatpush1.bf16.msra.mxu0 0
        %951 = vmatprep.subr.bf16.mxu0 0
        %952 = vmatpush1.bf16.msra.mxu0 0
        %953 = vmatprep.subr.bf16.mxu0 0
        %954 = vmatpush1.bf16.msra.mxu0 0
        %955 = vmatprep.subr.bf16.mxu0 0
        %956 = vmatpush1.bf16.msra.mxu0 0
        %957 = vmatprep.subr.bf16.mxu0 0
        %958 = vmatpush1.bf16.msra.mxu0 0
        %959 = vmatprep.subr.bf16.mxu0 0
        %960 = vmatpush1.bf16.msra.mxu0 0
        %961 = vmatprep.subr.bf16.mxu0 0
        %962 = vmatpush1.bf16.msra.mxu0 0
        %963 = vmatprep.subr.bf16.mxu0 0
        %964 = vmatpush1.bf16.msra.mxu0 0
        %965 = vmatprep.subr.bf16.mxu0 0
        %966 = vmatpush1.bf16.msra.mxu0 0
        %967 = vmatprep.subr.bf16.mxu0 0
        %968 = vmatpush1.bf16.msra.mxu0 0
        %969 = vmatprep.subr.bf16.mxu0 0
        %970 = vmatpush1.bf16.msra.mxu0 0
        %971 = vmatprep.subr.bf16.mxu0 0
        %972 = vmatpush1.bf16.msra.mxu0 0
        %973 = vmatprep.subr.bf16.mxu0 0
        %974 = vmatpush1.bf16.msra.mxu0 0
        %975 = vmatprep.subr.bf16.mxu0 0
        %976 = vmatpush1.bf16.msra.mxu0 0
        %977 = vmatprep.subr.bf16.mxu0 0
        %978 = vmatpush1.bf16.msra.mxu0 0
        %979 = vmatprep.mubr.bf16.mxu0 0
        %980 = vmatmul.mubr.bf16.gmra.mrb[0].mxu0 %v891
        %v981 = vpop.f32.mrb[0].mxu0
        %v982 = vadd.f32 0.0, %v981
        %v983 = vpop.f32.mrb[0].mxu0
        %v984 = vpop.f32.mrb[0].mxu0
        %v985 = vadd.f32 0.0, %v984
        %v986 = vpop.f32.mrb[0].mxu0
        %987 = vmatprep.mubr.bf16.mxu0 0
        %988 = vmatmul.mubr.bf16.gmra.mrb[0].mxu0 %v894
        %v989 = vpop.f32.mrb[0].mxu0
        %v990 = vadd.f32 0.0, %v989
        %v991 = vpop.f32.mrb[0].mxu0
        %v992 = vpop.f32.mrb[0].mxu0
        %v993 = vadd.f32 0.0, %v992
        %v994 = vpop.f32.mrb[0].mxu0
        %995 = vmatprep.mubr.bf16.mxu0 0
        %996 = vmatmul.mubr.bf16.gmra.mrb[0].mxu0 %v897
        %v997 = vpop.f32.mrb[0].mxu0
        %v998 = vadd.f32 0.0, %v997
        %v999 = vpop.f32.mrb[0].mxu0
        %v1000 = vpop.f32.mrb[0].mxu0
        %v1001 = vadd.f32 0.0, %v1000
        %v1002 = vpop.f32.mrb[0].mxu0
        %1003 = vmatprep.mubr.bf16.mxu0 0
        %1004 = vmatmul.mubr.bf16.gmra.mrb[0].mxu0 %v900
        %v1005 = vpop.f32.mrb[0].mxu0
        %v1006 = vadd.f32 0.0, %v1005
        %v1007 = vpop.f32.mrb[0].mxu0
        %v1008 = vpop.f32.mrb[0].mxu0
        %v1009 = vadd.f32 0.0, %v1008
        %v1010 = vpop.f32.mrb[0].mxu0
        %1011 = vmatprep.mubr.bf16.mxu0 0
        %1012 = vmatmul.mubr.bf16.gmra.mrb[0].mxu0 %v903
        %v1013 = vpop.f32.mrb[0].mxu0
        %v1014 = vadd.f32 0.0, %v1013
        %v1015 = vpop.f32.mrb[0].mxu0
        %v1016 = vpop.f32.mrb[0].mxu0
        %v1017 = vadd.f32 0.0, %v1016
        %v1018 = vpop.f32.mrb[0].mxu0
        %1019 = vmatprep.mubr.bf16.mxu0 0
        %1020 = vmatmul.mubr.bf16.gmra.mrb[0].mxu0 %v906
        %v1021 = vpop.f32.mrb[0].mxu0
        %v1022 = vadd.f32 0.0, %v1021
        %v1023 = vpop.f32.mrb[0].mxu0
        %v1024 = vpop.f32.mrb[0].mxu0
        %v1025 = vadd.f32 0.0, %v1024
        %v1026 = vpop.f32.mrb[0].mxu0
        %1027 = vmatprep.mubr.bf16.mxu0 0
        %1028 = vmatmul.mubr.bf16.gmra.mrb[0].mxu0 %v909
        %v1029 = vpop.f32.mrb[0].mxu0
        %v1030 = vadd.f32 0.0, %v1029
        %v1031 = vpop.f32.mrb[0].mxu0
        %v1032 = vpop.f32.mrb[0].mxu0
        %v1033 = vadd.f32 0.0, %v1032
        %v1034 = vpop.f32.mrb[0].mxu0
        %1035 = vmatprep.mubr.bf16.mxu0 0
        %1036 = vmatmul.mubr.bf16.gmra.mrb[0].mxu0 %v912
        %v1037 = vpop.f32.mrb[0].mxu0
        %v1038 = vadd.f32 0.0, %v1037
        %v1039 = vpop.f32.mrb[0].mxu0
        %v1040 = vpop.f32.mrb[0].mxu0
        %v1041 = vadd.f32 0.0, %v1040
        %v1042 = vpop.f32.mrb[0].mxu0
        %1043 = vmatprep.mubr.bf16.mxu0 0
        %1044 = vmatmul.mubr.bf16.gmra.mrb[0].mxu0 %v915
        %v1045 = vpop.f32.mrb[0].mxu0
        %v1046 = vadd.f32 0.0, %v1045
        %v1047 = vpop.f32.mrb[0].mxu0
        %v1048 = vpop.f32.mrb[0].mxu0
        %v1049 = vadd.f32 0.0, %v1048
        %v1050 = vpop.f32.mrb[0].mxu0
        %1051 = vmatprep.mubr.bf16.mxu0 0
        %1052 = vmatmul.mubr.bf16.gmra.mrb[0].mxu0 %v918
        %v1053 = vpop.f32.mrb[0].mxu0
        %v1054 = vadd.f32 0.0, %v1053
        %v1055 = vpop.f32.mrb[0].mxu0
        %v1056 = vpop.f32.mrb[0].mxu0
        %v1057 = vadd.f32 0.0, %v1056
        %v1058 = vpop.f32.mrb[0].mxu0
        %1059 = vmatprep.mubr.bf16.mxu0 0
        %1060 = vmatmul.mubr.bf16.gmra.mrb[0].mxu0 %v921
        %v1061 = vpop.f32.mrb[0].mxu0
        %v1062 = vadd.f32 0.0, %v1061
        %v1063 = vpop.f32.mrb[0].mxu0
        %v1064 = vpop.f32.mrb[0].mxu0
        %v1065 = vadd.f32 0.0, %v1064
        %v1066 = vpop.f32.mrb[0].mxu0
        %1067 = vmatprep.mubr.bf16.mxu0 0
        %1068 = vmatmul.mubr.bf16.gmra.mrb[0].mxu0 %v924
        %v1069 = vpop.f32.mrb[0].mxu0
        %v1070 = vadd.f32 0.0, %v1069
        %v1071 = vpop.f32.mrb[0].mxu0
        %v1072 = vpop.f32.mrb[0].mxu0
        %v1073 = vadd.f32 0.0, %v1072
        %v1074 = vpop.f32.mrb[0].mxu0
        %1075 = vmatprep.mubr.bf16.mxu0 0
        %1076 = vmatmul.mubr.bf16.gmra.mrb[0].mxu0 %v927
        %v1077 = vpop.f32.mrb[0].mxu0
        %v1078 = vadd.f32 0.0, %v1077
        %v1079 = vpop.f32.mrb[0].mxu0
        %v1080 = vpop.f32.mrb[0].mxu0
        %v1081 = vadd.f32 0.0, %v1080
        %v1082 = vpop.f32.mrb[0].mxu0
        %1083 = vmatprep.mubr.bf16.mxu0 0
        %1084 = vmatmul.mubr.bf16.gmra.mrb[0].mxu0 %v930
        %v1085 = vpop.f32.mrb[0].mxu0
        %v1086 = vadd.f32 0.0, %v1085
        %v1087 = vpop.f32.mrb[0].mxu0
        %v1088 = vpop.f32.mrb[0].mxu0
        %v1089 = vadd.f32 0.0, %v1088
        %v1090 = vpop.f32.mrb[0].mxu0
        %1091 = vmatprep.mubr.bf16.mxu0 0
        %1092 = vmatmul.mubr.bf16.gmra.mrb[0].mxu0 %v933
        %v1093 = vpop.f32.mrb[0].mxu0
        %v1094 = vadd.f32 0.0, %v1093
        %v1095 = vpop.f32.mrb[0].mxu0
        %v1096 = vpop.f32.mrb[0].mxu0
        %v1097 = vadd.f32 0.0, %v1096
        %v1098 = vpop.f32.mrb[0].mxu0
        %1099 = vmatprep.mubr.bf16.mxu0 0
        %1100 = vmatmul.mubr.bf16.gmra.mrb[0].mxu0 %v936
        %v1101 = vpop.f32.mrb[0].mxu0
        %v1102 = vadd.f32 0.0, %v1101
        %v1103 = vpop.f32.mrb[0].mxu0
        %v1104 = vpop.f32.mrb[0].mxu0
        %v1105 = vadd.f32 0.0, %v1104
        %v1106 = vpop.f32.mrb[0].mxu0
        %1107 = vmatprep.mubr.bf16.mxu0 0
        %1108 = vmatmul.mubr.bf16.gmra.mrb[0].mxu0 %v939
        %v1109 = vpop.f32.mrb[0].mxu0
        %v1110 = vadd.f32 0.0, %v1109
        %v1111 = vpop.f32.mrb[0].mxu0
        %v1112 = vpop.f32.mrb[0].mxu0
        %v1113 = vadd.f32 0.0, %v1112
        %v1114 = vpop.f32.mrb[0].mxu0
        %1115 = vmatprep.mubr.bf16.mxu0 0
        %1116 = vmatmul.mubr.bf16.gmra.mrb[0].mxu0 %v942
        %v1117 = vpop.f32.mrb[0].mxu0
        %v1118 = vadd.f32 0.0, %v1117
        %v1119 = vpop.f32.mrb[0].mxu0
        %v1120 = vpop.f32.mrb[0].mxu0
        %v1121 = vadd.f32 0.0, %v1120
        %v1122 = vpop.f32.mrb[0].mxu0
        %1123 = vdwg.mxu0
        %v1124 = vadd.f32 %v692, %v982
        %v1125 = vadd.f32 %v695, %v985
        %v1126 = vadd.f32 %v700, %v990
        %v1127 = vadd.f32 %v703, %v993
        %v1128 = vadd.f32 %v708, %v998
        %v1129 = vadd.f32 %v711, %v1001
        %v1130 = vadd.f32 %v716, %v1006
        %v1131 = vadd.f32 %v719, %v1009
        %v1132 = vadd.f32 %v724, %v1014
        %v1133 = vadd.f32 %v727, %v1017
        %v1134 = vadd.f32 %v732, %v1022
        %v1135 = vadd.f32 %v735, %v1025
        %v1136 = vadd.f32 %v740, %v1030
        %v1137 = vadd.f32 %v743, %v1033
        %v1138 = vadd.f32 %v748, %v1038
        %v1139 = vadd.f32 %v751, %v1041
        %v1140 = vadd.f32 %v756, %v1046
        %v1141 = vadd.f32 %v759, %v1049
        %v1142 = vadd.f32 %v764, %v1054
        %v1143 = vadd.f32 %v767, %v1057
        %v1144 = vadd.f32 %v772, %v1062
        %v1145 = vadd.f32 %v775, %v1065
        %v1146 = vadd.f32 %v780, %v1070
        %v1147 = vadd.f32 %v783, %v1073
        %v1148 = vadd.f32 %v788, %v1078
        %v1149 = vadd.f32 %v791, %v1081
        %v1150 = vadd.f32 %v796, %v1086
        %v1151 = vadd.f32 %v799, %v1089
        %v1152 = vadd.f32 %v804, %v1094
        %v1153 = vadd.f32 %v807, %v1097
        %v1154 = vadd.f32 %v812, %v1102
        %v1155 = vadd.f32 %v815, %v1105
        %v1156 = vadd.f32 %v820, %v1110
        %v1157 = vadd.f32 %v823, %v1113
        %v1158 = vadd.f32 %v828, %v1118
        %v1159 = vadd.f32 %v831, %v1121
        %v1160 = vld [vmem:[%s248 + $0x12] sm:$0xff]
        %v1161 = vld [vmem:[%s248 + $0x1a] sm:$0xff]
        %v1162 = vld [vmem:[%s248 + $0x22] sm:$0xff]
        %v1163 = vld [vmem:[%s248 + $0x2a] sm:$0xff]
        %v1164 = vld [vmem:[%s248 + $0x32] sm:$0xff]
        %v1165 = vld [vmem:[%s248 + $0x3a] sm:$0xff]
        %v1166 = vld [vmem:[%s248 + $0x42] sm:$0xff]
        %v1167 = vld [vmem:[%s248 + $0x4a] sm:$0xff]
        %v1168 = vld [vmem:[%s248 + $0x52] sm:$0xff]
        %v1169 = vld [vmem:[%s248 + $0x5a] sm:$0xff]
        %v1170 = vld [vmem:[%s248 + $0x62] sm:$0xff]
        %v1171 = vld [vmem:[%s248 + $0x6a] sm:$0xff]
        %v1172 = vld [vmem:[%s248 + $0x72] sm:$0xff]
        %v1173 = vld [vmem:[%s248 + $0x7a] sm:$0xff]
        %v1174 = vld [vmem:[%s248 + $0x82] sm:$0xff]
        %v1175 = vld [vmem:[%s248 + $0x8a] sm:$0xff]
        %v1176 = vld [vmem:[%s248 + $0x92] sm:$0xff]
        %v1177 = vld [vmem:[%s248 + $0x9a] sm:$0xff]
        %v1178 = vld [vmem:[%s248 + $0xa2] sm:$0xff]
        %v1179 = vld [vmem:[%s248 + $0xaa] sm:$0xff]
        %v1180 = vld [vmem:[%s248 + $0xb2] sm:$0xff]
        %v1181 = vld [vmem:[%s248 + $0xba] sm:$0xff]
        %v1182 = vld [vmem:[%s248 + $0xc2] sm:$0xff]
        %v1183 = vld [vmem:[%s248 + $0xca] sm:$0xff]
        %v1184 = vld [vmem:[%s248 + $0xd2] sm:$0xff]
        %v1185 = vld [vmem:[%s248 + $0xda] sm:$0xff]
        %v1186 = vld [vmem:[%s248 + $0xe2] sm:$0xff]
        %v1187 = vld [vmem:[%s248 + $0xea] sm:$0xff]
        %v1188 = vld [vmem:[%s248 + $0xf2] sm:$0xff]
        %v1189 = vld [vmem:[%s248 + $0xfa] sm:$0xff]
        %v1190 = vld [vmem:[%s248 + $0x102] sm:$0xff]
        %v1191 = vld [vmem:[%s248 + $0x10a] sm:$0xff]
        %v1192 = vld [vmem:[%s248 + $0x112] sm:$0xff]
        %v1193 = vld [vmem:[%s248 + $0x11a] sm:$0xff]
        %v1194 = vld [vmem:[%s248 + $0x122] sm:$0xff]
        %v1195 = vld [vmem:[%s248 + $0x12a] sm:$0xff]
        %v1196 = vpack.c.bf16 %v1161, %v1160
        %v1197 = vpack.c.bf16 %v1163, %v1162
        %v1198 = vpack.c.bf16 %v1165, %v1164
        %v1199 = vpack.c.bf16 %v1167, %v1166
        %v1200 = vpack.c.bf16 %v1169, %v1168
        %v1201 = vpack.c.bf16 %v1171, %v1170
        %v1202 = vpack.c.bf16 %v1173, %v1172
        %v1203 = vpack.c.bf16 %v1175, %v1174
        %v1204 = vpack.c.bf16 %v1177, %v1176
        %v1205 = vpack.c.bf16 %v1179, %v1178
        %v1206 = vpack.c.bf16 %v1181, %v1180
        %v1207 = vpack.c.bf16 %v1183, %v1182
        %v1208 = vpack.c.bf16 %v1185, %v1184
        %v1209 = vpack.c.bf16 %v1187, %v1186
        %v1210 = vpack.c.bf16 %v1189, %v1188
        %v1211 = vpack.c.bf16 %v1191, %v1190
        %v1212 = vpack.c.bf16 %v1193, %v1192
        %v1213 = vpack.c.bf16 %v1195, %v1194
        %s1214 = scalar_lea.vmem %s1, 6
        %v1215 = vld [vmem:[%s1214] sm:$0x3]
        %v1217 = vsel %vm361, %v1196, 0
        %v1220 = vsel %vm361, %v1197, 0
        %v1223 = vsel %vm361, %v1198, 0
        %v1226 = vsel %vm361, %v1199, 0
        %v1229 = vsel %vm361, %v1200, 0
        %v1232 = vsel %vm361, %v1201, 0
        %v1235 = vsel %vm361, %v1202, 0
        %v1238 = vsel %vm361, %v1203, 0
        %v1241 = vsel %vm361, %v1204, 0
        %v1244 = vsel %vm361, %v1205, 0
        %v1247 = vsel %vm361, %v1206, 0
        %v1250 = vsel %vm361, %v1207, 0
        %v1253 = vsel %vm361, %v1208, 0
        %v1256 = vsel %vm361, %v1209, 0
        %v1259 = vsel %vm361, %v1210, 0
        %v1262 = vsel %vm361, %v1211, 0
        %v1265 = vsel %vm361, %v1212, 0
        %v1268 = vsel %vm361, %v1213, 0
        %v1271 = vand.u32 %v1215, %v419
        %1273 = vmatprep.subr.bf16.mxu0 0
        %1274 = vmatpush1.bf16.msra.mxu0 %v1271
        %1275 = vmatprep.subr.bf16.mxu0 0
        %1276 = vmatpush1.bf16.msra.mxu0 0
        %1277 = vmatprep.subr.bf16.mxu0 0
        %1278 = vmatpush1.bf16.msra.mxu0 0
        %1279 = vmatprep.subr.bf16.mxu0 0
        %1280 = vmatpush1.bf16.msra.mxu0 0
        %1281 = vmatprep.subr.bf16.mxu0 0
        %1282 = vmatpush1.bf16.msra.mxu0 0
        %1283 = vmatprep.subr.bf16.mxu0 0
        %1284 = vmatpush1.bf16.msra.mxu0 0
        %1285 = vmatprep.subr.bf16.mxu0 0
        %1286 = vmatpush1.bf16.msra.mxu0 0
        %1287 = vmatprep.subr.bf16.mxu0 0
        %1288 = vmatpush1.bf16.msra.mxu0 0
        %1289 = vmatprep.subr.bf16.mxu0 0
        %1290 = vmatpush1.bf16.msra.mxu0 0
        %1291 = vmatprep.subr.bf16.mxu0 0
        %1292 = vmatpush1.bf16.msra.mxu0 0
        %1293 = vmatprep.subr.bf16.mxu0 0
        %1294 = vmatpush1.bf16.msra.mxu0 0
        %1295 = vmatprep.subr.bf16.mxu0 0
        %1296 = vmatpush1.bf16.msra.mxu0 0
        %1297 = vmatprep.subr.bf16.mxu0 0
        %1298 = vmatpush1.bf16.msra.mxu0 0
        %1299 = vmatprep.subr.bf16.mxu0 0
        %1300 = vmatpush1.bf16.msra.mxu0 0
        %1301 = vmatprep.subr.bf16.mxu0 0
        %1302 = vmatpush1.bf16.msra.mxu0 0
        %1303 = vmatprep.subr.bf16.mxu0 0
        %1304 = vmatpush1.bf16.msra.mxu0 0
        %1305 = vmatprep.mubr.bf16.mxu0 0
        %1306 = vmatmul.mubr.bf16.gmra.mrb[0].mxu0 %v1217
        %v1307 = vpop.f32.mrb[0].mxu0
        %v1308 = vadd.f32 0.0, %v1307
        %v1309 = vpop.f32.mrb[0].mxu0
        %v1310 = vpop.f32.mrb[0].mxu0
        %v1311 = vadd.f32 0.0, %v1310
        %v1312 = vpop.f32.mrb[0].mxu0
        %1313 = vmatprep.mubr.bf16.mxu0 0
        %1314 = vmatmul.mubr.bf16.gmra.mrb[0].mxu0 %v1220
        %v1315 = vpop.f32.mrb[0].mxu0
        %v1316 = vadd.f32 0.0, %v1315
        %v1317 = vpop.f32.mrb[0].mxu0
        %v1318 = vpop.f32.mrb[0].mxu0
        %v1319 = vadd.f32 0.0, %v1318
        %v1320 = vpop.f32.mrb[0].mxu0
        %1321 = vmatprep.mubr.bf16.mxu0 0
        %1322 = vmatmul.mubr.bf16.gmra.mrb[0].mxu0 %v1223
        %v1323 = vpop.f32.mrb[0].mxu0
        %v1324 = vadd.f32 0.0, %v1323
        %v1325 = vpop.f32.mrb[0].mxu0
        %v1326 = vpop.f32.mrb[0].mxu0
        %v1327 = vadd.f32 0.0, %v1326
        %v1328 = vpop.f32.mrb[0].mxu0
        %1329 = vmatprep.mubr.bf16.mxu0 0
        %1330 = vmatmul.mubr.bf16.gmra.mrb[0].mxu0 %v1226
        %v1331 = vpop.f32.mrb[0].mxu0
        %v1332 = vadd.f32 0.0, %v1331
        %v1333 = vpop.f32.mrb[0].mxu0
        %v1334 = vpop.f32.mrb[0].mxu0
        %v1335 = vadd.f32 0.0, %v1334
        %v1336 = vpop.f32.mrb[0].mxu0
        %1337 = vmatprep.mubr.bf16.mxu0 0
        %1338 = vmatmul.mubr.bf16.gmra.mrb[0].mxu0 %v1229
        %v1339 = vpop.f32.mrb[0].mxu0
        %v1340 = vadd.f32 0.0, %v1339
        %v1341 = vpop.f32.mrb[0].mxu0
        %v1342 = vpop.f32.mrb[0].mxu0
        %v1343 = vadd.f32 0.0, %v1342
        %v1344 = vpop.f32.mrb[0].mxu0
        %1345 = vmatprep.mubr.bf16.mxu0 0
        %1346 = vmatmul.mubr.bf16.gmra.mrb[0].mxu0 %v1232
        %v1347 = vpop.f32.mrb[0].mxu0
        %v1348 = vadd.f32 0.0, %v1347
        %v1349 = vpop.f32.mrb[0].mxu0
        %v1350 = vpop.f32.mrb[0].mxu0
        %v1351 = vadd.f32 0.0, %v1350
        %v1352 = vpop.f32.mrb[0].mxu0
        %1353 = vmatprep.mubr.bf16.mxu0 0
        %1354 = vmatmul.mubr.bf16.gmra.mrb[0].mxu0 %v1235
        %v1355 = vpop.f32.mrb[0].mxu0
        %v1356 = vadd.f32 0.0, %v1355
        %v1357 = vpop.f32.mrb[0].mxu0
        %v1358 = vpop.f32.mrb[0].mxu0
        %v1359 = vadd.f32 0.0, %v1358
        %v1360 = vpop.f32.mrb[0].mxu0
        %1361 = vmatprep.mubr.bf16.mxu0 0
        %1362 = vmatmul.mubr.bf16.gmra.mrb[0].mxu0 %v1238
        %v1363 = vpop.f32.mrb[0].mxu0
        %v1364 = vadd.f32 0.0, %v1363
        %v1365 = vpop.f32.mrb[0].mxu0
        %v1366 = vpop.f32.mrb[0].mxu0
        %v1367 = vadd.f32 0.0, %v1366
        %v1368 = vpop.f32.mrb[0].mxu0
        %1369 = vmatprep.mubr.bf16.mxu0 0
        %1370 = vmatmul.mubr.bf16.gmra.mrb[0].mxu0 %v1241
        %v1371 = vpop.f32.mrb[0].mxu0
        %v1372 = vadd.f32 0.0, %v1371
        %v1373 = vpop.f32.mrb[0].mxu0
        %v1374 = vpop.f32.mrb[0].mxu0
        %v1375 = vadd.f32 0.0, %v1374
        %v1376 = vpop.f32.mrb[0].mxu0
        %1377 = vmatprep.mubr.bf16.mxu0 0
        %1378 = vmatmul.mubr.bf16.gmra.mrb[0].mxu0 %v1244
        %v1379 = vpop.f32.mrb[0].mxu0
        %v1380 = vadd.f32 0.0, %v1379
        %v1381 = vpop.f32.mrb[0].mxu0
        %v1382 = vpop.f32.mrb[0].mxu0
        %v1383 = vadd.f32 0.0, %v1382
        %v1384 = vpop.f32.mrb[0].mxu0
        %1385 = vmatprep.mubr.bf16.mxu0 0
        %1386 = vmatmul.mubr.bf16.gmra.mrb[0].mxu0 %v1247
        %v1387 = vpop.f32.mrb[0].mxu0
        %v1388 = vadd.f32 0.0, %v1387
        %v1389 = vpop.f32.mrb[0].mxu0
        %v1390 = vpop.f32.mrb[0].mxu0
        %v1391 = vadd.f32 0.0, %v1390
        %v1392 = vpop.f32.mrb[0].mxu0
        %1393 = vmatprep.mubr.bf16.mxu0 0
        %1394 = vmatmul.mubr.bf16.gmra.mrb[0].mxu0 %v1250
        %v1395 = vpop.f32.mrb[0].mxu0
        %v1396 = vadd.f32 0.0, %v1395
        %v1397 = vpop.f32.mrb[0].mxu0
        %v1398 = vpop.f32.mrb[0].mxu0
        %v1399 = vadd.f32 0.0, %v1398
        %v1400 = vpop.f32.mrb[0].mxu0
        %1401 = vmatprep.mubr.bf16.mxu0 0
        %1402 = vmatmul.mubr.bf16.gmra.mrb[0].mxu0 %v1253
        %v1403 = vpop.f32.mrb[0].mxu0
        %v1404 = vadd.f32 0.0, %v1403
        %v1405 = vpop.f32.mrb[0].mxu0
        %v1406 = vpop.f32.mrb[0].mxu0
        %v1407 = vadd.f32 0.0, %v1406
        %v1408 = vpop.f32.mrb[0].mxu0
        %1409 = vmatprep.mubr.bf16.mxu0 0
        %1410 = vmatmul.mubr.bf16.gmra.mrb[0].mxu0 %v1256
        %v1411 = vpop.f32.mrb[0].mxu0
        %v1412 = vadd.f32 0.0, %v1411
        %v1413 = vpop.f32.mrb[0].mxu0
        %v1414 = vpop.f32.mrb[0].mxu0
        %v1415 = vadd.f32 0.0, %v1414
        %v1416 = vpop.f32.mrb[0].mxu0
        %1417 = vmatprep.mubr.bf16.mxu0 0
        %1418 = vmatmul.mubr.bf16.gmra.mrb[0].mxu0 %v1259
        %v1419 = vpop.f32.mrb[0].mxu0
        %v1420 = vadd.f32 0.0, %v1419
        %v1421 = vpop.f32.mrb[0].mxu0
        %v1422 = vpop.f32.mrb[0].mxu0
        %v1423 = vadd.f32 0.0, %v1422
        %v1424 = vpop.f32.mrb[0].mxu0
        %1425 = vmatprep.mubr.bf16.mxu0 0
        %1426 = vmatmul.mubr.bf16.gmra.mrb[0].mxu0 %v1262
        %v1427 = vpop.f32.mrb[0].mxu0
        %v1428 = vadd.f32 0.0, %v1427
        %v1429 = vpop.f32.mrb[0].mxu0
        %v1430 = vpop.f32.mrb[0].mxu0
        %v1431 = vadd.f32 0.0, %v1430
        %v1432 = vpop.f32.mrb[0].mxu0
        %1433 = vmatprep.mubr.bf16.mxu0 0
        %1434 = vmatmul.mubr.bf16.gmra.mrb[0].mxu0 %v1265
        %v1435 = vpop.f32.mrb[0].mxu0
        %v1436 = vadd.f32 0.0, %v1435
        %v1437 = vpop.f32.mrb[0].mxu0
        %v1438 = vpop.f32.mrb[0].mxu0
        %v1439 = vadd.f32 0.0, %v1438
        %v1440 = vpop.f32.mrb[0].mxu0
        %1441 = vmatprep.mubr.bf16.mxu0 0
        %1442 = vmatmul.mubr.bf16.gmra.mrb[0].mxu0 %v1268
        %v1443 = vpop.f32.mrb[0].mxu0
        %v1444 = vadd.f32 0.0, %v1443
        %v1445 = vpop.f32.mrb[0].mxu0
        %v1446 = vpop.f32.mrb[0].mxu0
        %v1447 = vadd.f32 0.0, %v1446
        %v1448 = vpop.f32.mrb[0].mxu0
        %1449 = vdwg.mxu0
        %v1450 = vadd.f32 %v1124, %v1308
        %v1451 = vadd.f32 %v1125, %v1311
        %v1452 = vadd.f32 %v1126, %v1316
        %v1453 = vadd.f32 %v1127, %v1319
        %v1454 = vadd.f32 %v1128, %v1324
        %v1455 = vadd.f32 %v1129, %v1327
        %v1456 = vadd.f32 %v1130, %v1332
        %v1457 = vadd.f32 %v1131, %v1335
        %v1458 = vadd.f32 %v1132, %v1340
        %v1459 = vadd.f32 %v1133, %v1343
        %v1460 = vadd.f32 %v1134, %v1348
        %v1461 = vadd.f32 %v1135, %v1351
        %v1462 = vadd.f32 %v1136, %v1356
        %v1463 = vadd.f32 %v1137, %v1359
        %v1464 = vadd.f32 %v1138, %v1364
        %v1465 = vadd.f32 %v1139, %v1367
        %v1466 = vadd.f32 %v1140, %v1372
        %v1467 = vadd.f32 %v1141, %v1375
        %v1468 = vadd.f32 %v1142, %v1380
        %v1469 = vadd.f32 %v1143, %v1383
        %v1470 = vadd.f32 %v1144, %v1388
        %v1471 = vadd.f32 %v1145, %v1391
        %v1472 = vadd.f32 %v1146, %v1396
        %v1473 = vadd.f32 %v1147, %v1399
        %v1474 = vadd.f32 %v1148, %v1404
        %v1475 = vadd.f32 %v1149, %v1407
        %v1476 = vadd.f32 %v1150, %v1412
        %v1477 = vadd.f32 %v1151, %v1415
        %v1478 = vadd.f32 %v1152, %v1420
        %v1479 = vadd.f32 %v1153, %v1423
        %v1480 = vadd.f32 %v1154, %v1428
        %v1481 = vadd.f32 %v1155, %v1431
        %v1482 = vadd.f32 %v1156, %v1436
        %v1483 = vadd.f32 %v1157, %v1439
        %v1484 = vadd.f32 %v1158, %v1444
        %v1485 = vadd.f32 %v1159, %v1447
        %v1486 = vld [vmem:[%s248 + $0x13] sm:$0xff]
        %v1487 = vld [vmem:[%s248 + $0x1b] sm:$0xff]
        %v1488 = vld [vmem:[%s248 + $0x23] sm:$0xff]
        %v1489 = vld [vmem:[%s248 + $0x2b] sm:$0xff]
        %v1490 = vld [vmem:[%s248 + $0x33] sm:$0xff]
        %v1491 = vld [vmem:[%s248 + $0x3b] sm:$0xff]
        %v1492 = vld [vmem:[%s248 + $0x43] sm:$0xff]
        %v1493 = vld [vmem:[%s248 + $0x4b] sm:$0xff]
        %v1494 = vld [vmem:[%s248 + $0x53] sm:$0xff]
        %v1495 = vld [vmem:[%s248 + $0x5b] sm:$0xff]
        %v1496 = vld [vmem:[%s248 + $0x63] sm:$0xff]
        %v1497 = vld [vmem:[%s248 + $0x6b] sm:$0xff]
        %v1498 = vld [vmem:[%s248 + $0x73] sm:$0xff]
        %v1499 = vld [vmem:[%s248 + $0x7b] sm:$0xff]
        %v1500 = vld [vmem:[%s248 + $0x83] sm:$0xff]
        %v1501 = vld [vmem:[%s248 + $0x8b] sm:$0xff]
        %v1502 = vld [vmem:[%s248 + $0x93] sm:$0xff]
        %v1503 = vld [vmem:[%s248 + $0x9b] sm:$0xff]
        %v1504 = vld [vmem:[%s248 + $0xa3] sm:$0xff]
        %v1505 = vld [vmem:[%s248 + $0xab] sm:$0xff]
        %v1506 = vld [vmem:[%s248 + $0xb3] sm:$0xff]
        %v1507 = vld [vmem:[%s248 + $0xbb] sm:$0xff]
        %v1508 = vld [vmem:[%s248 + $0xc3] sm:$0xff]
        %v1509 = vld [vmem:[%s248 + $0xcb] sm:$0xff]
        %v1510 = vld [vmem:[%s248 + $0xd3] sm:$0xff]
        %v1511 = vld [vmem:[%s248 + $0xdb] sm:$0xff]
        %v1512 = vld [vmem:[%s248 + $0xe3] sm:$0xff]
        %v1513 = vld [vmem:[%s248 + $0xeb] sm:$0xff]
        %v1514 = vld [vmem:[%s248 + $0xf3] sm:$0xff]
        %v1515 = vld [vmem:[%s248 + $0xfb] sm:$0xff]
        %v1516 = vld [vmem:[%s248 + $0x103] sm:$0xff]
        %v1517 = vld [vmem:[%s248 + $0x10b] sm:$0xff]
        %v1518 = vld [vmem:[%s248 + $0x113] sm:$0xff]
        %v1519 = vld [vmem:[%s248 + $0x11b] sm:$0xff]
        %v1520 = vld [vmem:[%s248 + $0x123] sm:$0xff]
        %v1521 = vld [vmem:[%s248 + $0x12b] sm:$0xff]
        %v1522 = vpack.c.bf16 %v1487, %v1486
        %v1523 = vpack.c.bf16 %v1489, %v1488
        %v1524 = vpack.c.bf16 %v1491, %v1490
        %v1525 = vpack.c.bf16 %v1493, %v1492
        %v1526 = vpack.c.bf16 %v1495, %v1494
        %v1527 = vpack.c.bf16 %v1497, %v1496
        %v1528 = vpack.c.bf16 %v1499, %v1498
        %v1529 = vpack.c.bf16 %v1501, %v1500
        %v1530 = vpack.c.bf16 %v1503, %v1502
        %v1531 = vpack.c.bf16 %v1505, %v1504
        %v1532 = vpack.c.bf16 %v1507, %v1506
        %v1533 = vpack.c.bf16 %v1509, %v1508
        %v1534 = vpack.c.bf16 %v1511, %v1510
        %v1535 = vpack.c.bf16 %v1513, %v1512
        %v1536 = vpack.c.bf16 %v1515, %v1514
        %v1537 = vpack.c.bf16 %v1517, %v1516
        %v1538 = vpack.c.bf16 %v1519, %v1518
        %v1539 = vpack.c.bf16 %v1521, %v1520
        %s1540 = scalar_lea.vmem %s1, 8
        %v1541 = vld [vmem:[%s1540] sm:$0x3]
        %v1543 = vsel %vm361, %v1522, 0
        %v1546 = vsel %vm361, %v1523, 0
        %v1549 = vsel %vm361, %v1524, 0
        %v1552 = vsel %vm361, %v1525, 0
        %v1555 = vsel %vm361, %v1526, 0
        %v1558 = vsel %vm361, %v1527, 0
        %v1561 = vsel %vm361, %v1528, 0
        %v1564 = vsel %vm361, %v1529, 0
        %v1567 = vsel %vm361, %v1530, 0
        %v1570 = vsel %vm361, %v1531, 0
        %v1573 = vsel %vm361, %v1532, 0
        %v1576 = vsel %vm361, %v1533, 0
        %v1579 = vsel %vm361, %v1534, 0
        %v1582 = vsel %vm361, %v1535, 0
        %v1585 = vsel %vm361, %v1536, 0
        %v1588 = vsel %vm361, %v1537, 0
        %v1591 = vsel %vm361, %v1538, 0
        %v1594 = vsel %vm361, %v1539, 0
        %v1597 = vand.u32 %v1541, %v419
        %1599 = vmatprep.subr.bf16.mxu0 0
        %1600 = vmatpush1.bf16.msra.mxu0 %v1597
        %1601 = vmatprep.subr.bf16.mxu0 0
        %1602 = vmatpush1.bf16.msra.mxu0 0
        %1603 = vmatprep.subr.bf16.mxu0 0
        %1604 = vmatpush1.bf16.msra.mxu0 0
        %1605 = vmatprep.subr.bf16.mxu0 0
        %1606 = vmatpush1.bf16.msra.mxu0 0
        %1607 = vmatprep.subr.bf16.mxu0 0
        %1608 = vmatpush1.bf16.msra.mxu0 0
        %1609 = vmatprep.subr.bf16.mxu0 0
        %1610 = vmatpush1.bf16.msra.mxu0 0
        %1611 = vmatprep.subr.bf16.mxu0 0
        %1612 = vmatpush1.bf16.msra.mxu0 0
        %1613 = vmatprep.subr.bf16.mxu0 0
        %1614 = vmatpush1.bf16.msra.mxu0 0
        %1615 = vmatprep.subr.bf16.mxu0 0
        %1616 = vmatpush1.bf16.msra.mxu0 0
        %1617 = vmatprep.subr.bf16.mxu0 0
        %1618 = vmatpush1.bf16.msra.mxu0 0
        %1619 = vmatprep.subr.bf16.mxu0 0
        %1620 = vmatpush1.bf16.msra.mxu0 0
        %1621 = vmatprep.subr.bf16.mxu0 0
        %1622 = vmatpush1.bf16.msra.mxu0 0
        %1623 = vmatprep.subr.bf16.mxu0 0
        %1624 = vmatpush1.bf16.msra.mxu0 0
        %1625 = vmatprep.subr.bf16.mxu0 0
        %1626 = vmatpush1.bf16.msra.mxu0 0
        %1627 = vmatprep.subr.bf16.mxu0 0
        %1628 = vmatpush1.bf16.msra.mxu0 0
        %1629 = vmatprep.subr.bf16.mxu0 0
        %1630 = vmatpush1.bf16.msra.mxu0 0
        %1631 = vmatprep.mubr.bf16.mxu0 0
        %1632 = vmatmul.mubr.bf16.gmra.mrb[0].mxu0 %v1543
        %v1633 = vpop.f32.mrb[0].mxu0
        %v1634 = vadd.f32 0.0, %v1633
        %v1635 = vpop.f32.mrb[0].mxu0
        %v1636 = vpop.f32.mrb[0].mxu0
        %v1637 = vadd.f32 0.0, %v1636
        %v1638 = vpop.f32.mrb[0].mxu0
        %1639 = vmatprep.mubr.bf16.mxu0 0
        %1640 = vmatmul.mubr.bf16.gmra.mrb[0].mxu0 %v1546
        %v1641 = vpop.f32.mrb[0].mxu0
        %v1642 = vadd.f32 0.0, %v1641
        %v1643 = vpop.f32.mrb[0].mxu0
        %v1644 = vpop.f32.mrb[0].mxu0
        %v1645 = vadd.f32 0.0, %v1644
        %v1646 = vpop.f32.mrb[0].mxu0
        %1647 = vmatprep.mubr.bf16.mxu0 0
        %1648 = vmatmul.mubr.bf16.gmra.mrb[0].mxu0 %v1549
        %v1649 = vpop.f32.mrb[0].mxu0
        %v1650 = vadd.f32 0.0, %v1649
        %v1651 = vpop.f32.mrb[0].mxu0
        %v1652 = vpop.f32.mrb[0].mxu0
        %v1653 = vadd.f32 0.0, %v1652
        %v1654 = vpop.f32.mrb[0].mxu0
        %1655 = vmatprep.mubr.bf16.mxu0 0
        %1656 = vmatmul.mubr.bf16.gmra.mrb[0].mxu0 %v1552
        %v1657 = vpop.f32.mrb[0].mxu0
        %v1658 = vadd.f32 0.0, %v1657
        %v1659 = vpop.f32.mrb[0].mxu0
        %v1660 = vpop.f32.mrb[0].mxu0
        %v1661 = vadd.f32 0.0, %v1660
        %v1662 = vpop.f32.mrb[0].mxu0
        %1663 = vmatprep.mubr.bf16.mxu0 0
        %1664 = vmatmul.mubr.bf16.gmra.mrb[0].mxu0 %v1555
        %v1665 = vpop.f32.mrb[0].mxu0
        %v1666 = vadd.f32 0.0, %v1665
        %v1667 = vpop.f32.mrb[0].mxu0
        %v1668 = vpop.f32.mrb[0].mxu0
        %v1669 = vadd.f32 0.0, %v1668
        %v1670 = vpop.f32.mrb[0].mxu0
        %1671 = vmatprep.mubr.bf16.mxu0 0
        %1672 = vmatmul.mubr.bf16.gmra.mrb[0].mxu0 %v1558
        %v1673 = vpop.f32.mrb[0].mxu0
        %v1674 = vadd.f32 0.0, %v1673
        %v1675 = vpop.f32.mrb[0].mxu0
        %v1676 = vpop.f32.mrb[0].mxu0
        %v1677 = vadd.f32 0.0, %v1676
        %v1678 = vpop.f32.mrb[0].mxu0
        %1679 = vmatprep.mubr.bf16.mxu0 0
        %1680 = vmatmul.mubr.bf16.gmra.mrb[0].mxu0 %v1561
        %v1681 = vpop.f32.mrb[0].mxu0
        %v1682 = vadd.f32 0.0, %v1681
        %v1683 = vpop.f32.mrb[0].mxu0
        %v1684 = vpop.f32.mrb[0].mxu0
        %v1685 = vadd.f32 0.0, %v1684
        %v1686 = vpop.f32.mrb[0].mxu0
        %1687 = vmatprep.mubr.bf16.mxu0 0
        %1688 = vmatmul.mubr.bf16.gmra.mrb[0].mxu0 %v1564
        %v1689 = vpop.f32.mrb[0].mxu0
        %v1690 = vadd.f32 0.0, %v1689
        %v1691 = vpop.f32.mrb[0].mxu0
        %v1692 = vpop.f32.mrb[0].mxu0
        %v1693 = vadd.f32 0.0, %v1692
        %v1694 = vpop.f32.mrb[0].mxu0
        %1695 = vmatprep.mubr.bf16.mxu0 0
        %1696 = vmatmul.mubr.bf16.gmra.mrb[0].mxu0 %v1567
        %v1697 = vpop.f32.mrb[0].mxu0
        %v1698 = vadd.f32 0.0, %v1697
        %v1699 = vpop.f32.mrb[0].mxu0
        %v1700 = vpop.f32.mrb[0].mxu0
        %v1701 = vadd.f32 0.0, %v1700
        %v1702 = vpop.f32.mrb[0].mxu0
        %1703 = vmatprep.mubr.bf16.mxu0 0
        %1704 = vmatmul.mubr.bf16.gmra.mrb[0].mxu0 %v1570
        %v1705 = vpop.f32.mrb[0].mxu0
        %v1706 = vadd.f32 0.0, %v1705
        %v1707 = vpop.f32.mrb[0].mxu0
        %v1708 = vpop.f32.mrb[0].mxu0
        %v1709 = vadd.f32 0.0, %v1708
        %v1710 = vpop.f32.mrb[0].mxu0
        %1711 = vmatprep.mubr.bf16.mxu0 0
        %1712 = vmatmul.mubr.bf16.gmra.mrb[0].mxu0 %v1573
        %v1713 = vpop.f32.mrb[0].mxu0
        %v1714 = vadd.f32 0.0, %v1713
        %v1715 = vpop.f32.mrb[0].mxu0
        %v1716 = vpop.f32.mrb[0].mxu0
        %v1717 = vadd.f32 0.0, %v1716
        %v1718 = vpop.f32.mrb[0].mxu0
        %1719 = vmatprep.mubr.bf16.mxu0 0
        %1720 = vmatmul.mubr.bf16.gmra.mrb[0].mxu0 %v1576
        %v1721 = vpop.f32.mrb[0].mxu0
        %v1722 = vadd.f32 0.0, %v1721
        %v1723 = vpop.f32.mrb[0].mxu0
        %v1724 = vpop.f32.mrb[0].mxu0
        %v1725 = vadd.f32 0.0, %v1724
        %v1726 = vpop.f32.mrb[0].mxu0
        %1727 = vmatprep.mubr.bf16.mxu0 0
        %1728 = vmatmul.mubr.bf16.gmra.mrb[0].mxu0 %v1579
        %v1729 = vpop.f32.mrb[0].mxu0
        %v1730 = vadd.f32 0.0, %v1729
        %v1731 = vpop.f32.mrb[0].mxu0
        %v1732 = vpop.f32.mrb[0].mxu0
        %v1733 = vadd.f32 0.0, %v1732
        %v1734 = vpop.f32.mrb[0].mxu0
        %1735 = vmatprep.mubr.bf16.mxu0 0
        %1736 = vmatmul.mubr.bf16.gmra.mrb[0].mxu0 %v1582
        %v1737 = vpop.f32.mrb[0].mxu0
        %v1738 = vadd.f32 0.0, %v1737
        %v1739 = vpop.f32.mrb[0].mxu0
        %v1740 = vpop.f32.mrb[0].mxu0
        %v1741 = vadd.f32 0.0, %v1740
        %v1742 = vpop.f32.mrb[0].mxu0
        %1743 = vmatprep.mubr.bf16.mxu0 0
        %1744 = vmatmul.mubr.bf16.gmra.mrb[0].mxu0 %v1585
        %v1745 = vpop.f32.mrb[0].mxu0
        %v1746 = vadd.f32 0.0, %v1745
        %v1747 = vpop.f32.mrb[0].mxu0
        %v1748 = vpop.f32.mrb[0].mxu0
        %v1749 = vadd.f32 0.0, %v1748
        %v1750 = vpop.f32.mrb[0].mxu0
        %1751 = vmatprep.mubr.bf16.mxu0 0
        %1752 = vmatmul.mubr.bf16.gmra.mrb[0].mxu0 %v1588
        %v1753 = vpop.f32.mrb[0].mxu0
        %v1754 = vadd.f32 0.0, %v1753
        %v1755 = vpop.f32.mrb[0].mxu0
        %v1756 = vpop.f32.mrb[0].mxu0
        %v1757 = vadd.f32 0.0, %v1756
        %v1758 = vpop.f32.mrb[0].mxu0
        %1759 = vmatprep.mubr.bf16.mxu0 0
        %1760 = vmatmul.mubr.bf16.gmra.mrb[0].mxu0 %v1591
        %v1761 = vpop.f32.mrb[0].mxu0
        %v1762 = vadd.f32 0.0, %v1761
        %v1763 = vpop.f32.mrb[0].mxu0
        %v1764 = vpop.f32.mrb[0].mxu0
        %v1765 = vadd.f32 0.0, %v1764
        %v1766 = vpop.f32.mrb[0].mxu0
        %1767 = vmatprep.mubr.bf16.mxu0 0
        %1768 = vmatmul.mubr.bf16.gmra.mrb[0].mxu0 %v1594
        %v1769 = vpop.f32.mrb[0].mxu0
        %v1770 = vadd.f32 0.0, %v1769
        %v1771 = vpop.f32.mrb[0].mxu0
        %v1772 = vpop.f32.mrb[0].mxu0
        %v1773 = vadd.f32 0.0, %v1772
        %v1774 = vpop.f32.mrb[0].mxu0
        %1775 = vdwg.mxu0
        %v1776 = vadd.f32 %v1450, %v1634
        %v1777 = vadd.f32 %v1451, %v1637
        %v1778 = vadd.f32 %v1452, %v1642
        %v1779 = vadd.f32 %v1453, %v1645
        %v1780 = vadd.f32 %v1454, %v1650
        %v1781 = vadd.f32 %v1455, %v1653
        %v1782 = vadd.f32 %v1456, %v1658
        %v1783 = vadd.f32 %v1457, %v1661
        %v1784 = vadd.f32 %v1458, %v1666
        %v1785 = vadd.f32 %v1459, %v1669
        %v1786 = vadd.f32 %v1460, %v1674
        %v1787 = vadd.f32 %v1461, %v1677
        %v1788 = vadd.f32 %v1462, %v1682
        %v1789 = vadd.f32 %v1463, %v1685
        %v1790 = vadd.f32 %v1464, %v1690
        %v1791 = vadd.f32 %v1465, %v1693
        %v1792 = vadd.f32 %v1466, %v1698
        %v1793 = vadd.f32 %v1467, %v1701
        %v1794 = vadd.f32 %v1468, %v1706
        %v1795 = vadd.f32 %v1469, %v1709
        %v1796 = vadd.f32 %v1470, %v1714
        %v1797 = vadd.f32 %v1471, %v1717
        %v1798 = vadd.f32 %v1472, %v1722
        %v1799 = vadd.f32 %v1473, %v1725
        %v1800 = vadd.f32 %v1474, %v1730
        %v1801 = vadd.f32 %v1475, %v1733
        %v1802 = vadd.f32 %v1476, %v1738
        %v1803 = vadd.f32 %v1477, %v1741
        %v1804 = vadd.f32 %v1478, %v1746
        %v1805 = vadd.f32 %v1479, %v1749
        %v1806 = vadd.f32 %v1480, %v1754
        %v1807 = vadd.f32 %v1481, %v1757
        %v1808 = vadd.f32 %v1482, %v1762
        %v1809 = vadd.f32 %v1483, %v1765
        %v1810 = vadd.f32 %v1484, %v1770
        %v1811 = vadd.f32 %v1485, %v1773
        %v1812 = vld [vmem:[%s248 + $0x14] sm:$0xff]
        %v1813 = vld [vmem:[%s248 + $0x1c] sm:$0xff]
        %v1814 = vld [vmem:[%s248 + $0x24] sm:$0xff]
        %v1815 = vld [vmem:[%s248 + $0x2c] sm:$0xff]
        %v1816 = vld [vmem:[%s248 + $0x34] sm:$0xff]
        %v1817 = vld [vmem:[%s248 + $0x3c] sm:$0xff]
        %v1818 = vld [vmem:[%s248 + $0x44] sm:$0xff]
        %v1819 = vld [vmem:[%s248 + $0x4c] sm:$0xff]
        %v1820 = vld [vmem:[%s248 + $0x54] sm:$0xff]
        %v1821 = vld [vmem:[%s248 + $0x5c] sm:$0xff]
        %v1822 = vld [vmem:[%s248 + $0x64] sm:$0xff]
        %v1823 = vld [vmem:[%s248 + $0x6c] sm:$0xff]
        %v1824 = vld [vmem:[%s248 + $0x74] sm:$0xff]
        %v1825 = vld [vmem:[%s248 + $0x7c] sm:$0xff]
        %v1826 = vld [vmem:[%s248 + $0x84] sm:$0xff]
        %v1827 = vld [vmem:[%s248 + $0x8c] sm:$0xff]
        %v1828 = vld [vmem:[%s248 + $0x94] sm:$0xff]
        %v1829 = vld [vmem:[%s248 + $0x9c] sm:$0xff]
        %v1830 = vld [vmem:[%s248 + $0xa4] sm:$0xff]
        %v1831 = vld [vmem:[%s248 + $0xac] sm:$0xff]
        %v1832 = vld [vmem:[%s248 + $0xb4] sm:$0xff]
        %v1833 = vld [vmem:[%s248 + $0xbc] sm:$0xff]
        %v1834 = vld [vmem:[%s248 + $0xc4] sm:$0xff]
        %v1835 = vld [vmem:[%s248 + $0xcc] sm:$0xff]
        %v1836 = vld [vmem:[%s248 + $0xd4] sm:$0xff]
        %v1837 = vld [vmem:[%s248 + $0xdc] sm:$0xff]
        %v1838 = vld [vmem:[%s248 + $0xe4] sm:$0xff]
        %v1839 = vld [vmem:[%s248 + $0xec] sm:$0xff]
        %v1840 = vld [vmem:[%s248 + $0xf4] sm:$0xff]
        %v1841 = vld [vmem:[%s248 + $0xfc] sm:$0xff]
        %v1842 = vld [vmem:[%s248 + $0x104] sm:$0xff]
        %v1843 = vld [vmem:[%s248 + $0x10c] sm:$0xff]
        %v1844 = vld [vmem:[%s248 + $0x114] sm:$0xff]
        %v1845 = vld [vmem:[%s248 + $0x11c] sm:$0xff]
        %v1846 = vld [vmem:[%s248 + $0x124] sm:$0xff]
        %v1847 = vld [vmem:[%s248 + $0x12c] sm:$0xff]
        %v1848 = vpack.c.bf16 %v1813, %v1812
        %v1849 = vpack.c.bf16 %v1815, %v1814
        %v1850 = vpack.c.bf16 %v1817, %v1816
        %v1851 = vpack.c.bf16 %v1819, %v1818
        %v1852 = vpack.c.bf16 %v1821, %v1820
        %v1853 = vpack.c.bf16 %v1823, %v1822
        %v1854 = vpack.c.bf16 %v1825, %v1824
        %v1855 = vpack.c.bf16 %v1827, %v1826
        %v1856 = vpack.c.bf16 %v1829, %v1828
        %v1857 = vpack.c.bf16 %v1831, %v1830
        %v1858 = vpack.c.bf16 %v1833, %v1832
        %v1859 = vpack.c.bf16 %v1835, %v1834
        %v1860 = vpack.c.bf16 %v1837, %v1836
        %v1861 = vpack.c.bf16 %v1839, %v1838
        %v1862 = vpack.c.bf16 %v1841, %v1840
        %v1863 = vpack.c.bf16 %v1843, %v1842
        %v1864 = vpack.c.bf16 %v1845, %v1844
        %v1865 = vpack.c.bf16 %v1847, %v1846
        %s1866 = scalar_lea.vmem %s1, 10
        %v1867 = vld [vmem:[%s1866] sm:$0x3]
        %v1869 = vsel %vm361, %v1848, 0
        %v1872 = vsel %vm361, %v1849, 0
        %v1875 = vsel %vm361, %v1850, 0
        %v1878 = vsel %vm361, %v1851, 0
        %v1881 = vsel %vm361, %v1852, 0
        %v1884 = vsel %vm361, %v1853, 0
        %v1887 = vsel %vm361, %v1854, 0
        %v1890 = vsel %vm361, %v1855, 0
        %v1893 = vsel %vm361, %v1856, 0
        %v1896 = vsel %vm361, %v1857, 0
        %v1899 = vsel %vm361, %v1858, 0
        %v1902 = vsel %vm361, %v1859, 0
        %v1905 = vsel %vm361, %v1860, 0
        %v1908 = vsel %vm361, %v1861, 0
        %v1911 = vsel %vm361, %v1862, 0
        %v1914 = vsel %vm361, %v1863, 0
        %v1917 = vsel %vm361, %v1864, 0
        %v1920 = vsel %vm361, %v1865, 0
        %v1923 = vand.u32 %v1867, %v419
        %1925 = vmatprep.subr.bf16.mxu0 0
        %1926 = vmatpush1.bf16.msra.mxu0 %v1923
        %1927 = vmatprep.subr.bf16.mxu0 0
        %1928 = vmatpush1.bf16.msra.mxu0 0
        %1929 = vmatprep.subr.bf16.mxu0 0
        %1930 = vmatpush1.bf16.msra.mxu0 0
        %1931 = vmatprep.subr.bf16.mxu0 0
        %1932 = vmatpush1.bf16.msra.mxu0 0
        %1933 = vmatprep.subr.bf16.mxu0 0
        %1934 = vmatpush1.bf16.msra.mxu0 0
        %1935 = vmatprep.subr.bf16.mxu0 0
        %1936 = vmatpush1.bf16.msra.mxu0 0
        %1937 = vmatprep.subr.bf16.mxu0 0
        %1938 = vmatpush1.bf16.msra.mxu0 0
        %1939 = vmatprep.subr.bf16.mxu0 0
        %1940 = vmatpush1.bf16.msra.mxu0 0
        %1941 = vmatprep.subr.bf16.mxu0 0
        %1942 = vmatpush1.bf16.msra.mxu0 0
        %1943 = vmatprep.subr.bf16.mxu0 0
        %1944 = vmatpush1.bf16.msra.mxu0 0
        %1945 = vmatprep.subr.bf16.mxu0 0
        %1946 = vmatpush1.bf16.msra.mxu0 0
        %1947 = vmatprep.subr.bf16.mxu0 0
        %1948 = vmatpush1.bf16.msra.mxu0 0
        %1949 = vmatprep.subr.bf16.mxu0 0
        %1950 = vmatpush1.bf16.msra.mxu0 0
        %1951 = vmatprep.subr.bf16.mxu0 0
        %1952 = vmatpush1.bf16.msra.mxu0 0
        %1953 = vmatprep.subr.bf16.mxu0 0
        %1954 = vmatpush1.bf16.msra.mxu0 0
        %1955 = vmatprep.subr.bf16.mxu0 0
        %1956 = vmatpush1.bf16.msra.mxu0 0
        %1957 = vmatprep.mubr.bf16.mxu0 0
        %1958 = vmatmul.mubr.bf16.gmra.mrb[0].mxu0 %v1869
        %v1959 = vpop.f32.mrb[0].mxu0
        %v1960 = vadd.f32 0.0, %v1959
        %v1961 = vpop.f32.mrb[0].mxu0
        %v1962 = vpop.f32.mrb[0].mxu0
        %v1963 = vadd.f32 0.0, %v1962
        %v1964 = vpop.f32.mrb[0].mxu0
        %1965 = vmatprep.mubr.bf16.mxu0 0
        %1966 = vmatmul.mubr.bf16.gmra.mrb[0].mxu0 %v1872
        %v1967 = vpop.f32.mrb[0].mxu0
        %v1968 = vadd.f32 0.0, %v1967
        %v1969 = vpop.f32.mrb[0].mxu0
        %v1970 = vpop.f32.mrb[0].mxu0
        %v1971 = vadd.f32 0.0, %v1970
        %v1972 = vpop.f32.mrb[0].mxu0
        %1973 = vmatprep.mubr.bf16.mxu0 0
        %1974 = vmatmul.mubr.bf16.gmra.mrb[0].mxu0 %v1875
        %v1975 = vpop.f32.mrb[0].mxu0
        %v1976 = vadd.f32 0.0, %v1975
        %v1977 = vpop.f32.mrb[0].mxu0
        %v1978 = vpop.f32.mrb[0].mxu0
        %v1979 = vadd.f32 0.0, %v1978
        %v1980 = vpop.f32.mrb[0].mxu0
        %1981 = vmatprep.mubr.bf16.mxu0 0
        %1982 = vmatmul.mubr.bf16.gmra.mrb[0].mxu0 %v1878
        %v1983 = vpop.f32.mrb[0].mxu0
        %v1984 = vadd.f32 0.0, %v1983
        %v1985 = vpop.f32.mrb[0].mxu0
        %v1986 = vpop.f32.mrb[0].mxu0
        %v1987 = vadd.f32 0.0, %v1986
        %v1988 = vpop.f32.mrb[0].mxu0
        %1989 = vmatprep.mubr.bf16.mxu0 0
        %1990 = vmatmul.mubr.bf16.gmra.mrb[0].mxu0 %v1881
        %v1991 = vpop.f32.mrb[0].mxu0
        %v1992 = vadd.f32 0.0, %v1991
        %v1993 = vpop.f32.mrb[0].mxu0
        %v1994 = vpop.f32.mrb[0].mxu0
        %v1995 = vadd.f32 0.0, %v1994
        %v1996 = vpop.f32.mrb[0].mxu0
        %1997 = vmatprep.mubr.bf16.mxu0 0
        %1998 = vmatmul.mubr.bf16.gmra.mrb[0].mxu0 %v1884
        %v1999 = vpop.f32.mrb[0].mxu0
        %v2000 = vadd.f32 0.0, %v1999
        %v2001 = vpop.f32.mrb[0].mxu0
        %v2002 = vpop.f32.mrb[0].mxu0
        %v2003 = vadd.f32 0.0, %v2002
        %v2004 = vpop.f32.mrb[0].mxu0
        %2005 = vmatprep.mubr.bf16.mxu0 0
        %2006 = vmatmul.mubr.bf16.gmra.mrb[0].mxu0 %v1887
        %v2007 = vpop.f32.mrb[0].mxu0
        %v2008 = vadd.f32 0.0, %v2007
        %v2009 = vpop.f32.mrb[0].mxu0
        %v2010 = vpop.f32.mrb[0].mxu0
        %v2011 = vadd.f32 0.0, %v2010
        %v2012 = vpop.f32.mrb[0].mxu0
        %2013 = vmatprep.mubr.bf16.mxu0 0
        %2014 = vmatmul.mubr.bf16.gmra.mrb[0].mxu0 %v1890
        %v2015 = vpop.f32.mrb[0].mxu0
        %v2016 = vadd.f32 0.0, %v2015
        %v2017 = vpop.f32.mrb[0].mxu0
        %v2018 = vpop.f32.mrb[0].mxu0
        %v2019 = vadd.f32 0.0, %v2018
        %v2020 = vpop.f32.mrb[0].mxu0
        %2021 = vmatprep.mubr.bf16.mxu0 0
        %2022 = vmatmul.mubr.bf16.gmra.mrb[0].mxu0 %v1893
        %v2023 = vpop.f32.mrb[0].mxu0
        %v2024 = vadd.f32 0.0, %v2023
        %v2025 = vpop.f32.mrb[0].mxu0
        %v2026 = vpop.f32.mrb[0].mxu0
        %v2027 = vadd.f32 0.0, %v2026
        %v2028 = vpop.f32.mrb[0].mxu0
        %2029 = vmatprep.mubr.bf16.mxu0 0
        %2030 = vmatmul.mubr.bf16.gmra.mrb[0].mxu0 %v1896
        %v2031 = vpop.f32.mrb[0].mxu0
        %v2032 = vadd.f32 0.0, %v2031
        %v2033 = vpop.f32.mrb[0].mxu0
        %v2034 = vpop.f32.mrb[0].mxu0
        %v2035 = vadd.f32 0.0, %v2034
        %v2036 = vpop.f32.mrb[0].mxu0
        %2037 = vmatprep.mubr.bf16.mxu0 0
        %2038 = vmatmul.mubr.bf16.gmra.mrb[0].mxu0 %v1899
        %v2039 = vpop.f32.mrb[0].mxu0
        %v2040 = vadd.f32 0.0, %v2039
        %v2041 = vpop.f32.mrb[0].mxu0
        %v2042 = vpop.f32.mrb[0].mxu0
        %v2043 = vadd.f32 0.0, %v2042
        %v2044 = vpop.f32.mrb[0].mxu0
        %2045 = vmatprep.mubr.bf16.mxu0 0
        %2046 = vmatmul.mubr.bf16.gmra.mrb[0].mxu0 %v1902
        %v2047 = vpop.f32.mrb[0].mxu0
        %v2048 = vadd.f32 0.0, %v2047
        %v2049 = vpop.f32.mrb[0].mxu0
        %v2050 = vpop.f32.mrb[0].mxu0
        %v2051 = vadd.f32 0.0, %v2050
        %v2052 = vpop.f32.mrb[0].mxu0
        %2053 = vmatprep.mubr.bf16.mxu0 0
        %2054 = vmatmul.mubr.bf16.gmra.mrb[0].mxu0 %v1905
        %v2055 = vpop.f32.mrb[0].mxu0
        %v2056 = vadd.f32 0.0, %v2055
        %v2057 = vpop.f32.mrb[0].mxu0
        %v2058 = vpop.f32.mrb[0].mxu0
        %v2059 = vadd.f32 0.0, %v2058
        %v2060 = vpop.f32.mrb[0].mxu0
        %2061 = vmatprep.mubr.bf16.mxu0 0
        %2062 = vmatmul.mubr.bf16.gmra.mrb[0].mxu0 %v1908
        %v2063 = vpop.f32.mrb[0].mxu0
        %v2064 = vadd.f32 0.0, %v2063
        %v2065 = vpop.f32.mrb[0].mxu0
        %v2066 = vpop.f32.mrb[0].mxu0
        %v2067 = vadd.f32 0.0, %v2066
        %v2068 = vpop.f32.mrb[0].mxu0
        %2069 = vmatprep.mubr.bf16.mxu0 0
        %2070 = vmatmul.mubr.bf16.gmra.mrb[0].mxu0 %v1911
        %v2071 = vpop.f32.mrb[0].mxu0
        %v2072 = vadd.f32 0.0, %v2071
        %v2073 = vpop.f32.mrb[0].mxu0
        %v2074 = vpop.f32.mrb[0].mxu0
        %v2075 = vadd.f32 0.0, %v2074
        %v2076 = vpop.f32.mrb[0].mxu0
        %2077 = vmatprep.mubr.bf16.mxu0 0
        %2078 = vmatmul.mubr.bf16.gmra.mrb[0].mxu0 %v1914
        %v2079 = vpop.f32.mrb[0].mxu0
        %v2080 = vadd.f32 0.0, %v2079
        %v2081 = vpop.f32.mrb[0].mxu0
        %v2082 = vpop.f32.mrb[0].mxu0
        %v2083 = vadd.f32 0.0, %v2082
        %v2084 = vpop.f32.mrb[0].mxu0
        %2085 = vmatprep.mubr.bf16.mxu0 0
        %2086 = vmatmul.mubr.bf16.gmra.mrb[0].mxu0 %v1917
        %v2087 = vpop.f32.mrb[0].mxu0
        %v2088 = vadd.f32 0.0, %v2087
        %v2089 = vpop.f32.mrb[0].mxu0
        %v2090 = vpop.f32.mrb[0].mxu0
        %v2091 = vadd.f32 0.0, %v2090
        %v2092 = vpop.f32.mrb[0].mxu0
        %2093 = vmatprep.mubr.bf16.mxu0 0
        %2094 = vmatmul.mubr.bf16.gmra.mrb[0].mxu0 %v1920
        %v2095 = vpop.f32.mrb[0].mxu0
        %v2096 = vadd.f32 0.0, %v2095
        %v2097 = vpop.f32.mrb[0].mxu0
        %v2098 = vpop.f32.mrb[0].mxu0
        %v2099 = vadd.f32 0.0, %v2098
        %v2100 = vpop.f32.mrb[0].mxu0
        %2101 = vdwg.mxu0
        %v2102 = vadd.f32 %v1776, %v1960
        %v2103 = vadd.f32 %v1777, %v1963
        %v2104 = vadd.f32 %v1778, %v1968
        %v2105 = vadd.f32 %v1779, %v1971
        %v2106 = vadd.f32 %v1780, %v1976
        %v2107 = vadd.f32 %v1781, %v1979
        %v2108 = vadd.f32 %v1782, %v1984
        %v2109 = vadd.f32 %v1783, %v1987
        %v2110 = vadd.f32 %v1784, %v1992
        %v2111 = vadd.f32 %v1785, %v1995
        %v2112 = vadd.f32 %v1786, %v2000
        %v2113 = vadd.f32 %v1787, %v2003
        %v2114 = vadd.f32 %v1788, %v2008
        %v2115 = vadd.f32 %v1789, %v2011
        %v2116 = vadd.f32 %v1790, %v2016
        %v2117 = vadd.f32 %v1791, %v2019
        %v2118 = vadd.f32 %v1792, %v2024
        %v2119 = vadd.f32 %v1793, %v2027
        %v2120 = vadd.f32 %v1794, %v2032
        %v2121 = vadd.f32 %v1795, %v2035
        %v2122 = vadd.f32 %v1796, %v2040
        %v2123 = vadd.f32 %v1797, %v2043
        %v2124 = vadd.f32 %v1798, %v2048
        %v2125 = vadd.f32 %v1799, %v2051
        %v2126 = vadd.f32 %v1800, %v2056
        %v2127 = vadd.f32 %v1801, %v2059
        %v2128 = vadd.f32 %v1802, %v2064
        %v2129 = vadd.f32 %v1803, %v2067
        %v2130 = vadd.f32 %v1804, %v2072
        %v2131 = vadd.f32 %v1805, %v2075
        %v2132 = vadd.f32 %v1806, %v2080
        %v2133 = vadd.f32 %v1807, %v2083
        %v2134 = vadd.f32 %v1808, %v2088
        %v2135 = vadd.f32 %v1809, %v2091
        %v2136 = vadd.f32 %v1810, %v2096
        %v2137 = vadd.f32 %v1811, %v2099
        %v2138 = vld [vmem:[%s248 + $0x24] sm:$0xff]
        %v2139 = vld [vmem:[%s248 + $0x2c] sm:$0xff]
        %v2140 = vld [vmem:[%s248 + $0x34] sm:$0xff]
        %v2141 = vld [vmem:[%s248 + $0x3c] sm:$0xff]
        %v2142 = vld [vmem:[%s248 + $0x44] sm:$0xff]
        %v2143 = vld [vmem:[%s248 + $0x4c] sm:$0xff]
        %v2144 = vld [vmem:[%s248 + $0x54] sm:$0xff]
        %v2145 = vld [vmem:[%s248 + $0x5c] sm:$0xff]
        %v2146 = vld [vmem:[%s248 + $0x64] sm:$0xff]
        %v2147 = vld [vmem:[%s248 + $0x6c] sm:$0xff]
        %v2148 = vld [vmem:[%s248 + $0x74] sm:$0xff]
        %v2149 = vld [vmem:[%s248 + $0x7c] sm:$0xff]
        %v2150 = vld [vmem:[%s248 + $0x84] sm:$0xff]
        %v2151 = vld [vmem:[%s248 + $0x8c] sm:$0xff]
        %v2152 = vld [vmem:[%s248 + $0x94] sm:$0xff]
        %v2153 = vld [vmem:[%s248 + $0x9c] sm:$0xff]
        %v2154 = vld [vmem:[%s248 + $0xa4] sm:$0xff]
        %v2155 = vld [vmem:[%s248 + $0xac] sm:$0xff]
        %v2156 = vld [vmem:[%s248 + $0xb4] sm:$0xff]
        %v2157 = vld [vmem:[%s248 + $0xbc] sm:$0xff]
        %v2158 = vld [vmem:[%s248 + $0xc4] sm:$0xff]
        %v2159 = vld [vmem:[%s248 + $0xcc] sm:$0xff]
        %v2160 = vld [vmem:[%s248 + $0xd4] sm:$0xff]
        %v2161 = vld [vmem:[%s248 + $0xdc] sm:$0xff]
        %v2162 = vld [vmem:[%s248 + $0xe4] sm:$0xff]
        %v2163 = vld [vmem:[%s248 + $0xec] sm:$0xff]
        %v2164 = vld [vmem:[%s248 + $0xf4] sm:$0xff]
        %v2165 = vld [vmem:[%s248 + $0xfc] sm:$0xff]
        %v2166 = vld [vmem:[%s248 + $0x104] sm:$0xff]
        %v2167 = vld [vmem:[%s248 + $0x10c] sm:$0xff]
        %v2168 = vld [vmem:[%s248 + $0x114] sm:$0xff]
        %v2169 = vld [vmem:[%s248 + $0x11c] sm:$0xff]
        %v2170 = vld [vmem:[%s248 + $0x124] sm:$0xff]
        %v2171 = vld [vmem:[%s248 + $0x12c] sm:$0xff]
        %v2172 = vld [vmem:[%s248 + $0x134] sm:$0xff]
        %v2173 = vld [vmem:[%s248 + $0x13c] sm:$0xff]
        %v2174 = vpack.c.bf16 %v2139, %v2138
        %v2175 = vpack.c.bf16 %v2141, %v2140
        %v2176 = vpack.c.bf16 %v2143, %v2142
        %v2177 = vpack.c.bf16 %v2145, %v2144
        %v2178 = vpack.c.bf16 %v2147, %v2146
        %v2179 = vpack.c.bf16 %v2149, %v2148
        %v2180 = vpack.c.bf16 %v2151, %v2150
        %v2181 = vpack.c.bf16 %v2153, %v2152
        %v2182 = vpack.c.bf16 %v2155, %v2154
        %v2183 = vpack.c.bf16 %v2157, %v2156
        %v2184 = vpack.c.bf16 %v2159, %v2158
        %v2185 = vpack.c.bf16 %v2161, %v2160
        %v2186 = vpack.c.bf16 %v2163, %v2162
        %v2187 = vpack.c.bf16 %v2165, %v2164
        %v2188 = vpack.c.bf16 %v2167, %v2166
        %v2189 = vpack.c.bf16 %v2169, %v2168
        %v2190 = vpack.c.bf16 %v2171, %v2170
        %v2191 = vpack.c.bf16 %v2173, %v2172
        %s2192 = scalar_lea.vmem %s1, 12
        %v2193 = vld [vmem:[%s2192] sm:$0x3]
        %v2195 = vsel %vm361, %v2174, 0
        %v2198 = vsel %vm361, %v2175, 0
        %v2201 = vsel %vm361, %v2176, 0
        %v2204 = vsel %vm361, %v2177, 0
        %v2207 = vsel %vm361, %v2178, 0
        %v2210 = vsel %vm361, %v2179, 0
        %v2213 = vsel %vm361, %v2180, 0
        %v2216 = vsel %vm361, %v2181, 0
        %v2219 = vsel %vm361, %v2182, 0
        %v2222 = vsel %vm361, %v2183, 0
        %v2225 = vsel %vm361, %v2184, 0
        %v2228 = vsel %vm361, %v2185, 0
        %v2231 = vsel %vm361, %v2186, 0
        %v2234 = vsel %vm361, %v2187, 0
        %v2237 = vsel %vm361, %v2188, 0
        %v2240 = vsel %vm361, %v2189, 0
        %v2243 = vsel %vm361, %v2190, 0
        %v2246 = vsel %vm361, %v2191, 0
        %v2249 = vand.u32 %v2193, %v419
        %2251 = vmatprep.subr.bf16.mxu0 0
        %2252 = vmatpush1.bf16.msra.mxu0 %v2249
        %2253 = vmatprep.subr.bf16.mxu0 0
        %2254 = vmatpush1.bf16.msra.mxu0 0
        %2255 = vmatprep.subr.bf16.mxu0 0
        %2256 = vmatpush1.bf16.msra.mxu0 0
        %2257 = vmatprep.subr.bf16.mxu0 0
        %2258 = vmatpush1.bf16.msra.mxu0 0
        %2259 = vmatprep.subr.bf16.mxu0 0
        %2260 = vmatpush1.bf16.msra.mxu0 0
        %2261 = vmatprep.subr.bf16.mxu0 0
        %2262 = vmatpush1.bf16.msra.mxu0 0
        %2263 = vmatprep.subr.bf16.mxu0 0
        %2264 = vmatpush1.bf16.msra.mxu0 0
        %2265 = vmatprep.subr.bf16.mxu0 0
        %2266 = vmatpush1.bf16.msra.mxu0 0
        %2267 = vmatprep.subr.bf16.mxu0 0
        %2268 = vmatpush1.bf16.msra.mxu0 0
        %2269 = vmatprep.subr.bf16.mxu0 0
        %2270 = vmatpush1.bf16.msra.mxu0 0
        %2271 = vmatprep.subr.bf16.mxu0 0
        %2272 = vmatpush1.bf16.msra.mxu0 0
        %2273 = vmatprep.subr.bf16.mxu0 0
        %2274 = vmatpush1.bf16.msra.mxu0 0
        %2275 = vmatprep.subr.bf16.mxu0 0
        %2276 = vmatpush1.bf16.msra.mxu0 0
        %2277 = vmatprep.subr.bf16.mxu0 0
        %2278 = vmatpush1.bf16.msra.mxu0 0
        %2279 = vmatprep.subr.bf16.mxu0 0
        %2280 = vmatpush1.bf16.msra.mxu0 0
        %2281 = vmatprep.subr.bf16.mxu0 0
        %2282 = vmatpush1.bf16.msra.mxu0 0
        %2283 = vmatprep.mubr.bf16.mxu0 0
        %2284 = vmatmul.mubr.bf16.gmra.mrb[0].mxu0 %v2195
        %v2285 = vpop.f32.mrb[0].mxu0
        %v2286 = vadd.f32 0.0, %v2285
        %v2287 = vpop.f32.mrb[0].mxu0
        %v2288 = vpop.f32.mrb[0].mxu0
        %v2289 = vadd.f32 0.0, %v2288
        %v2290 = vpop.f32.mrb[0].mxu0
        %2291 = vmatprep.mubr.bf16.mxu0 0
        %2292 = vmatmul.mubr.bf16.gmra.mrb[0].mxu0 %v2198
        %v2293 = vpop.f32.mrb[0].mxu0
        %v2294 = vadd.f32 0.0, %v2293
        %v2295 = vpop.f32.mrb[0].mxu0
        %v2296 = vpop.f32.mrb[0].mxu0
        %v2297 = vadd.f32 0.0, %v2296
        %v2298 = vpop.f32.mrb[0].mxu0
        %2299 = vmatprep.mubr.bf16.mxu0 0
        %2300 = vmatmul.mubr.bf16.gmra.mrb[0].mxu0 %v2201
        %v2301 = vpop.f32.mrb[0].mxu0
        %v2302 = vadd.f32 0.0, %v2301
        %v2303 = vpop.f32.mrb[0].mxu0
        %v2304 = vpop.f32.mrb[0].mxu0
        %v2305 = vadd.f32 0.0, %v2304
        %v2306 = vpop.f32.mrb[0].mxu0
        %2307 = vmatprep.mubr.bf16.mxu0 0
        %2308 = vmatmul.mubr.bf16.gmra.mrb[0].mxu0 %v2204
        %v2309 = vpop.f32.mrb[0].mxu0
        %v2310 = vadd.f32 0.0, %v2309
        %v2311 = vpop.f32.mrb[0].mxu0
        %v2312 = vpop.f32.mrb[0].mxu0
        %v2313 = vadd.f32 0.0, %v2312
        %v2314 = vpop.f32.mrb[0].mxu0
        %2315 = vmatprep.mubr.bf16.mxu0 0
        %2316 = vmatmul.mubr.bf16.gmra.mrb[0].mxu0 %v2207
        %v2317 = vpop.f32.mrb[0].mxu0
        %v2318 = vadd.f32 0.0, %v2317
        %v2319 = vpop.f32.mrb[0].mxu0
        %v2320 = vpop.f32.mrb[0].mxu0
        %v2321 = vadd.f32 0.0, %v2320
        %v2322 = vpop.f32.mrb[0].mxu0
        %2323 = vmatprep.mubr.bf16.mxu0 0
        %2324 = vmatmul.mubr.bf16.gmra.mrb[0].mxu0 %v2210
        %v2325 = vpop.f32.mrb[0].mxu0
        %v2326 = vadd.f32 0.0, %v2325
        %v2327 = vpop.f32.mrb[0].mxu0
        %v2328 = vpop.f32.mrb[0].mxu0
        %v2329 = vadd.f32 0.0, %v2328
        %v2330 = vpop.f32.mrb[0].mxu0
        %2331 = vmatprep.mubr.bf16.mxu0 0
        %2332 = vmatmul.mubr.bf16.gmra.mrb[0].mxu0 %v2213
        %v2333 = vpop.f32.mrb[0].mxu0
        %v2334 = vadd.f32 0.0, %v2333
        %v2335 = vpop.f32.mrb[0].mxu0
        %v2336 = vpop.f32.mrb[0].mxu0
        %v2337 = vadd.f32 0.0, %v2336
        %v2338 = vpop.f32.mrb[0].mxu0
        %2339 = vmatprep.mubr.bf16.mxu0 0
        %2340 = vmatmul.mubr.bf16.gmra.mrb[0].mxu0 %v2216
        %v2341 = vpop.f32.mrb[0].mxu0
        %v2342 = vadd.f32 0.0, %v2341
        %v2343 = vpop.f32.mrb[0].mxu0
        %v2344 = vpop.f32.mrb[0].mxu0
        %v2345 = vadd.f32 0.0, %v2344
        %v2346 = vpop.f32.mrb[0].mxu0
        %2347 = vmatprep.mubr.bf16.mxu0 0
        %2348 = vmatmul.mubr.bf16.gmra.mrb[0].mxu0 %v2219
        %v2349 = vpop.f32.mrb[0].mxu0
        %v2350 = vadd.f32 0.0, %v2349
        %v2351 = vpop.f32.mrb[0].mxu0
        %v2352 = vpop.f32.mrb[0].mxu0
        %v2353 = vadd.f32 0.0, %v2352
        %v2354 = vpop.f32.mrb[0].mxu0
        %2355 = vmatprep.mubr.bf16.mxu0 0
        %2356 = vmatmul.mubr.bf16.gmra.mrb[0].mxu0 %v2222
        %v2357 = vpop.f32.mrb[0].mxu0
        %v2358 = vadd.f32 0.0, %v2357
        %v2359 = vpop.f32.mrb[0].mxu0
        %v2360 = vpop.f32.mrb[0].mxu0
        %v2361 = vadd.f32 0.0, %v2360
        %v2362 = vpop.f32.mrb[0].mxu0
        %2363 = vmatprep.mubr.bf16.mxu0 0
        %2364 = vmatmul.mubr.bf16.gmra.mrb[0].mxu0 %v2225
        %v2365 = vpop.f32.mrb[0].mxu0
        %v2366 = vadd.f32 0.0, %v2365
        %v2367 = vpop.f32.mrb[0].mxu0
        %v2368 = vpop.f32.mrb[0].mxu0
        %v2369 = vadd.f32 0.0, %v2368
        %v2370 = vpop.f32.mrb[0].mxu0
        %2371 = vmatprep.mubr.bf16.mxu0 0
        %2372 = vmatmul.mubr.bf16.gmra.mrb[0].mxu0 %v2228
        %v2373 = vpop.f32.mrb[0].mxu0
        %v2374 = vadd.f32 0.0, %v2373
        %v2375 = vpop.f32.mrb[0].mxu0
        %v2376 = vpop.f32.mrb[0].mxu0
        %v2377 = vadd.f32 0.0, %v2376
        %v2378 = vpop.f32.mrb[0].mxu0
        %2379 = vmatprep.mubr.bf16.mxu0 0
        %2380 = vmatmul.mubr.bf16.gmra.mrb[0].mxu0 %v2231
        %v2381 = vpop.f32.mrb[0].mxu0
        %v2382 = vadd.f32 0.0, %v2381
        %v2383 = vpop.f32.mrb[0].mxu0
        %v2384 = vpop.f32.mrb[0].mxu0
        %v2385 = vadd.f32 0.0, %v2384
        %v2386 = vpop.f32.mrb[0].mxu0
        %2387 = vmatprep.mubr.bf16.mxu0 0
        %2388 = vmatmul.mubr.bf16.gmra.mrb[0].mxu0 %v2234
        %v2389 = vpop.f32.mrb[0].mxu0
        %v2390 = vadd.f32 0.0, %v2389
        %v2391 = vpop.f32.mrb[0].mxu0
        %v2392 = vpop.f32.mrb[0].mxu0
        %v2393 = vadd.f32 0.0, %v2392
        %v2394 = vpop.f32.mrb[0].mxu0
        %2395 = vmatprep.mubr.bf16.mxu0 0
        %2396 = vmatmul.mubr.bf16.gmra.mrb[0].mxu0 %v2237
        %v2397 = vpop.f32.mrb[0].mxu0
        %v2398 = vadd.f32 0.0, %v2397
        %v2399 = vpop.f32.mrb[0].mxu0
        %v2400 = vpop.f32.mrb[0].mxu0
        %v2401 = vadd.f32 0.0, %v2400
        %v2402 = vpop.f32.mrb[0].mxu0
        %2403 = vmatprep.mubr.bf16.mxu0 0
        %2404 = vmatmul.mubr.bf16.gmra.mrb[0].mxu0 %v2240
        %v2405 = vpop.f32.mrb[0].mxu0
        %v2406 = vadd.f32 0.0, %v2405
        %v2407 = vpop.f32.mrb[0].mxu0
        %v2408 = vpop.f32.mrb[0].mxu0
        %v2409 = vadd.f32 0.0, %v2408
        %v2410 = vpop.f32.mrb[0].mxu0
        %2411 = vmatprep.mubr.bf16.mxu0 0
        %2412 = vmatmul.mubr.bf16.gmra.mrb[0].mxu0 %v2243
        %v2413 = vpop.f32.mrb[0].mxu0
        %v2414 = vadd.f32 0.0, %v2413
        %v2415 = vpop.f32.mrb[0].mxu0
        %v2416 = vpop.f32.mrb[0].mxu0
        %v2417 = vadd.f32 0.0, %v2416
        %v2418 = vpop.f32.mrb[0].mxu0
        %2419 = vmatprep.mubr.bf16.mxu0 0
        %2420 = vmatmul.mubr.bf16.gmra.mrb[0].mxu0 %v2246
        %v2421 = vpop.f32.mrb[0].mxu0
        %v2422 = vadd.f32 0.0, %v2421
        %v2423 = vpop.f32.mrb[0].mxu0
        %v2424 = vpop.f32.mrb[0].mxu0
        %v2425 = vadd.f32 0.0, %v2424
        %v2426 = vpop.f32.mrb[0].mxu0
        %2427 = vdwg.mxu0
        %v2428 = vadd.f32 %v2102, %v2286
        %v2429 = vadd.f32 %v2103, %v2289
        %v2430 = vadd.f32 %v2104, %v2294
        %v2431 = vadd.f32 %v2105, %v2297
        %v2432 = vadd.f32 %v2106, %v2302
        %v2433 = vadd.f32 %v2107, %v2305
        %v2434 = vadd.f32 %v2108, %v2310
        %v2435 = vadd.f32 %v2109, %v2313
        %v2436 = vadd.f32 %v2110, %v2318
        %v2437 = vadd.f32 %v2111, %v2321
        %v2438 = vadd.f32 %v2112, %v2326
        %v2439 = vadd.f32 %v2113, %v2329
        %v2440 = vadd.f32 %v2114, %v2334
        %v2441 = vadd.f32 %v2115, %v2337
        %v2442 = vadd.f32 %v2116, %v2342
        %v2443 = vadd.f32 %v2117, %v2345
        %v2444 = vadd.f32 %v2118, %v2350
        %v2445 = vadd.f32 %v2119, %v2353
        %v2446 = vadd.f32 %v2120, %v2358
        %v2447 = vadd.f32 %v2121, %v2361
        %v2448 = vadd.f32 %v2122, %v2366
        %v2449 = vadd.f32 %v2123, %v2369
        %v2450 = vadd.f32 %v2124, %v2374
        %v2451 = vadd.f32 %v2125, %v2377
        %v2452 = vadd.f32 %v2126, %v2382
        %v2453 = vadd.f32 %v2127, %v2385
        %v2454 = vadd.f32 %v2128, %v2390
        %v2455 = vadd.f32 %v2129, %v2393
        %v2456 = vadd.f32 %v2130, %v2398
        %v2457 = vadd.f32 %v2131, %v2401
        %v2458 = vadd.f32 %v2132, %v2406
        %v2459 = vadd.f32 %v2133, %v2409
        %v2460 = vadd.f32 %v2134, %v2414
        %v2461 = vadd.f32 %v2135, %v2417
        %v2462 = vadd.f32 %v2136, %v2422
        %v2463 = vadd.f32 %v2137, %v2425
        %v2464 = vld [vmem:[%s248 + $0x25] sm:$0xff]
        %v2465 = vld [vmem:[%s248 + $0x2d] sm:$0xff]
        %v2466 = vld [vmem:[%s248 + $0x35] sm:$0xff]
        %v2467 = vld [vmem:[%s248 + $0x3d] sm:$0xff]
        %v2468 = vld [vmem:[%s248 + $0x45] sm:$0xff]
        %v2469 = vld [vmem:[%s248 + $0x4d] sm:$0xff]
        %v2470 = vld [vmem:[%s248 + $0x55] sm:$0xff]
        %v2471 = vld [vmem:[%s248 + $0x5d] sm:$0xff]
        %v2472 = vld [vmem:[%s248 + $0x65] sm:$0xff]
        %v2473 = vld [vmem:[%s248 + $0x6d] sm:$0xff]
        %v2474 = vld [vmem:[%s248 + $0x75] sm:$0xff]
        %v2475 = vld [vmem:[%s248 + $0x7d] sm:$0xff]
        %v2476 = vld [vmem:[%s248 + $0x85] sm:$0xff]
        %v2477 = vld [vmem:[%s248 + $0x8d] sm:$0xff]
        %v2478 = vld [vmem:[%s248 + $0x95] sm:$0xff]
        %v2479 = vld [vmem:[%s248 + $0x9d] sm:$0xff]
        %v2480 = vld [vmem:[%s248 + $0xa5] sm:$0xff]
        %v2481 = vld [vmem:[%s248 + $0xad] sm:$0xff]
        %v2482 = vld [vmem:[%s248 + $0xb5] sm:$0xff]
        %v2483 = vld [vmem:[%s248 + $0xbd] sm:$0xff]
        %v2484 = vld [vmem:[%s248 + $0xc5] sm:$0xff]
        %v2485 = vld [vmem:[%s248 + $0xcd] sm:$0xff]
        %v2486 = vld [vmem:[%s248 + $0xd5] sm:$0xff]
        %v2487 = vld [vmem:[%s248 + $0xdd] sm:$0xff]
        %v2488 = vld [vmem:[%s248 + $0xe5] sm:$0xff]
        %v2489 = vld [vmem:[%s248 + $0xed] sm:$0xff]
        %v2490 = vld [vmem:[%s248 + $0xf5] sm:$0xff]
        %v2491 = vld [vmem:[%s248 + $0xfd] sm:$0xff]
        %v2492 = vld [vmem:[%s248 + $0x105] sm:$0xff]
        %v2493 = vld [vmem:[%s248 + $0x10d] sm:$0xff]
        %v2494 = vld [vmem:[%s248 + $0x115] sm:$0xff]
        %v2495 = vld [vmem:[%s248 + $0x11d] sm:$0xff]
        %v2496 = vld [vmem:[%s248 + $0x125] sm:$0xff]
        %v2497 = vld [vmem:[%s248 + $0x12d] sm:$0xff]
        %v2498 = vld [vmem:[%s248 + $0x135] sm:$0xff]
        %v2499 = vld [vmem:[%s248 + $0x13d] sm:$0xff]
        %v2500 = vpack.c.bf16 %v2465, %v2464
        %v2501 = vpack.c.bf16 %v2467, %v2466
        %v2502 = vpack.c.bf16 %v2469, %v2468
        %v2503 = vpack.c.bf16 %v2471, %v2470
        %v2504 = vpack.c.bf16 %v2473, %v2472
        %v2505 = vpack.c.bf16 %v2475, %v2474
        %v2506 = vpack.c.bf16 %v2477, %v2476
        %v2507 = vpack.c.bf16 %v2479, %v2478
        %v2508 = vpack.c.bf16 %v2481, %v2480
        %v2509 = vpack.c.bf16 %v2483, %v2482
        %v2510 = vpack.c.bf16 %v2485, %v2484
        %v2511 = vpack.c.bf16 %v2487, %v2486
        %v2512 = vpack.c.bf16 %v2489, %v2488
        %v2513 = vpack.c.bf16 %v2491, %v2490
        %v2514 = vpack.c.bf16 %v2493, %v2492
        %v2515 = vpack.c.bf16 %v2495, %v2494
        %v2516 = vpack.c.bf16 %v2497, %v2496
        %v2517 = vpack.c.bf16 %v2499, %v2498
        %s2518 = scalar_lea.vmem %s1, 14
        %v2519 = vld [vmem:[%s2518] sm:$0x3]
        %v2521 = vsel %vm361, %v2500, 0
        %v2524 = vsel %vm361, %v2501, 0
        %v2527 = vsel %vm361, %v2502, 0
        %v2530 = vsel %vm361, %v2503, 0
        %v2533 = vsel %vm361, %v2504, 0
        %v2536 = vsel %vm361, %v2505, 0
        %v2539 = vsel %vm361, %v2506, 0
        %v2542 = vsel %vm361, %v2507, 0
        %v2545 = vsel %vm361, %v2508, 0
        %v2548 = vsel %vm361, %v2509, 0
        %v2551 = vsel %vm361, %v2510, 0
        %v2554 = vsel %vm361, %v2511, 0
        %v2557 = vsel %vm361, %v2512, 0
        %v2560 = vsel %vm361, %v2513, 0
        %v2563 = vsel %vm361, %v2514, 0
        %v2566 = vsel %vm361, %v2515, 0
        %v2569 = vsel %vm361, %v2516, 0
        %v2572 = vsel %vm361, %v2517, 0
        %v2575 = vand.u32 %v2519, %v419
        %2577 = vmatprep.subr.bf16.mxu0 0
        %2578 = vmatpush1.bf16.msra.mxu0 %v2575
        %2579 = vmatprep.subr.bf16.mxu0 0
        %2580 = vmatpush1.bf16.msra.mxu0 0
        %2581 = vmatprep.subr.bf16.mxu0 0
        %2582 = vmatpush1.bf16.msra.mxu0 0
        %2583 = vmatprep.subr.bf16.mxu0 0
        %2584 = vmatpush1.bf16.msra.mxu0 0
        %2585 = vmatprep.subr.bf16.mxu0 0
        %2586 = vmatpush1.bf16.msra.mxu0 0
        %2587 = vmatprep.subr.bf16.mxu0 0
        %2588 = vmatpush1.bf16.msra.mxu0 0
        %2589 = vmatprep.subr.bf16.mxu0 0
        %2590 = vmatpush1.bf16.msra.mxu0 0
        %2591 = vmatprep.subr.bf16.mxu0 0
        %2592 = vmatpush1.bf16.msra.mxu0 0
        %2593 = vmatprep.subr.bf16.mxu0 0
        %2594 = vmatpush1.bf16.msra.mxu0 0
        %2595 = vmatprep.subr.bf16.mxu0 0
        %2596 = vmatpush1.bf16.msra.mxu0 0
        %2597 = vmatprep.subr.bf16.mxu0 0
        %2598 = vmatpush1.bf16.msra.mxu0 0
        %2599 = vmatprep.subr.bf16.mxu0 0
        %2600 = vmatpush1.bf16.msra.mxu0 0
        %2601 = vmatprep.subr.bf16.mxu0 0
        %2602 = vmatpush1.bf16.msra.mxu0 0
        %2603 = vmatprep.subr.bf16.mxu0 0
        %2604 = vmatpush1.bf16.msra.mxu0 0
        %2605 = vmatprep.subr.bf16.mxu0 0
        %2606 = vmatpush1.bf16.msra.mxu0 0
        %2607 = vmatprep.subr.bf16.mxu0 0
        %2608 = vmatpush1.bf16.msra.mxu0 0
        %2609 = vmatprep.mubr.bf16.mxu0 0
        %2610 = vmatmul.mubr.bf16.gmra.mrb[0].mxu0 %v2521
        %v2611 = vpop.f32.mrb[0].mxu0
        %v2612 = vadd.f32 0.0, %v2611
        %v2613 = vpop.f32.mrb[0].mxu0
        %v2614 = vpop.f32.mrb[0].mxu0
        %v2615 = vadd.f32 0.0, %v2614
        %v2616 = vpop.f32.mrb[0].mxu0
        %2617 = vmatprep.mubr.bf16.mxu0 0
        %2618 = vmatmul.mubr.bf16.gmra.mrb[0].mxu0 %v2524
        %v2619 = vpop.f32.mrb[0].mxu0
        %v2620 = vadd.f32 0.0, %v2619
        %v2621 = vpop.f32.mrb[0].mxu0
        %v2622 = vpop.f32.mrb[0].mxu0
        %v2623 = vadd.f32 0.0, %v2622
        %v2624 = vpop.f32.mrb[0].mxu0
        %2625 = vmatprep.mubr.bf16.mxu0 0
        %2626 = vmatmul.mubr.bf16.gmra.mrb[0].mxu0 %v2527
        %v2627 = vpop.f32.mrb[0].mxu0
        %v2628 = vadd.f32 0.0, %v2627
        %v2629 = vpop.f32.mrb[0].mxu0
        %v2630 = vpop.f32.mrb[0].mxu0
        %v2631 = vadd.f32 0.0, %v2630
        %v2632 = vpop.f32.mrb[0].mxu0
        %2633 = vmatprep.mubr.bf16.mxu0 0
        %2634 = vmatmul.mubr.bf16.gmra.mrb[0].mxu0 %v2530
        %v2635 = vpop.f32.mrb[0].mxu0
        %v2636 = vadd.f32 0.0, %v2635
        %v2637 = vpop.f32.mrb[0].mxu0
        %v2638 = vpop.f32.mrb[0].mxu0
        %v2639 = vadd.f32 0.0, %v2638
        %v2640 = vpop.f32.mrb[0].mxu0
        %2641 = vmatprep.mubr.bf16.mxu0 0
        %2642 = vmatmul.mubr.bf16.gmra.mrb[0].mxu0 %v2533
        %v2643 = vpop.f32.mrb[0].mxu0
        %v2644 = vadd.f32 0.0, %v2643
        %v2645 = vpop.f32.mrb[0].mxu0
        %v2646 = vpop.f32.mrb[0].mxu0
        %v2647 = vadd.f32 0.0, %v2646
        %v2648 = vpop.f32.mrb[0].mxu0
        %2649 = vmatprep.mubr.bf16.mxu0 0
        %2650 = vmatmul.mubr.bf16.gmra.mrb[0].mxu0 %v2536
        %v2651 = vpop.f32.mrb[0].mxu0
        %v2652 = vadd.f32 0.0, %v2651
        %v2653 = vpop.f32.mrb[0].mxu0
        %v2654 = vpop.f32.mrb[0].mxu0
        %v2655 = vadd.f32 0.0, %v2654
        %v2656 = vpop.f32.mrb[0].mxu0
        %2657 = vmatprep.mubr.bf16.mxu0 0
        %2658 = vmatmul.mubr.bf16.gmra.mrb[0].mxu0 %v2539
        %v2659 = vpop.f32.mrb[0].mxu0
        %v2660 = vadd.f32 0.0, %v2659
        %v2661 = vpop.f32.mrb[0].mxu0
        %v2662 = vpop.f32.mrb[0].mxu0
        %v2663 = vadd.f32 0.0, %v2662
        %v2664 = vpop.f32.mrb[0].mxu0
        %2665 = vmatprep.mubr.bf16.mxu0 0
        %2666 = vmatmul.mubr.bf16.gmra.mrb[0].mxu0 %v2542
        %v2667 = vpop.f32.mrb[0].mxu0
        %v2668 = vadd.f32 0.0, %v2667
        %v2669 = vpop.f32.mrb[0].mxu0
        %v2670 = vpop.f32.mrb[0].mxu0
        %v2671 = vadd.f32 0.0, %v2670
        %v2672 = vpop.f32.mrb[0].mxu0
        %2673 = vmatprep.mubr.bf16.mxu0 0
        %2674 = vmatmul.mubr.bf16.gmra.mrb[0].mxu0 %v2545
        %v2675 = vpop.f32.mrb[0].mxu0
        %v2676 = vadd.f32 0.0, %v2675
        %v2677 = vpop.f32.mrb[0].mxu0
        %v2678 = vpop.f32.mrb[0].mxu0
        %v2679 = vadd.f32 0.0, %v2678
        %v2680 = vpop.f32.mrb[0].mxu0
        %2681 = vmatprep.mubr.bf16.mxu0 0
        %2682 = vmatmul.mubr.bf16.gmra.mrb[0].mxu0 %v2548
        %v2683 = vpop.f32.mrb[0].mxu0
        %v2684 = vadd.f32 0.0, %v2683
        %v2685 = vpop.f32.mrb[0].mxu0
        %v2686 = vpop.f32.mrb[0].mxu0
        %v2687 = vadd.f32 0.0, %v2686
        %v2688 = vpop.f32.mrb[0].mxu0
        %2689 = vmatprep.mubr.bf16.mxu0 0
        %2690 = vmatmul.mubr.bf16.gmra.mrb[0].mxu0 %v2551
        %v2691 = vpop.f32.mrb[0].mxu0
        %v2692 = vadd.f32 0.0, %v2691
        %v2693 = vpop.f32.mrb[0].mxu0
        %v2694 = vpop.f32.mrb[0].mxu0
        %v2695 = vadd.f32 0.0, %v2694
        %v2696 = vpop.f32.mrb[0].mxu0
        %2697 = vmatprep.mubr.bf16.mxu0 0
        %2698 = vmatmul.mubr.bf16.gmra.mrb[0].mxu0 %v2554
        %v2699 = vpop.f32.mrb[0].mxu0
        %v2700 = vadd.f32 0.0, %v2699
        %v2701 = vpop.f32.mrb[0].mxu0
        %v2702 = vpop.f32.mrb[0].mxu0
        %v2703 = vadd.f32 0.0, %v2702
        %v2704 = vpop.f32.mrb[0].mxu0
        %2705 = vmatprep.mubr.bf16.mxu0 0
        %2706 = vmatmul.mubr.bf16.gmra.mrb[0].mxu0 %v2557
        %v2707 = vpop.f32.mrb[0].mxu0
        %v2708 = vadd.f32 0.0, %v2707
        %v2709 = vpop.f32.mrb[0].mxu0
        %v2710 = vpop.f32.mrb[0].mxu0
        %v2711 = vadd.f32 0.0, %v2710
        %v2712 = vpop.f32.mrb[0].mxu0
        %2713 = vmatprep.mubr.bf16.mxu0 0
        %2714 = vmatmul.mubr.bf16.gmra.mrb[0].mxu0 %v2560
        %v2715 = vpop.f32.mrb[0].mxu0
        %v2716 = vadd.f32 0.0, %v2715
        %v2717 = vpop.f32.mrb[0].mxu0
        %v2718 = vpop.f32.mrb[0].mxu0
        %v2719 = vadd.f32 0.0, %v2718
        %v2720 = vpop.f32.mrb[0].mxu0
        %2721 = vmatprep.mubr.bf16.mxu0 0
        %2722 = vmatmul.mubr.bf16.gmra.mrb[0].mxu0 %v2563
        %v2723 = vpop.f32.mrb[0].mxu0
        %v2724 = vadd.f32 0.0, %v2723
        %v2725 = vpop.f32.mrb[0].mxu0
        %v2726 = vpop.f32.mrb[0].mxu0
        %v2727 = vadd.f32 0.0, %v2726
        %v2728 = vpop.f32.mrb[0].mxu0
        %2729 = vmatprep.mubr.bf16.mxu0 0
        %2730 = vmatmul.mubr.bf16.gmra.mrb[0].mxu0 %v2566
        %v2731 = vpop.f32.mrb[0].mxu0
        %v2732 = vadd.f32 0.0, %v2731
        %v2733 = vpop.f32.mrb[0].mxu0
        %v2734 = vpop.f32.mrb[0].mxu0
        %v2735 = vadd.f32 0.0, %v2734
        %v2736 = vpop.f32.mrb[0].mxu0
        %2737 = vmatprep.mubr.bf16.mxu0 0
        %2738 = vmatmul.mubr.bf16.gmra.mrb[0].mxu0 %v2569
        %v2739 = vpop.f32.mrb[0].mxu0
        %v2740 = vadd.f32 0.0, %v2739
        %v2741 = vpop.f32.mrb[0].mxu0
        %v2742 = vpop.f32.mrb[0].mxu0
        %v2743 = vadd.f32 0.0, %v2742
        %v2744 = vpop.f32.mrb[0].mxu0
        %2745 = vmatprep.mubr.bf16.mxu0 0
        %2746 = vmatmul.mubr.bf16.gmra.mrb[0].mxu0 %v2572
        %v2747 = vpop.f32.mrb[0].mxu0
        %v2748 = vadd.f32 0.0, %v2747
        %v2749 = vpop.f32.mrb[0].mxu0
        %v2750 = vpop.f32.mrb[0].mxu0
        %v2751 = vadd.f32 0.0, %v2750
        %v2752 = vpop.f32.mrb[0].mxu0
        %2753 = vdwg.mxu0
        %v2754 = vadd.f32 %v2428, %v2612
        %v2755 = vadd.f32 %v2429, %v2615
        %v2756 = vadd.f32 %v2430, %v2620
        %v2757 = vadd.f32 %v2431, %v2623
        %v2758 = vadd.f32 %v2432, %v2628
        %v2759 = vadd.f32 %v2433, %v2631
        %v2760 = vadd.f32 %v2434, %v2636
        %v2761 = vadd.f32 %v2435, %v2639
        %v2762 = vadd.f32 %v2436, %v2644
        %v2763 = vadd.f32 %v2437, %v2647
        %v2764 = vadd.f32 %v2438, %v2652
        %v2765 = vadd.f32 %v2439, %v2655
        %v2766 = vadd.f32 %v2440, %v2660
        %v2767 = vadd.f32 %v2441, %v2663
        %v2768 = vadd.f32 %v2442, %v2668
        %v2769 = vadd.f32 %v2443, %v2671
        %v2770 = vadd.f32 %v2444, %v2676
        %v2771 = vadd.f32 %v2445, %v2679
        %v2772 = vadd.f32 %v2446, %v2684
        %v2773 = vadd.f32 %v2447, %v2687
        %v2774 = vadd.f32 %v2448, %v2692
        %v2775 = vadd.f32 %v2449, %v2695
        %v2776 = vadd.f32 %v2450, %v2700
        %v2777 = vadd.f32 %v2451, %v2703
        %v2778 = vadd.f32 %v2452, %v2708
        %v2779 = vadd.f32 %v2453, %v2711
        %v2780 = vadd.f32 %v2454, %v2716
        %v2781 = vadd.f32 %v2455, %v2719
        %v2782 = vadd.f32 %v2456, %v2724
        %v2783 = vadd.f32 %v2457, %v2727
        %v2784 = vadd.f32 %v2458, %v2732
        %v2785 = vadd.f32 %v2459, %v2735
        %v2786 = vadd.f32 %v2460, %v2740
        %v2787 = vadd.f32 %v2461, %v2743
        %v2788 = vadd.f32 %v2462, %v2748
        %v2789 = vadd.f32 %v2463, %v2751
        %v2790 = vld [vmem:[%s248 + $0x26] sm:$0xff]
        %v2791 = vld [vmem:[%s248 + $0x2e] sm:$0xff]
        %v2792 = vld [vmem:[%s248 + $0x36] sm:$0xff]
        %v2793 = vld [vmem:[%s248 + $0x3e] sm:$0xff]
        %v2794 = vld [vmem:[%s248 + $0x46] sm:$0xff]
        %v2795 = vld [vmem:[%s248 + $0x4e] sm:$0xff]
        %v2796 = vld [vmem:[%s248 + $0x56] sm:$0xff]
        %v2797 = vld [vmem:[%s248 + $0x5e] sm:$0xff]
        %v2798 = vld [vmem:[%s248 + $0x66] sm:$0xff]
        %v2799 = vld [vmem:[%s248 + $0x6e] sm:$0xff]
        %v2800 = vld [vmem:[%s248 + $0x76] sm:$0xff]
        %v2801 = vld [vmem:[%s248 + $0x7e] sm:$0xff]
        %v2802 = vld [vmem:[%s248 + $0x86] sm:$0xff]
        %v2803 = vld [vmem:[%s248 + $0x8e] sm:$0xff]
        %v2804 = vld [vmem:[%s248 + $0x96] sm:$0xff]
        %v2805 = vld [vmem:[%s248 + $0x9e] sm:$0xff]
        %v2806 = vld [vmem:[%s248 + $0xa6] sm:$0xff]
        %v2807 = vld [vmem:[%s248 + $0xae] sm:$0xff]
        %v2808 = vld [vmem:[%s248 + $0xb6] sm:$0xff]
        %v2809 = vld [vmem:[%s248 + $0xbe] sm:$0xff]
        %v2810 = vld [vmem:[%s248 + $0xc6] sm:$0xff]
        %v2811 = vld [vmem:[%s248 + $0xce] sm:$0xff]
        %v2812 = vld [vmem:[%s248 + $0xd6] sm:$0xff]
        %v2813 = vld [vmem:[%s248 + $0xde] sm:$0xff]
        %v2814 = vld [vmem:[%s248 + $0xe6] sm:$0xff]
        %v2815 = vld [vmem:[%s248 + $0xee] sm:$0xff]
        %v2816 = vld [vmem:[%s248 + $0xf6] sm:$0xff]
        %v2817 = vld [vmem:[%s248 + $0xfe] sm:$0xff]
        %v2818 = vld [vmem:[%s248 + $0x106] sm:$0xff]
        %v2819 = vld [vmem:[%s248 + $0x10e] sm:$0xff]
        %v2820 = vld [vmem:[%s248 + $0x116] sm:$0xff]
        %v2821 = vld [vmem:[%s248 + $0x11e] sm:$0xff]
        %v2822 = vld [vmem:[%s248 + $0x126] sm:$0xff]
        %v2823 = vld [vmem:[%s248 + $0x12e] sm:$0xff]
        %v2824 = vld [vmem:[%s248 + $0x136] sm:$0xff]
        %v2825 = vld [vmem:[%s248 + $0x13e] sm:$0xff]
        %v2826 = vpack.c.bf16 %v2791, %v2790
        %v2827 = vpack.c.bf16 %v2793, %v2792
        %v2828 = vpack.c.bf16 %v2795, %v2794
        %v2829 = vpack.c.bf16 %v2797, %v2796
        %v2830 = vpack.c.bf16 %v2799, %v2798
        %v2831 = vpack.c.bf16 %v2801, %v2800
        %v2832 = vpack.c.bf16 %v2803, %v2802
        %v2833 = vpack.c.bf16 %v2805, %v2804
        %v2834 = vpack.c.bf16 %v2807, %v2806
        %v2835 = vpack.c.bf16 %v2809, %v2808
        %v2836 = vpack.c.bf16 %v2811, %v2810
        %v2837 = vpack.c.bf16 %v2813, %v2812
        %v2838 = vpack.c.bf16 %v2815, %v2814
        %v2839 = vpack.c.bf16 %v2817, %v2816
        %v2840 = vpack.c.bf16 %v2819, %v2818
        %v2841 = vpack.c.bf16 %v2821, %v2820
        %v2842 = vpack.c.bf16 %v2823, %v2822
        %v2843 = vpack.c.bf16 %v2825, %v2824
        %s2844 = scalar_lea.vmem %s1, 16
        %v2845 = vld [vmem:[%s2844] sm:$0x3]
        %v2847 = vsel %vm361, %v2826, 0
        %v2850 = vsel %vm361, %v2827, 0
        %v2853 = vsel %vm361, %v2828, 0
        %v2856 = vsel %vm361, %v2829, 0
        %v2859 = vsel %vm361, %v2830, 0
        %v2862 = vsel %vm361, %v2831, 0
        %v2865 = vsel %vm361, %v2832, 0
        %v2868 = vsel %vm361, %v2833, 0
        %v2871 = vsel %vm361, %v2834, 0
        %v2874 = vsel %vm361, %v2835, 0
        %v2877 = vsel %vm361, %v2836, 0
        %v2880 = vsel %vm361, %v2837, 0
        %v2883 = vsel %vm361, %v2838, 0
        %v2886 = vsel %vm361, %v2839, 0
        %v2889 = vsel %vm361, %v2840, 0
        %v2892 = vsel %vm361, %v2841, 0
        %v2895 = vsel %vm361, %v2842, 0
        %v2898 = vsel %vm361, %v2843, 0
        %v2901 = vand.u32 %v2845, %v419
        %2903 = vmatprep.subr.bf16.mxu0 0
        %2904 = vmatpush1.bf16.msra.mxu0 %v2901
        %2905 = vmatprep.subr.bf16.mxu0 0
        %2906 = vmatpush1.bf16.msra.mxu0 0
        %2907 = vmatprep.subr.bf16.mxu0 0
        %2908 = vmatpush1.bf16.msra.mxu0 0
        %2909 = vmatprep.subr.bf16.mxu0 0
        %2910 = vmatpush1.bf16.msra.mxu0 0
        %2911 = vmatprep.subr.bf16.mxu0 0
        %2912 = vmatpush1.bf16.msra.mxu0 0
        %2913 = vmatprep.subr.bf16.mxu0 0
        %2914 = vmatpush1.bf16.msra.mxu0 0
        %2915 = vmatprep.subr.bf16.mxu0 0
        %2916 = vmatpush1.bf16.msra.mxu0 0
        %2917 = vmatprep.subr.bf16.mxu0 0
        %2918 = vmatpush1.bf16.msra.mxu0 0
        %2919 = vmatprep.subr.bf16.mxu0 0
        %2920 = vmatpush1.bf16.msra.mxu0 0
        %2921 = vmatprep.subr.bf16.mxu0 0
        %2922 = vmatpush1.bf16.msra.mxu0 0
        %2923 = vmatprep.subr.bf16.mxu0 0
        %2924 = vmatpush1.bf16.msra.mxu0 0
        %2925 = vmatprep.subr.bf16.mxu0 0
        %2926 = vmatpush1.bf16.msra.mxu0 0
        %2927 = vmatprep.subr.bf16.mxu0 0
        %2928 = vmatpush1.bf16.msra.mxu0 0
        %2929 = vmatprep.subr.bf16.mxu0 0
        %2930 = vmatpush1.bf16.msra.mxu0 0
        %2931 = vmatprep.subr.bf16.mxu0 0
        %2932 = vmatpush1.bf16.msra.mxu0 0
        %2933 = vmatprep.subr.bf16.mxu0 0
        %2934 = vmatpush1.bf16.msra.mxu0 0
        %2935 = vmatprep.mubr.bf16.mxu0 0
        %2936 = vmatmul.mubr.bf16.gmra.mrb[0].mxu0 %v2847
        %v2937 = vpop.f32.mrb[0].mxu0
        %v2938 = vadd.f32 0.0, %v2937
        %v2939 = vpop.f32.mrb[0].mxu0
        %v2940 = vpop.f32.mrb[0].mxu0
        %v2941 = vadd.f32 0.0, %v2940
        %v2942 = vpop.f32.mrb[0].mxu0
        %2943 = vmatprep.mubr.bf16.mxu0 0
        %2944 = vmatmul.mubr.bf16.gmra.mrb[0].mxu0 %v2850
        %v2945 = vpop.f32.mrb[0].mxu0
        %v2946 = vadd.f32 0.0, %v2945
        %v2947 = vpop.f32.mrb[0].mxu0
        %v2948 = vpop.f32.mrb[0].mxu0
        %v2949 = vadd.f32 0.0, %v2948
        %v2950 = vpop.f32.mrb[0].mxu0
        %2951 = vmatprep.mubr.bf16.mxu0 0
        %2952 = vmatmul.mubr.bf16.gmra.mrb[0].mxu0 %v2853
        %v2953 = vpop.f32.mrb[0].mxu0
        %v2954 = vadd.f32 0.0, %v2953
        %v2955 = vpop.f32.mrb[0].mxu0
        %v2956 = vpop.f32.mrb[0].mxu0
        %v2957 = vadd.f32 0.0, %v2956
        %v2958 = vpop.f32.mrb[0].mxu0
        %2959 = vmatprep.mubr.bf16.mxu0 0
        %2960 = vmatmul.mubr.bf16.gmra.mrb[0].mxu0 %v2856
        %v2961 = vpop.f32.mrb[0].mxu0
        %v2962 = vadd.f32 0.0, %v2961
        %v2963 = vpop.f32.mrb[0].mxu0
        %v2964 = vpop.f32.mrb[0].mxu0
        %v2965 = vadd.f32 0.0, %v2964
        %v2966 = vpop.f32.mrb[0].mxu0
        %2967 = vmatprep.mubr.bf16.mxu0 0
        %2968 = vmatmul.mubr.bf16.gmra.mrb[0].mxu0 %v2859
        %v2969 = vpop.f32.mrb[0].mxu0
        %v2970 = vadd.f32 0.0, %v2969
        %v2971 = vpop.f32.mrb[0].mxu0
        %v2972 = vpop.f32.mrb[0].mxu0
        %v2973 = vadd.f32 0.0, %v2972
        %v2974 = vpop.f32.mrb[0].mxu0
        %2975 = vmatprep.mubr.bf16.mxu0 0
        %2976 = vmatmul.mubr.bf16.gmra.mrb[0].mxu0 %v2862
        %v2977 = vpop.f32.mrb[0].mxu0
        %v2978 = vadd.f32 0.0, %v2977
        %v2979 = vpop.f32.mrb[0].mxu0
        %v2980 = vpop.f32.mrb[0].mxu0
        %v2981 = vadd.f32 0.0, %v2980
        %v2982 = vpop.f32.mrb[0].mxu0
        %2983 = vmatprep.mubr.bf16.mxu0 0
        %2984 = vmatmul.mubr.bf16.gmra.mrb[0].mxu0 %v2865
        %v2985 = vpop.f32.mrb[0].mxu0
        %v2986 = vadd.f32 0.0, %v2985
        %v2987 = vpop.f32.mrb[0].mxu0
        %v2988 = vpop.f32.mrb[0].mxu0
        %v2989 = vadd.f32 0.0, %v2988
        %v2990 = vpop.f32.mrb[0].mxu0
        %2991 = vmatprep.mubr.bf16.mxu0 0
        %2992 = vmatmul.mubr.bf16.gmra.mrb[0].mxu0 %v2868
        %v2993 = vpop.f32.mrb[0].mxu0
        %v2994 = vadd.f32 0.0, %v2993
        %v2995 = vpop.f32.mrb[0].mxu0
        %v2996 = vpop.f32.mrb[0].mxu0
        %v2997 = vadd.f32 0.0, %v2996
        %v2998 = vpop.f32.mrb[0].mxu0
        %2999 = vmatprep.mubr.bf16.mxu0 0
        %3000 = vmatmul.mubr.bf16.gmra.mrb[0].mxu0 %v2871
        %v3001 = vpop.f32.mrb[0].mxu0
        %v3002 = vadd.f32 0.0, %v3001
        %v3003 = vpop.f32.mrb[0].mxu0
        %v3004 = vpop.f32.mrb[0].mxu0
        %v3005 = vadd.f32 0.0, %v3004
        %v3006 = vpop.f32.mrb[0].mxu0
        %3007 = vmatprep.mubr.bf16.mxu0 0
        %3008 = vmatmul.mubr.bf16.gmra.mrb[0].mxu0 %v2874
        %v3009 = vpop.f32.mrb[0].mxu0
        %v3010 = vadd.f32 0.0, %v3009
        %v3011 = vpop.f32.mrb[0].mxu0
        %v3012 = vpop.f32.mrb[0].mxu0
        %v3013 = vadd.f32 0.0, %v3012
        %v3014 = vpop.f32.mrb[0].mxu0
        %3015 = vmatprep.mubr.bf16.mxu0 0
        %3016 = vmatmul.mubr.bf16.gmra.mrb[0].mxu0 %v2877
        %v3017 = vpop.f32.mrb[0].mxu0
        %v3018 = vadd.f32 0.0, %v3017
        %v3019 = vpop.f32.mrb[0].mxu0
        %v3020 = vpop.f32.mrb[0].mxu0
        %v3021 = vadd.f32 0.0, %v3020
        %v3022 = vpop.f32.mrb[0].mxu0
        %3023 = vmatprep.mubr.bf16.mxu0 0
        %3024 = vmatmul.mubr.bf16.gmra.mrb[0].mxu0 %v2880
        %v3025 = vpop.f32.mrb[0].mxu0
        %v3026 = vadd.f32 0.0, %v3025
        %v3027 = vpop.f32.mrb[0].mxu0
        %v3028 = vpop.f32.mrb[0].mxu0
        %v3029 = vadd.f32 0.0, %v3028
        %v3030 = vpop.f32.mrb[0].mxu0
        %3031 = vmatprep.mubr.bf16.mxu0 0
        %3032 = vmatmul.mubr.bf16.gmra.mrb[0].mxu0 %v2883
        %v3033 = vpop.f32.mrb[0].mxu0
        %v3034 = vadd.f32 0.0, %v3033
        %v3035 = vpop.f32.mrb[0].mxu0
        %v3036 = vpop.f32.mrb[0].mxu0
        %v3037 = vadd.f32 0.0, %v3036
        %v3038 = vpop.f32.mrb[0].mxu0
        %3039 = vmatprep.mubr.bf16.mxu0 0
        %3040 = vmatmul.mubr.bf16.gmra.mrb[0].mxu0 %v2886
        %v3041 = vpop.f32.mrb[0].mxu0
        %v3042 = vadd.f32 0.0, %v3041
        %v3043 = vpop.f32.mrb[0].mxu0
        %v3044 = vpop.f32.mrb[0].mxu0
        %v3045 = vadd.f32 0.0, %v3044
        %v3046 = vpop.f32.mrb[0].mxu0
        %3047 = vmatprep.mubr.bf16.mxu0 0
        %3048 = vmatmul.mubr.bf16.gmra.mrb[0].mxu0 %v2889
        %v3049 = vpop.f32.mrb[0].mxu0
        %v3050 = vadd.f32 0.0, %v3049
        %v3051 = vpop.f32.mrb[0].mxu0
        %v3052 = vpop.f32.mrb[0].mxu0
        %v3053 = vadd.f32 0.0, %v3052
        %v3054 = vpop.f32.mrb[0].mxu0
        %3055 = vmatprep.mubr.bf16.mxu0 0
        %3056 = vmatmul.mubr.bf16.gmra.mrb[0].mxu0 %v2892
        %v3057 = vpop.f32.mrb[0].mxu0
        %v3058 = vadd.f32 0.0, %v3057
        %v3059 = vpop.f32.mrb[0].mxu0
        %v3060 = vpop.f32.mrb[0].mxu0
        %v3061 = vadd.f32 0.0, %v3060
        %v3062 = vpop.f32.mrb[0].mxu0
        %3063 = vmatprep.mubr.bf16.mxu0 0
        %3064 = vmatmul.mubr.bf16.gmra.mrb[0].mxu0 %v2895
        %v3065 = vpop.f32.mrb[0].mxu0
        %v3066 = vadd.f32 0.0, %v3065
        %v3067 = vpop.f32.mrb[0].mxu0
        %v3068 = vpop.f32.mrb[0].mxu0
        %v3069 = vadd.f32 0.0, %v3068
        %v3070 = vpop.f32.mrb[0].mxu0
        %3071 = vmatprep.mubr.bf16.mxu0 0
        %3072 = vmatmul.mubr.bf16.gmra.mrb[0].mxu0 %v2898
        %v3073 = vpop.f32.mrb[0].mxu0
        %v3074 = vadd.f32 0.0, %v3073
        %v3075 = vpop.f32.mrb[0].mxu0
        %v3076 = vpop.f32.mrb[0].mxu0
        %v3077 = vadd.f32 0.0, %v3076
        %v3078 = vpop.f32.mrb[0].mxu0
        %3079 = vdwg.mxu0
        %v3080 = vadd.f32 %v2754, %v2938
        %v3081 = vadd.f32 %v2755, %v2941
        %v3082 = vadd.f32 %v2756, %v2946
        %v3083 = vadd.f32 %v2757, %v2949
        %v3084 = vadd.f32 %v2758, %v2954
        %v3085 = vadd.f32 %v2759, %v2957
        %v3086 = vadd.f32 %v2760, %v2962
        %v3087 = vadd.f32 %v2761, %v2965
        %v3088 = vadd.f32 %v2762, %v2970
        %v3089 = vadd.f32 %v2763, %v2973
        %v3090 = vadd.f32 %v2764, %v2978
        %v3091 = vadd.f32 %v2765, %v2981
        %v3092 = vadd.f32 %v2766, %v2986
        %v3093 = vadd.f32 %v2767, %v2989
        %v3094 = vadd.f32 %v2768, %v2994
        %v3095 = vadd.f32 %v2769, %v2997
        %v3096 = vadd.f32 %v2770, %v3002
        %v3097 = vadd.f32 %v2771, %v3005
        %v3098 = vadd.f32 %v2772, %v3010
        %v3099 = vadd.f32 %v2773, %v3013
        %v3100 = vadd.f32 %v2774, %v3018
        %v3101 = vadd.f32 %v2775, %v3021
        %v3102 = vadd.f32 %v2776, %v3026
        %v3103 = vadd.f32 %v2777, %v3029
        %v3104 = vadd.f32 %v2778, %v3034
        %v3105 = vadd.f32 %v2779, %v3037
        %v3106 = vadd.f32 %v2780, %v3042
        %v3107 = vadd.f32 %v2781, %v3045
        %v3108 = vadd.f32 %v2782, %v3050
        %v3109 = vadd.f32 %v2783, %v3053
        %v3110 = vadd.f32 %v2784, %v3058
        %v3111 = vadd.f32 %v2785, %v3061
        %v3112 = vadd.f32 %v2786, %v3066
        %v3113 = vadd.f32 %v2787, %v3069
        %v3114 = vadd.f32 %v2788, %v3074
        %v3115 = vadd.f32 %v2789, %v3077
        %v3116 = vld [vmem:[%s2] sm:$0x1]
        %v3118 = vlaneseq
        %v3119 = vshrl.u32 %v3118, 7
        %v3120 = vsub.s32 0, %v3119
        %v3121 = vrot.slane %v3116, %v3120
        %v3123 = vadd.f32 %v3080, %v3121
        %v3124 = vadd.f32 %v3081, %v3121
        %v3125 = vadd.f32 %v3082, %v3121
        %v3126 = vadd.f32 %v3083, %v3121
        %v3127 = vadd.f32 %v3084, %v3121
        %v3128 = vadd.f32 %v3085, %v3121
        %v3129 = vadd.f32 %v3086, %v3121
        %v3130 = vadd.f32 %v3087, %v3121
        %v3131 = vadd.f32 %v3088, %v3121
        %v3132 = vadd.f32 %v3089, %v3121
        %v3133 = vadd.f32 %v3090, %v3121
        %v3134 = vadd.f32 %v3091, %v3121
        %v3135 = vadd.f32 %v3092, %v3121
        %v3136 = vadd.f32 %v3093, %v3121
        %v3137 = vadd.f32 %v3094, %v3121
        %v3138 = vadd.f32 %v3095, %v3121
        %v3139 = vadd.f32 %v3096, %v3121
        %v3140 = vadd.f32 %v3097, %v3121
        %v3141 = vadd.f32 %v3098, %v3121
        %v3142 = vadd.f32 %v3099, %v3121
        %v3143 = vadd.f32 %v3100, %v3121
        %v3144 = vadd.f32 %v3101, %v3121
        %v3145 = vadd.f32 %v3102, %v3121
        %v3146 = vadd.f32 %v3103, %v3121
        %v3147 = vadd.f32 %v3104, %v3121
        %v3148 = vadd.f32 %v3105, %v3121
        %v3149 = vadd.f32 %v3106, %v3121
        %v3150 = vadd.f32 %v3107, %v3121
        %v3151 = vadd.f32 %v3108, %v3121
        %v3152 = vadd.f32 %v3109, %v3121
        %v3153 = vadd.f32 %v3110, %v3121
        %v3154 = vadd.f32 %v3111, %v3121
        %v3155 = vadd.f32 %v3112, %v3121
        %v3156 = vadd.f32 %v3113, %v3121
        %v3157 = vadd.f32 %v3114, %v3121
        %v3158 = vadd.f32 %v3115, %v3121
        %v3159 = vmax.f32 %v3123, 0.0
        %v3160 = vmax.f32 %v3124, 0.0
        %v3161 = vmax.f32 %v3125, 0.0
        %v3162 = vmax.f32 %v3126, 0.0
        %v3163 = vmax.f32 %v3127, 0.0
        %v3164 = vmax.f32 %v3128, 0.0
        %v3165 = vmax.f32 %v3129, 0.0
        %v3166 = vmax.f32 %v3130, 0.0
        %v3167 = vmax.f32 %v3131, 0.0
        %v3168 = vmax.f32 %v3132, 0.0
        %v3169 = vmax.f32 %v3133, 0.0
        %v3170 = vmax.f32 %v3134, 0.0
        %v3171 = vmax.f32 %v3135, 0.0
        %v3172 = vmax.f32 %v3136, 0.0
        %v3173 = vmax.f32 %v3137, 0.0
        %v3174 = vmax.f32 %v3138, 0.0
        %v3175 = vmax.f32 %v3139, 0.0
        %v3176 = vmax.f32 %v3140, 0.0
        %v3177 = vmax.f32 %v3141, 0.0
        %v3178 = vmax.f32 %v3142, 0.0
        %v3179 = vmax.f32 %v3143, 0.0
        %v3180 = vmax.f32 %v3144, 0.0
        %v3181 = vmax.f32 %v3145, 0.0
        %v3182 = vmax.f32 %v3146, 0.0
        %v3183 = vmax.f32 %v3147, 0.0
        %v3184 = vmax.f32 %v3148, 0.0
        %v3185 = vmax.f32 %v3149, 0.0
        %v3186 = vmax.f32 %v3150, 0.0
        %v3187 = vmax.f32 %v3151, 0.0
        %v3188 = vmax.f32 %v3152, 0.0
        %v3189 = vmax.f32 %v3153, 0.0
        %v3190 = vmax.f32 %v3154, 0.0
        %v3191 = vmax.f32 %v3155, 0.0
        %v3192 = vmax.f32 %v3156, 0.0
        %v3193 = vmax.f32 %v3157, 0.0
        %v3194 = vmax.f32 %v3158, 0.0
        %v3195 = vld [vmem:[%s3] sm:$0x7]
        %v3196 = vpack.c.bf16 %v3160, %v3159
        %v3197 = vpack.c.bf16 %v3162, %v3161
        %v3198 = vpack.c.bf16 %v3164, %v3163
        %v3199 = vpack.c.bf16 %v3166, %v3165
        %v3200 = vpack.c.bf16 %v3168, %v3167
        %v3201 = vpack.c.bf16 %v3170, %v3169
        %v3202 = vpack.c.bf16 %v3172, %v3171
        %v3203 = vpack.c.bf16 %v3174, %v3173
        %v3204 = vpack.c.bf16 %v3176, %v3175
        %v3205 = vpack.c.bf16 %v3178, %v3177
        %v3206 = vpack.c.bf16 %v3180, %v3179
        %v3207 = vpack.c.bf16 %v3182, %v3181
        %v3208 = vpack.c.bf16 %v3184, %v3183
        %v3209 = vpack.c.bf16 %v3186, %v3185
        %v3210 = vpack.c.bf16 %v3188, %v3187
        %v3211 = vpack.c.bf16 %v3190, %v3189
        %v3212 = vpack.c.bf16 %v3192, %v3191
        %v3213 = vpack.c.bf16 %v3194, %v3193
        %v3216 = vunpack.c.l.s4 1966171168
        %v3217 = vunpack.c.0.s8 %v3216
        %v3218 = vlaneseq
        %v3219 = vshrl.u32 %v3218, 7
        %v3220 = vsub.s32 %v3217, %v3219
        %v3221 = vrot.slane %v3195, %v3220
        %v3222 = vcombine.high %v3221, %v3221
        %v3224 = vunpack.c.l.s4 1966171168
        %v3225 = vunpack.c.0.s8 %v3224
        %v3226 = vlaneseq
        %v3227 = vshrl.u32 %v3226, 7
        %v3228 = vsub.s32 %v3225, %v3227
        %v3229 = vrot.slane %v3221, %v3228
        %v3231 = vunpack.c.l.s4 1966171168
        %v3232 = vunpack.c.0.s8 %v3231
        %v3233 = vlaneseq
        %v3234 = vshrl.u32 %v3233, 7
        %v3235 = vsub.s32 %v3232, %v3234
        %v3236 = vrot.slane %v3222, %v3235
        %v3237 = vcombine.high %v3229, %v3229
        %vm3240 = vcmask 261120
        %v3242 = vsel %vm3240, %v3237, 0
        %3244 = vmatprep.subr.bf16.mxu0 0
        %3245 = vmatpush1.bf16.msra.mxu0 %v3196
        %3246 = vmatprep.subr.bf16.mxu0 0
        %3247 = vmatpush1.bf16.msra.mxu0 %v3197
        %3248 = vmatprep.subr.bf16.mxu0 0
        %3249 = vmatpush1.bf16.msra.mxu0 %v3198
        %3250 = vmatprep.subr.bf16.mxu0 0
        %3251 = vmatpush1.bf16.msra.mxu0 %v3199
        %3252 = vmatprep.subr.bf16.mxu0 0
        %3253 = vmatpush1.bf16.msra.mxu0 %v3200
        %3254 = vmatprep.subr.bf16.mxu0 0
        %3255 = vmatpush1.bf16.msra.mxu0 %v3201
        %3256 = vmatprep.subr.bf16.mxu0 0
        %3257 = vmatpush1.bf16.msra.mxu0 %v3202
        %3258 = vmatprep.subr.bf16.mxu0 0
        %3259 = vmatpush1.bf16.msra.mxu0 %v3203
        %3260 = vmatprep.subr.bf16.mxu0 0
        %3261 = vmatpush1.bf16.msra.mxu0 %v3204
        %3262 = vmatprep.subr.bf16.mxu0 0
        %3263 = vmatpush1.bf16.msra.mxu0 %v3205
        %3264 = vmatprep.subr.bf16.mxu0 0
        %3265 = vmatpush1.bf16.msra.mxu0 %v3206
        %3266 = vmatprep.subr.bf16.mxu0 0
        %3267 = vmatpush1.bf16.msra.mxu0 %v3207
        %3268 = vmatprep.subr.bf16.mxu0 0
        %3269 = vmatpush1.bf16.msra.mxu0 %v3208
        %3270 = vmatprep.subr.bf16.mxu0 0
        %3271 = vmatpush1.bf16.msra.mxu0 %v3209
        %3272 = vmatprep.subr.bf16.mxu0 0
        %3273 = vmatpush1.bf16.msra.mxu0 %v3210
        %3274 = vmatprep.subr.bf16.mxu0 0
        %3275 = vmatpush1.bf16.msra.mxu0 %v3211
        %3276 = vmatprep.mubr.bf16.mxu0 %v3236
        %3277 = vmatmul.mubr.bf16.gmra.mrb[0].mxu0 %v3229
        %v3278 = vpop.f32.mrb[0].mxu0
        %v3279 = vadd.f32 0.0, %v3278
        %v3280 = vpop.f32.mrb[0].mxu0
        %v3281 = vpop.f32.mrb[0].mxu0
        %v3282 = vpop.f32.mrb[0].mxu0
        %3283 = vdwg.mxu0
        %3284 = vmatprep.subr.bf16.mxu0 0
        %3285 = vmatpush1.bf16.msra.mxu0 %v3212
        %3286 = vmatprep.subr.bf16.mxu0 0
        %3287 = vmatpush1.bf16.msra.mxu0 %v3213
        %3288 = vmatprep.subr.bf16.mxu0 0
        %3289 = vmatpush1.bf16.msra.mxu0 0
        %3290 = vmatprep.subr.bf16.mxu0 0
        %3291 = vmatpush1.bf16.msra.mxu0 0
        %3292 = vmatprep.subr.bf16.mxu0 0
        %3293 = vmatpush1.bf16.msra.mxu0 0
        %3294 = vmatprep.subr.bf16.mxu0 0
        %3295 = vmatpush1.bf16.msra.mxu0 0
        %3296 = vmatprep.subr.bf16.mxu0 0
        %3297 = vmatpush1.bf16.msra.mxu0 0
        %3298 = vmatprep.subr.bf16.mxu0 0
        %3299 = vmatpush1.bf16.msra.mxu0 0
        %3300 = vmatprep.subr.bf16.mxu0 0
        %3301 = vmatpush1.bf16.msra.mxu0 0
        %3302 = vmatprep.subr.bf16.mxu0 0
        %3303 = vmatpush1.bf16.msra.mxu0 0
        %3304 = vmatprep.subr.bf16.mxu0 0
        %3305 = vmatpush1.bf16.msra.mxu0 0
        %3306 = vmatprep.subr.bf16.mxu0 0
        %3307 = vmatpush1.bf16.msra.mxu0 0
        %3308 = vmatprep.subr.bf16.mxu0 0
        %3309 = vmatpush1.bf16.msra.mxu0 0
        %3310 = vmatprep.subr.bf16.mxu0 0
        %3311 = vmatpush1.bf16.msra.mxu0 0
        %3312 = vmatprep.subr.bf16.mxu0 0
        %3313 = vmatpush1.bf16.msra.mxu0 0
        %3314 = vmatprep.subr.bf16.mxu0 0
        %3315 = vmatpush1.bf16.msra.mxu0 0
        %3316 = vmatprep.mubr.bf16.mxu0 0
        %3317 = vmatmul.mubr.bf16.gmra.mrb[0].mxu0 %v3242
        %v3318 = vpop.f32.mrb[0].mxu0
        %v3319 = vadd.f32 %v3279, %v3318
        %v3320 = vpop.f32.mrb[0].mxu0
        %v3321 = vpop.f32.mrb[0].mxu0
        %v3322 = vpop.f32.mrb[0].mxu0
        %3323 = vdwg.mxu0
        %v3324 = vpack.c.bf16 %v3319, %v3319
        %v3325 = vld [vmem:[%s4] sm:$0xf]
        %v3326 = vld [vmem:[%s4 + $0x4] sm:$0xf]
        %v3327 = vld [vmem:[%s4 + $0x8] sm:$0xf]
        %v3328 = vld [vmem:[%s4 + $0xc] sm:$0xf]
        %v3329 = vld [vmem:[%s4 + $0x10] sm:$0xf]
        %v3330 = vld [vmem:[%s4 + $0x14] sm:$0xf]
        %v3331 = vld [vmem:[%s4 + $0x18] sm:$0xf]
        %v3332 = vld [vmem:[%s4 + $0x1c] sm:$0xf]
        %v3333 = vld [vmem:[%s4 + $0x20] sm:$0xf]
        %v3334 = vld [vmem:[%s4 + $0x24] sm:$0xf]
        %v3335 = vld [vmem:[%s4 + $0x28] sm:$0xf]
        %v3336 = vld [vmem:[%s4 + $0x2c] sm:$0xf]
        %v3337 = vld [vmem:[%s4 + $0x30] sm:$0xf]
        %v3338 = vld [vmem:[%s4 + $0x34] sm:$0xf]
        %v3339 = vld [vmem:[%s4 + $0x38] sm:$0xf]
        %v3340 = vld [vmem:[%s4 + $0x3c] sm:$0xf]
        %v3341 = vld [vmem:[%s5] sm:$0x1]
        %v3358 = vunpack.c.l.b16 %v3325
        %v3359 = vunpack.c.l.b16 %v3326
        %v3360 = vunpack.c.l.b16 %v3327
        %v3361 = vunpack.c.l.b16 %v3328
        %v3362 = vunpack.c.l.b16 %v3329
        %v3363 = vunpack.c.l.b16 %v3330
        %v3364 = vunpack.c.l.b16 %v3331
        %v3365 = vunpack.c.l.b16 %v3332
        %v3366 = vunpack.c.l.b16 %v3333
        %v3367 = vunpack.c.l.b16 %v3334
        %v3368 = vunpack.c.l.b16 %v3335
        %v3369 = vunpack.c.l.b16 %v3336
        %v3370 = vunpack.c.l.b16 %v3337
        %v3371 = vunpack.c.l.b16 %v3338
        %v3372 = vunpack.c.l.b16 %v3339
        %v3373 = vunpack.c.l.b16 %v3340
        %v3374 = vpack.c.b16 %v3359, %v3358
        %v3375 = vpack.c.b16 %v3361, %v3360
        %v3376 = vpack.c.b16 %v3363, %v3362
        %v3377 = vpack.c.b16 %v3365, %v3364
        %v3378 = vpack.c.b16 %v3367, %v3366
        %v3379 = vpack.c.b16 %v3369, %v3368
        %v3380 = vpack.c.b16 %v3371, %v3370
        %v3381 = vpack.c.b16 %v3373, %v3372
        %3390 = vmatprep.subr.bf16.mxu0 0
        %3391 = vmatpush1.bf16.msra.mxu0 %v3374
        %3392 = vmatprep.subr.bf16.mxu0 0
        %3393 = vmatpush1.bf16.msra.mxu0 %v3375
        %3394 = vmatprep.subr.bf16.mxu0 0
        %3395 = vmatpush1.bf16.msra.mxu0 %v3376
        %3396 = vmatprep.subr.bf16.mxu0 0
        %3397 = vmatpush1.bf16.msra.mxu0 %v3377
        %3398 = vmatprep.subr.bf16.mxu0 0
        %3399 = vmatpush1.bf16.msra.mxu0 %v3378
        %3400 = vmatprep.subr.bf16.mxu0 0
        %3401 = vmatpush1.bf16.msra.mxu0 %v3379
        %3402 = vmatprep.subr.bf16.mxu0 0
        %3403 = vmatpush1.bf16.msra.mxu0 %v3380
        %3404 = vmatprep.subr.bf16.mxu0 0
        %3405 = vmatpush1.bf16.msra.mxu0 %v3381
        %3406 = vmatprep.subr.bf16.mxu0 0
        %3407 = vmatpush1.bf16.msra.mxu0 0
        %3408 = vmatprep.subr.bf16.mxu0 0
        %3409 = vmatpush1.bf16.msra.mxu0 0
        %3410 = vmatprep.subr.bf16.mxu0 0
        %3411 = vmatpush1.bf16.msra.mxu0 0
        %3412 = vmatprep.subr.bf16.mxu0 0
        %3413 = vmatpush1.bf16.msra.mxu0 0
        %3414 = vmatprep.subr.bf16.mxu0 0
        %3415 = vmatpush1.bf16.msra.mxu0 0
        %3416 = vmatprep.subr.bf16.mxu0 0
        %3417 = vmatpush1.bf16.msra.mxu0 0
        %3418 = vmatprep.subr.bf16.mxu0 0
        %3419 = vmatpush1.bf16.msra.mxu0 0
        %3420 = vmatprep.subr.bf16.mxu0 0
        %3421 = vmatpush1.bf16.msra.mxu0 0
        %3422 = vmatprep.mubr.bf16.mxu0 0
        %3423 = vmatmul.mubr.bf16.gmra.mrb[0].mxu0 %v3324
        %v3424 = vpop.f32.mrb[0].mxu0
        %v3425 = vadd.f32 %v3341, %v3424
        %v3426 = vpop.f32.mrb[0].mxu0
        %v3427 = vpop.f32.mrb[0].mxu0
        %v3428 = vpop.f32.mrb[0].mxu0
        %3429 = vdwg.mxu0
        %3430 = vst [vmem:[%s243] sm:$0x1] %v3425
        %s3431 = sand.u32 %s159, 1
        %s3432 = scalar_lea.sflag [#allocation3], %s3431
        %s3433 = sand.u32 %s159, 1
        %s3434 = scalar_lea.vmem [#allocation2], %s3433
        // Predicated region
        $region45: #{tpu_custom_call.1} parent=43 // pred_check
          %p3435 = pneg %p169
        $region46: #{tpu_custom_call.1} parent=43 // pred_check_branch
          %3437 = sbr.rel (%p3435) target = $region48
        $region47: #{tpu_custom_call.1} parent=43 // pred_region
          %s3439 = ssub.s32 16, 16
          %3440 = vsyncadd %s3432, %s3439
          %s3441 = smul.addr %s20, 16
          %s3442 = scalar_lea.hbm %s6, %s3441
          %s3444 = sshll.u32 %s3434, 4
          %s3445 = int_to_ptr.vmem [resolvable:$true] %s3444
          %3447 = dma.vmem_to_hbm [thread:$0]  %s3445, 16, %s3442, %s3432
        $region48: #{tpu_custom_call.1} parent=43 // pred_fallthru
          _
      $region44: #{tpu_custom_call.1} parent=5 // pred_fallthru
        _
      %p3448 = scmp.le.s32.totalorder 2, %s15
      // Predicated region
      $region49: #{tpu_custom_call.1} parent=5 // pred_check
        %p3449 = pneg %p3448
      $region50: #{tpu_custom_call.1} parent=5 // pred_check_branch
        %3451 = sbr.rel (%p3449) target = $region52
      $region51: #{tpu_custom_call.1} parent=5 // pred_region
        %s3452 = ssub.s32 %s15, 2
        // Predicated region
        $region53: #{tpu_custom_call.1} parent=51 // pred_check
          %p3453 = pneg %p175
        $region54: #{tpu_custom_call.1} parent=51 // pred_check_branch
          %3455 = sbr.rel (%p3453) target = $region56
        $region55: #{tpu_custom_call.1} parent=51 // pred_region
          %s3456 = sand.u32 %s160, 1
          %s3457 = scalar_lea.sflag [#allocation3], %s3456
          %s3458 = sand.u32 %s160, 1
          %s3459 = scalar_lea.vmem [#allocation2], %s3458
          %3460 = dma.done %s3457, 16
        $region56: #{tpu_custom_call.1} parent=51 // pred_fallthru
          _
      $region52: #{tpu_custom_call.1} parent=5 // pred_fallthru
        _
    $region6: #{tpu_custom_call.1} parent=1 // loop_footer
      %s19 = sadd.s32 1, %s15
    $region7: #{tpu_custom_call.1} parent=1 // loop_footer_branch
      %14 = sbr.rel target = $region3
    $region8: #{tpu_custom_call.1} parent=1 // loop_exit
      _
    %3461 = vsyncpa [#allocation3], 1
    %s3462 = scalar_lea.sflag [#allocation3], 1
    %3463 = vsyncpa %s3462, 1

</llo_original>
